<compile_context>
chip_gen: v6e
topology: v6e:2x2x1
jax: 0.10.0
libtpu: 0.0.40
codegen_flags: <defaults>
</compile_context>

<pallas_src>
import numpy as np

import jax
import jax.numpy as jnp
from jax.experimental import pallas as pl


# ---------------------------------------------------------------------------
# Single fused Pallas kernel
# ---------------------------------------------------------------------------
def _cnn_fused_kernel(xp_ref, m1_ref, b1_ref, n2_ref, b2_ref,
                      wf1_ref, bf1_ref, wf2_ref, bf2_ref, out_ref):
    """Whole CNN forward on a VMEM-resident batch.

    Layouts (batch B on sublanes, packed channel/spatial blocks on lanes):
      xp_ref  : (12, B, 12)   zero-padded input, H major
      m1_ref  : (3, 12, 80)   conv1 taps as banded matrices, lane = c*10 + s
      n2_ref  : (2, 79, 128)  conv2 taps over lane-dilated pool1 rows,
                              lane = s2*32 + co   (stride-2 pool decimation is
                              absorbed in the zero pattern)
      wf1_ref : (3, 96, 128)  fc1 weights with the NCHW flatten pre-folded,
                              row = j2*32 + co (one slice per pool2 row i2)
      wf2_ref : (128, 6)
    """
    f32 = jnp.float32

    # ---- conv1 (1->8, k=3, s=1, p=1): one banded matmul per tap row ----
    xrow = [xp_ref[h] for h in range(12)]           # each (B, 12)
    m1 = [m1_ref[kh] for kh in range(3)]            # each (12, 80)
    b1 = b1_ref[...]                                # (1, 80)
    y1 = []
    for r in range(10):                             # conv1 output rows
        acc = jnp.dot(xrow[r], m1[0], preferred_element_type=f32)
        acc = acc + jnp.dot(xrow[r + 1], m1[1], preferred_element_type=f32)
        acc = acc + jnp.dot(xrow[r + 2], m1[2], preferred_element_type=f32)
        y1.append(acc + b1)                         # (B, 80), lane = c*10 + s

    # ---- mp1 (k=2, s=2) + relu, kept lane-dilated ----
    # Pooled values land on lanes c*10 + 2*j; other lanes hold harmless junk
    # that the zero rows of n2 ignore.
    d = []
    for i in range(5):                              # pool1 output rows
        rmax = jnp.maximum(y1[2 * i], y1[2 * i + 1])              # (B, 80)
        cmax = jnp.maximum(rmax[:, 0:79], rmax[:, 1:80])          # (B, 79)
        d.append(jnp.maximum(cmax, 0.0))

    # ---- conv2 (8->32, k=2, valid): matmuls over the dilated pool1 rows ----
    n2 = [n2_ref[kh] for kh in range(2)]            # each (79, 128)
    b2 = b2_ref[...]                                # (1, 128)
    y2 = []
    for r2 in range(4):                             # conv2 output rows
        acc = jnp.dot(d[r2], n2[0], preferred_element_type=f32)
        acc = acc + jnp.dot(d[r2 + 1], n2[1], preferred_element_type=f32)
        y2.append(acc + b2)                         # (B, 128), lane = s2*32 + co

    # ---- mp2 (k=2, s=1) + relu + fc1 (NCHW flatten folded into wf1) ----
    fc1 = None
    for i2 in range(3):                             # pool2 output rows
        rmax = jnp.maximum(y2[i2], y2[i2 + 1])                    # (B, 128)
        h2 = jnp.maximum(jnp.maximum(rmax[:, 0:96], rmax[:, 32:128]), 0.0)
        part = jnp.dot(h2, wf1_ref[i2], preferred_element_type=f32)
        fc1 = part if fc1 is None else fc1 + part
    h3 = jnp.maximum(fc1 + bf1_ref[...], 0.0)       # (B, 128)
    # Dropout(p=0.1) is identity at inference time.
    # TODO(synk): training-mode dropout masking is not implemented.

    # ---- fc2 + log_softmax(dim=1) ----
    logits = jnp.dot(h3, wf2_ref[...], preferred_element_type=f32) + bf2_ref[...]
    m = jnp.max(logits, axis=1, keepdims=True)
    e = jnp.exp(logits - m)
    s = jnp.sum(e, axis=1, keepdims=True)
    out_ref[...] = ((logits - m) - jnp.log(s)).astype(out_ref.dtype)


def _full_spec(shape):
    # Single block covering the whole array (empty grid).
    return pl.BlockSpec(shape, lambda: (0,) * len(shape))


def cnn_forward(packed, x):
    """x: (B, 1, 10, 10) float32 NCHW (10x10 is implied by fc1.in_features=288)."""
    B = x.shape[0]
    xp = jnp.pad(x[:, 0], ((0, 0), (1, 1), (1, 1)))   # (B, 12, 12)
    xp_t = jnp.transpose(xp, (1, 0, 2))               # (12, B, 12) H-major layout plumbing
    args = (xp_t, packed["m1"], packed["b1"], packed["n2"], packed["b2"],
            packed["wf1"], packed["bf1"], packed["wf2"], packed["bf2"])
    return pl.pallas_call(
        _cnn_fused_kernel,
        out_shape=jax.ShapeDtypeStruct((B, 6), jnp.float32),
        in_specs=[_full_spec(a.shape) for a in args],
        out_specs=_full_spec((B, 6)),
    )(*args)
    # NOTE: at toy batch sizes no grid is needed; for large B this same kernel
    # would be tiled over batch rows with a ("parallel",) grid dimension.


# ---------------------------------------------------------------------------
# Parameters: PyTorch-shaped init + one-time packing into kernel layout
# ---------------------------------------------------------------------------
def init_params(key):
    ks = jax.random.split(key, 8)
    return {
        "w1": jax.random.normal(ks[0], (8, 1, 3, 3), jnp.float32) * 0.1,
        "b1": jax.random.normal(ks[1], (8,), jnp.float32) * 0.1,
        "w2": jax.random.normal(ks[2], (32, 8, 2, 2), jnp.float32) * 0.1,
        "b2": jax.random.normal(ks[3], (32,), jnp.float32) * 0.1,
        "wf1": jax.random.normal(ks[4], (128, 288), jnp.float32) * 0.05,
        "bf1": jax.random.normal(ks[5], (128,), jnp.float32) * 0.05,
        "wf2": jax.random.normal(ks[6], (6, 128), jnp.float32) * 0.05,
        "bf2": jax.random.normal(ks[7], (6,), jnp.float32) * 0.05,
    }


def pack_params(p):
    """One-time (init-time) re-layout of PyTorch-shaped weights for the kernel."""
    w1 = np.asarray(p["w1"], np.float32)    # (8, 1, 3, 3)
    b1 = np.asarray(p["b1"], np.float32)    # (8,)
    w2 = np.asarray(p["w2"], np.float32)    # (32, 8, 2, 2)
    b2 = np.asarray(p["b2"], np.float32)    # (32,)
    wf1 = np.asarray(p["wf1"], np.float32)  # (128, 288)
    bf1 = np.asarray(p["bf1"], np.float32)  # (128,)
    wf2 = np.asarray(p["wf2"], np.float32)  # (6, 128)
    bf2 = np.asarray(p["bf2"], np.float32)  # (6,)

    # conv1: y1_row[r] = sum_kh xrow[r+kh] @ m1[kh], output lane = c*10 + s.
    m1 = np.zeros((3, 12, 80), np.float32)
    for kh in range(3):
        for kw in range(3):
            for s in range(10):
                for c in range(8):
                    m1[kh, s + kw, c * 10 + s] = w1[c, 0, kh, kw]
    b1row = np.repeat(b1, 10).reshape(1, 80)

    # conv2 over lane-dilated pool1 rows (valid lanes ci*10 + 2*j),
    # output lane = s2*32 + co.  Zero rows implement the stride-2 decimation.
    n2 = np.zeros((2, 79, 128), np.float32)
    for kh in range(2):
        for kw in range(2):
            for s2 in range(4):
                for ci in range(8):
                    for co in range(32):
                        n2[kh, ci * 10 + 2 * (s2 + kw), s2 * 32 + co] = w2[co, ci, kh, kw]
    b2row = np.tile(b2, 4).reshape(1, 128)

    # fc1 with the PyTorch NCHW flatten (idx = co*9 + i2*3 + j2) pre-folded:
    # wf1s[i2, j2*32 + co, :] = wf1.T[co*9 + i2*3 + j2, :]
    wf1t = wf1.T                            # (288, 128)
    wf1s = np.zeros((3, 96, 128), np.float32)
    for i2 in range(3):
        for j2 in range(3):
            for co in range(32):
                wf1s[i2, j2 * 32 + co, :] = wf1t[co * 9 + i2 * 3 + j2, :]

    return {
        "m1": jnp.asarray(m1), "b1": jnp.asarray(b1row),
        "n2": jnp.asarray(n2), "b2": jnp.asarray(b2row),
        "wf1": jnp.asarray(wf1s), "bf1": jnp.asarray(bf1.reshape(1, 128)),
        "wf2": jnp.asarray(wf2.T), "bf2": jnp.asarray(bf2.reshape(1, 6)),
    }


if __name__ == "__main__":
    key = jax.random.PRNGKey(0)
    pkey, xkey = jax.random.split(key)
    params = init_params(pkey)
    packed = pack_params(params)        # weight re-layout happens exactly once

    # Input spatial size 10x10 is implied by fc1.in_features == 288:
    # 10x10 --conv1(p=1)--> 10x10 --mp1(2,2)--> 5x5 --conv2(k=2)--> 4x4 --mp2(2,1)--> 3x3
    x = jax.random.normal(xkey, (8, 1, 10, 10), jnp.float32)

    fwd = jax.jit(cnn_forward)
    out = jax.block_until_ready(fwd(packed, x))

    assert out.shape == (8, 6) and out.dtype == jnp.float32
    # log_softmax rows must exp-sum to 1
    assert jnp.allclose(jnp.sum(jnp.exp(out), axis=1), 1.0, atol=1e-3, rtol=1e-3)
    print("KERNEL_OK")
</pallas_src>

<mosaic_0001>
module attributes {stable_mosaic.version = 11 : i64} {
  func.func @_cnn_fused_kernel(%arg0: memref<12x8x12xf32, #tpu.memory_space<vmem>>, %arg1: memref<3x12x80xf32, #tpu.memory_space<vmem>>, %arg2: memref<1x80xf32, #tpu.memory_space<vmem>>, %arg3: memref<2x79x128xf32, #tpu.memory_space<vmem>>, %arg4: memref<1x128xf32, #tpu.memory_space<vmem>>, %arg5: memref<3x96x128xf32, #tpu.memory_space<vmem>>, %arg6: memref<1x128xf32, #tpu.memory_space<vmem>>, %arg7: memref<128x6xf32, #tpu.memory_space<vmem>>, %arg8: memref<1x6xf32, #tpu.memory_space<vmem>>, %arg9: memref<8x6xf32, #tpu.memory_space<vmem>>) attributes {dimension_semantics = [], scalar_prefetch = 0 : i64, scratch_operands = 0 : i64, tpu.core_type = #tpu.core_type<tc>} {
    %c0 = arith.constant 0 : index
    %c0_0 = arith.constant 0 : index
    %c0_1 = arith.constant 0 : index
    %0 = vector.load %arg0[%c0, %c0_0, %c0_1] : memref<12x8x12xf32, #tpu.memory_space<vmem>>, vector<1x8x12xf32>
    %1 = vector.shape_cast %0 : vector<1x8x12xf32> to vector<8x12xf32>
    %c1 = arith.constant 1 : index
    %c0_2 = arith.constant 0 : index
    %c0_3 = arith.constant 0 : index
    %2 = vector.load %arg0[%c1, %c0_2, %c0_3] : memref<12x8x12xf32, #tpu.memory_space<vmem>>, vector<1x8x12xf32>
    %3 = vector.shape_cast %2 : vector<1x8x12xf32> to vector<8x12xf32>
    %c2 = arith.constant 2 : index
    %c0_4 = arith.constant 0 : index
    %c0_5 = arith.constant 0 : index
    %4 = vector.load %arg0[%c2, %c0_4, %c0_5] : memref<12x8x12xf32, #tpu.memory_space<vmem>>, vector<1x8x12xf32>
    %5 = vector.shape_cast %4 : vector<1x8x12xf32> to vector<8x12xf32>
    %c3 = arith.constant 3 : index
    %c0_6 = arith.constant 0 : index
    %c0_7 = arith.constant 0 : index
    %6 = vector.load %arg0[%c3, %c0_6, %c0_7] : memref<12x8x12xf32, #tpu.memory_space<vmem>>, vector<1x8x12xf32>
    %7 = vector.shape_cast %6 : vector<1x8x12xf32> to vector<8x12xf32>
    %c4 = arith.constant 4 : index
    %c0_8 = arith.constant 0 : index
    %c0_9 = arith.constant 0 : index
    %8 = vector.load %arg0[%c4, %c0_8, %c0_9] : memref<12x8x12xf32, #tpu.memory_space<vmem>>, vector<1x8x12xf32>
    %9 = vector.shape_cast %8 : vector<1x8x12xf32> to vector<8x12xf32>
    %c5 = arith.constant 5 : index
    %c0_10 = arith.constant 0 : index
    %c0_11 = arith.constant 0 : index
    %10 = vector.load %arg0[%c5, %c0_10, %c0_11] : memref<12x8x12xf32, #tpu.memory_space<vmem>>, vector<1x8x12xf32>
    %11 = vector.shape_cast %10 : vector<1x8x12xf32> to vector<8x12xf32>
    %c6 = arith.constant 6 : index
    %c0_12 = arith.constant 0 : index
    %c0_13 = arith.constant 0 : index
    %12 = vector.load %arg0[%c6, %c0_12, %c0_13] : memref<12x8x12xf32, #tpu.memory_space<vmem>>, vector<1x8x12xf32>
    %13 = vector.shape_cast %12 : vector<1x8x12xf32> to vector<8x12xf32>
    %c7 = arith.constant 7 : index
    %c0_14 = arith.constant 0 : index
    %c0_15 = arith.constant 0 : index
    %14 = vector.load %arg0[%c7, %c0_14, %c0_15] : memref<12x8x12xf32, #tpu.memory_space<vmem>>, vector<1x8x12xf32>
    %15 = vector.shape_cast %14 : vector<1x8x12xf32> to vector<8x12xf32>
    %c8 = arith.constant 8 : index
    %c0_16 = arith.constant 0 : index
    %c0_17 = arith.constant 0 : index
    %16 = vector.load %arg0[%c8, %c0_16, %c0_17] : memref<12x8x12xf32, #tpu.memory_space<vmem>>, vector<1x8x12xf32>
    %17 = vector.shape_cast %16 : vector<1x8x12xf32> to vector<8x12xf32>
    %c9 = arith.constant 9 : index
    %c0_18 = arith.constant 0 : index
    %c0_19 = arith.constant 0 : index
    %18 = vector.load %arg0[%c9, %c0_18, %c0_19] : memref<12x8x12xf32, #tpu.memory_space<vmem>>, vector<1x8x12xf32>
    %19 = vector.shape_cast %18 : vector<1x8x12xf32> to vector<8x12xf32>
    %c10 = arith.constant 10 : index
    %c0_20 = arith.constant 0 : index
    %c0_21 = arith.constant 0 : index
    %20 = vector.load %arg0[%c10, %c0_20, %c0_21] : memref<12x8x12xf32, #tpu.memory_space<vmem>>, vector<1x8x12xf32>
    %21 = vector.shape_cast %20 : vector<1x8x12xf32> to vector<8x12xf32>
    %c11 = arith.constant 11 : index
    %c0_22 = arith.constant 0 : index
    %c0_23 = arith.constant 0 : index
    %22 = vector.load %arg0[%c11, %c0_22, %c0_23] : memref<12x8x12xf32, #tpu.memory_space<vmem>>, vector<1x8x12xf32>
    %23 = vector.shape_cast %22 : vector<1x8x12xf32> to vector<8x12xf32>
    %c0_24 = arith.constant 0 : index
    %c0_25 = arith.constant 0 : index
    %c0_26 = arith.constant 0 : index
    %24 = vector.load %arg1[%c0_24, %c0_25, %c0_26] : memref<3x12x80xf32, #tpu.memory_space<vmem>>, vector<1x12x80xf32>
    %25 = vector.shape_cast %24 : vector<1x12x80xf32> to vector<12x80xf32>
    %c1_27 = arith.constant 1 : index
    %c0_28 = arith.constant 0 : index
    %c0_29 = arith.constant 0 : index
    %26 = vector.load %arg1[%c1_27, %c0_28, %c0_29] : memref<3x12x80xf32, #tpu.memory_space<vmem>>, vector<1x12x80xf32>
    %27 = vector.shape_cast %26 : vector<1x12x80xf32> to vector<12x80xf32>
    %c2_30 = arith.constant 2 : index
    %c0_31 = arith.constant 0 : index
    %c0_32 = arith.constant 0 : index
    %28 = vector.load %arg1[%c2_30, %c0_31, %c0_32] : memref<3x12x80xf32, #tpu.memory_space<vmem>>, vector<1x12x80xf32>
    %29 = vector.shape_cast %28 : vector<1x12x80xf32> to vector<12x80xf32>
    %c0_33 = arith.constant 0 : index
    %c0_34 = arith.constant 0 : index
    %30 = vector.load %arg2[%c0_33, %c0_34] : memref<1x80xf32, #tpu.memory_space<vmem>>, vector<1x80xf32>
    %cst = arith.constant dense<0.000000e+00> : vector<8x80xf32>
    %31 = tpu.matmul %1, %25, %cst {dimension_numbers = #tpu.dot_dimension_numbers<[1], [0], [0], [1], [0, 0, 1, 1], [], []>} : vector<8x12xf32>, vector<12x80xf32>, vector<8x80xf32> -> vector<8x80xf32>
    %cst_35 = arith.constant dense<0.000000e+00> : vector<8x80xf32>
    %32 = tpu.matmul %3, %27, %cst_35 {dimension_numbers = #tpu.dot_dimension_numbers<[1], [0], [0], [1], [0, 0, 1, 1], [], []>} : vector<8x12xf32>, vector<12x80xf32>, vector<8x80xf32> -> vector<8x80xf32>
    %33 = arith.addf %31, %32 : vector<8x80xf32>
    %cst_36 = arith.constant dense<0.000000e+00> : vector<8x80xf32>
    %34 = tpu.matmul %5, %29, %cst_36 {dimension_numbers = #tpu.dot_dimension_numbers<[1], [0], [0], [1], [0, 0, 1, 1], [], []>} : vector<8x12xf32>, vector<12x80xf32>, vector<8x80xf32> -> vector<8x80xf32>
    %35 = arith.addf %33, %34 : vector<8x80xf32>
    %36 = vector.broadcast %30 : vector<1x80xf32> to vector<8x80xf32>
    %37 = arith.addf %35, %36 : vector<8x80xf32>
    %cst_37 = arith.constant dense<0.000000e+00> : vector<8x80xf32>
    %38 = tpu.matmul %3, %25, %cst_37 {dimension_numbers = #tpu.dot_dimension_numbers<[1], [0], [0], [1], [0, 0, 1, 1], [], []>} : vector<8x12xf32>, vector<12x80xf32>, vector<8x80xf32> -> vector<8x80xf32>
    %cst_38 = arith.constant dense<0.000000e+00> : vector<8x80xf32>
    %39 = tpu.matmul %5, %27, %cst_38 {dimension_numbers = #tpu.dot_dimension_numbers<[1], [0], [0], [1], [0, 0, 1, 1], [], []>} : vector<8x12xf32>, vector<12x80xf32>, vector<8x80xf32> -> vector<8x80xf32>
    %40 = arith.addf %38, %39 : vector<8x80xf32>
    %cst_39 = arith.constant dense<0.000000e+00> : vector<8x80xf32>
    %41 = tpu.matmul %7, %29, %cst_39 {dimension_numbers = #tpu.dot_dimension_numbers<[1], [0], [0], [1], [0, 0, 1, 1], [], []>} : vector<8x12xf32>, vector<12x80xf32>, vector<8x80xf32> -> vector<8x80xf32>
    %42 = arith.addf %40, %41 : vector<8x80xf32>
    %43 = vector.broadcast %30 : vector<1x80xf32> to vector<8x80xf32>
    %44 = arith.addf %42, %43 : vector<8x80xf32>
    %cst_40 = arith.constant dense<0.000000e+00> : vector<8x80xf32>
    %45 = tpu.matmul %5, %25, %cst_40 {dimension_numbers = #tpu.dot_dimension_numbers<[1], [0], [0], [1], [0, 0, 1, 1], [], []>} : vector<8x12xf32>, vector<12x80xf32>, vector<8x80xf32> -> vector<8x80xf32>
    %cst_41 = arith.constant dense<0.000000e+00> : vector<8x80xf32>
    %46 = tpu.matmul %7, %27, %cst_41 {dimension_numbers = #tpu.dot_dimension_numbers<[1], [0], [0], [1], [0, 0, 1, 1], [], []>} : vector<8x12xf32>, vector<12x80xf32>, vector<8x80xf32> -> vector<8x80xf32>
    %47 = arith.addf %45, %46 : vector<8x80xf32>
    %cst_42 = arith.constant dense<0.000000e+00> : vector<8x80xf32>
    %48 = tpu.matmul %9, %29, %cst_42 {dimension_numbers = #tpu.dot_dimension_numbers<[1], [0], [0], [1], [0, 0, 1, 1], [], []>} : vector<8x12xf32>, vector<12x80xf32>, vector<8x80xf32> -> vector<8x80xf32>
    %49 = arith.addf %47, %48 : vector<8x80xf32>
    %50 = vector.broadcast %30 : vector<1x80xf32> to vector<8x80xf32>
    %51 = arith.addf %49, %50 : vector<8x80xf32>
    %cst_43 = arith.constant dense<0.000000e+00> : vector<8x80xf32>
    %52 = tpu.matmul %7, %25, %cst_43 {dimension_numbers = #tpu.dot_dimension_numbers<[1], [0], [0], [1], [0, 0, 1, 1], [], []>} : vector<8x12xf32>, vector<12x80xf32>, vector<8x80xf32> -> vector<8x80xf32>
    %cst_44 = arith.constant dense<0.000000e+00> : vector<8x80xf32>
    %53 = tpu.matmul %9, %27, %cst_44 {dimension_numbers = #tpu.dot_dimension_numbers<[1], [0], [0], [1], [0, 0, 1, 1], [], []>} : vector<8x12xf32>, vector<12x80xf32>, vector<8x80xf32> -> vector<8x80xf32>
    %54 = arith.addf %52, %53 : vector<8x80xf32>
    %cst_45 = arith.constant dense<0.000000e+00> : vector<8x80xf32>
    %55 = tpu.matmul %11, %29, %cst_45 {dimension_numbers = #tpu.dot_dimension_numbers<[1], [0], [0], [1], [0, 0, 1, 1], [], []>} : vector<8x12xf32>, vector<12x80xf32>, vector<8x80xf32> -> vector<8x80xf32>
    %56 = arith.addf %54, %55 : vector<8x80xf32>
    %57 = vector.broadcast %30 : vector<1x80xf32> to vector<8x80xf32>
    %58 = arith.addf %56, %57 : vector<8x80xf32>
    %cst_46 = arith.constant dense<0.000000e+00> : vector<8x80xf32>
    %59 = tpu.matmul %9, %25, %cst_46 {dimension_numbers = #tpu.dot_dimension_numbers<[1], [0], [0], [1], [0, 0, 1, 1], [], []>} : vector<8x12xf32>, vector<12x80xf32>, vector<8x80xf32> -> vector<8x80xf32>
    %cst_47 = arith.constant dense<0.000000e+00> : vector<8x80xf32>
    %60 = tpu.matmul %11, %27, %cst_47 {dimension_numbers = #tpu.dot_dimension_numbers<[1], [0], [0], [1], [0, 0, 1, 1], [], []>} : vector<8x12xf32>, vector<12x80xf32>, vector<8x80xf32> -> vector<8x80xf32>
    %61 = arith.addf %59, %60 : vector<8x80xf32>
    %cst_48 = arith.constant dense<0.000000e+00> : vector<8x80xf32>
    %62 = tpu.matmul %13, %29, %cst_48 {dimension_numbers = #tpu.dot_dimension_numbers<[1], [0], [0], [1], [0, 0, 1, 1], [], []>} : vector<8x12xf32>, vector<12x80xf32>, vector<8x80xf32> -> vector<8x80xf32>
    %63 = arith.addf %61, %62 : vector<8x80xf32>
    %64 = vector.broadcast %30 : vector<1x80xf32> to vector<8x80xf32>
    %65 = arith.addf %63, %64 : vector<8x80xf32>
    %cst_49 = arith.constant dense<0.000000e+00> : vector<8x80xf32>
    %66 = tpu.matmul %11, %25, %cst_49 {dimension_numbers = #tpu.dot_dimension_numbers<[1], [0], [0], [1], [0, 0, 1, 1], [], []>} : vector<8x12xf32>, vector<12x80xf32>, vector<8x80xf32> -> vector<8x80xf32>
    %cst_50 = arith.constant dense<0.000000e+00> : vector<8x80xf32>
    %67 = tpu.matmul %13, %27, %cst_50 {dimension_numbers = #tpu.dot_dimension_numbers<[1], [0], [0], [1], [0, 0, 1, 1], [], []>} : vector<8x12xf32>, vector<12x80xf32>, vector<8x80xf32> -> vector<8x80xf32>
    %68 = arith.addf %66, %67 : vector<8x80xf32>
    %cst_51 = arith.constant dense<0.000000e+00> : vector<8x80xf32>
    %69 = tpu.matmul %15, %29, %cst_51 {dimension_numbers = #tpu.dot_dimension_numbers<[1], [0], [0], [1], [0, 0, 1, 1], [], []>} : vector<8x12xf32>, vector<12x80xf32>, vector<8x80xf32> -> vector<8x80xf32>
    %70 = arith.addf %68, %69 : vector<8x80xf32>
    %71 = vector.broadcast %30 : vector<1x80xf32> to vector<8x80xf32>
    %72 = arith.addf %70, %71 : vector<8x80xf32>
    %cst_52 = arith.constant dense<0.000000e+00> : vector<8x80xf32>
    %73 = tpu.matmul %13, %25, %cst_52 {dimension_numbers = #tpu.dot_dimension_numbers<[1], [0], [0], [1], [0, 0, 1, 1], [], []>} : vector<8x12xf32>, vector<12x80xf32>, vector<8x80xf32> -> vector<8x80xf32>
    %cst_53 = arith.constant dense<0.000000e+00> : vector<8x80xf32>
    %74 = tpu.matmul %15, %27, %cst_53 {dimension_numbers = #tpu.dot_dimension_numbers<[1], [0], [0], [1], [0, 0, 1, 1], [], []>} : vector<8x12xf32>, vector<12x80xf32>, vector<8x80xf32> -> vector<8x80xf32>
    %75 = arith.addf %73, %74 : vector<8x80xf32>
    %cst_54 = arith.constant dense<0.000000e+00> : vector<8x80xf32>
    %76 = tpu.matmul %17, %29, %cst_54 {dimension_numbers = #tpu.dot_dimension_numbers<[1], [0], [0], [1], [0, 0, 1, 1], [], []>} : vector<8x12xf32>, vector<12x80xf32>, vector<8x80xf32> -> vector<8x80xf32>
    %77 = arith.addf %75, %76 : vector<8x80xf32>
    %78 = vector.broadcast %30 : vector<1x80xf32> to vector<8x80xf32>
    %79 = arith.addf %77, %78 : vector<8x80xf32>
    %cst_55 = arith.constant dense<0.000000e+00> : vector<8x80xf32>
    %80 = tpu.matmul %15, %25, %cst_55 {dimension_numbers = #tpu.dot_dimension_numbers<[1], [0], [0], [1], [0, 0, 1, 1], [], []>} : vector<8x12xf32>, vector<12x80xf32>, vector<8x80xf32> -> vector<8x80xf32>
    %cst_56 = arith.constant dense<0.000000e+00> : vector<8x80xf32>
    %81 = tpu.matmul %17, %27, %cst_56 {dimension_numbers = #tpu.dot_dimension_numbers<[1], [0], [0], [1], [0, 0, 1, 1], [], []>} : vector<8x12xf32>, vector<12x80xf32>, vector<8x80xf32> -> vector<8x80xf32>
    %82 = arith.addf %80, %81 : vector<8x80xf32>
    %cst_57 = arith.constant dense<0.000000e+00> : vector<8x80xf32>
    %83 = tpu.matmul %19, %29, %cst_57 {dimension_numbers = #tpu.dot_dimension_numbers<[1], [0], [0], [1], [0, 0, 1, 1], [], []>} : vector<8x12xf32>, vector<12x80xf32>, vector<8x80xf32> -> vector<8x80xf32>
    %84 = arith.addf %82, %83 : vector<8x80xf32>
    %85 = vector.broadcast %30 : vector<1x80xf32> to vector<8x80xf32>
    %86 = arith.addf %84, %85 : vector<8x80xf32>
    %cst_58 = arith.constant dense<0.000000e+00> : vector<8x80xf32>
    %87 = tpu.matmul %17, %25, %cst_58 {dimension_numbers = #tpu.dot_dimension_numbers<[1], [0], [0], [1], [0, 0, 1, 1], [], []>} : vector<8x12xf32>, vector<12x80xf32>, vector<8x80xf32> -> vector<8x80xf32>
    %cst_59 = arith.constant dense<0.000000e+00> : vector<8x80xf32>
    %88 = tpu.matmul %19, %27, %cst_59 {dimension_numbers = #tpu.dot_dimension_numbers<[1], [0], [0], [1], [0, 0, 1, 1], [], []>} : vector<8x12xf32>, vector<12x80xf32>, vector<8x80xf32> -> vector<8x80xf32>
    %89 = arith.addf %87, %88 : vector<8x80xf32>
    %cst_60 = arith.constant dense<0.000000e+00> : vector<8x80xf32>
    %90 = tpu.matmul %21, %29, %cst_60 {dimension_numbers = #tpu.dot_dimension_numbers<[1], [0], [0], [1], [0, 0, 1, 1], [], []>} : vector<8x12xf32>, vector<12x80xf32>, vector<8x80xf32> -> vector<8x80xf32>
    %91 = arith.addf %89, %90 : vector<8x80xf32>
    %92 = vector.broadcast %30 : vector<1x80xf32> to vector<8x80xf32>
    %93 = arith.addf %91, %92 : vector<8x80xf32>
    %cst_61 = arith.constant dense<0.000000e+00> : vector<8x80xf32>
    %94 = tpu.matmul %19, %25, %cst_61 {dimension_numbers = #tpu.dot_dimension_numbers<[1], [0], [0], [1], [0, 0, 1, 1], [], []>} : vector<8x12xf32>, vector<12x80xf32>, vector<8x80xf32> -> vector<8x80xf32>
    %cst_62 = arith.constant dense<0.000000e+00> : vector<8x80xf32>
    %95 = tpu.matmul %21, %27, %cst_62 {dimension_numbers = #tpu.dot_dimension_numbers<[1], [0], [0], [1], [0, 0, 1, 1], [], []>} : vector<8x12xf32>, vector<12x80xf32>, vector<8x80xf32> -> vector<8x80xf32>
    %96 = arith.addf %94, %95 : vector<8x80xf32>
    %cst_63 = arith.constant dense<0.000000e+00> : vector<8x80xf32>
    %97 = tpu.matmul %23, %29, %cst_63 {dimension_numbers = #tpu.dot_dimension_numbers<[1], [0], [0], [1], [0, 0, 1, 1], [], []>} : vector<8x12xf32>, vector<12x80xf32>, vector<8x80xf32> -> vector<8x80xf32>
    %98 = arith.addf %96, %97 : vector<8x80xf32>
    %99 = vector.broadcast %30 : vector<1x80xf32> to vector<8x80xf32>
    %100 = arith.addf %98, %99 : vector<8x80xf32>
    %101 = arith.maximumf %37, %44 : vector<8x80xf32>
    %102 = vector.extract_strided_slice %101 {offsets = [0, 0], sizes = [8, 79], strides = [1, 1]} : vector<8x80xf32> to vector<8x79xf32>
    %103 = vector.extract_strided_slice %101 {offsets = [0, 1], sizes = [8, 79], strides = [1, 1]} : vector<8x80xf32> to vector<8x79xf32>
    %104 = arith.maximumf %102, %103 : vector<8x79xf32>
    %cst_64 = arith.constant 0.000000e+00 : f32
    %105 = vector.broadcast %cst_64 : f32 to vector<8x79xf32>
    %106 = arith.maximumf %104, %105 : vector<8x79xf32>
    %107 = arith.maximumf %51, %58 : vector<8x80xf32>
    %108 = vector.extract_strided_slice %107 {offsets = [0, 0], sizes = [8, 79], strides = [1, 1]} : vector<8x80xf32> to vector<8x79xf32>
    %109 = vector.extract_strided_slice %107 {offsets = [0, 1], sizes = [8, 79], strides = [1, 1]} : vector<8x80xf32> to vector<8x79xf32>
    %110 = arith.maximumf %108, %109 : vector<8x79xf32>
    %cst_65 = arith.constant 0.000000e+00 : f32
    %111 = vector.broadcast %cst_65 : f32 to vector<8x79xf32>
    %112 = arith.maximumf %110, %111 : vector<8x79xf32>
    %113 = arith.maximumf %65, %72 : vector<8x80xf32>
    %114 = vector.extract_strided_slice %113 {offsets = [0, 0], sizes = [8, 79], strides = [1, 1]} : vector<8x80xf32> to vector<8x79xf32>
    %115 = vector.extract_strided_slice %113 {offsets = [0, 1], sizes = [8, 79], strides = [1, 1]} : vector<8x80xf32> to vector<8x79xf32>
    %116 = arith.maximumf %114, %115 : vector<8x79xf32>
    %cst_66 = arith.constant 0.000000e+00 : f32
    %117 = vector.broadcast %cst_66 : f32 to vector<8x79xf32>
    %118 = arith.maximumf %116, %117 : vector<8x79xf32>
    %119 = arith.maximumf %79, %86 : vector<8x80xf32>
    %120 = vector.extract_strided_slice %119 {offsets = [0, 0], sizes = [8, 79], strides = [1, 1]} : vector<8x80xf32> to vector<8x79xf32>
    %121 = vector.extract_strided_slice %119 {offsets = [0, 1], sizes = [8, 79], strides = [1, 1]} : vector<8x80xf32> to vector<8x79xf32>
    %122 = arith.maximumf %120, %121 : vector<8x79xf32>
    %cst_67 = arith.constant 0.000000e+00 : f32
    %123 = vector.broadcast %cst_67 : f32 to vector<8x79xf32>
    %124 = arith.maximumf %122, %123 : vector<8x79xf32>
    %125 = arith.maximumf %93, %100 : vector<8x80xf32>
    %126 = vector.extract_strided_slice %125 {offsets = [0, 0], sizes = [8, 79], strides = [1, 1]} : vector<8x80xf32> to vector<8x79xf32>
    %127 = vector.extract_strided_slice %125 {offsets = [0, 1], sizes = [8, 79], strides = [1, 1]} : vector<8x80xf32> to vector<8x79xf32>
    %128 = arith.maximumf %126, %127 : vector<8x79xf32>
    %cst_68 = arith.constant 0.000000e+00 : f32
    %129 = vector.broadcast %cst_68 : f32 to vector<8x79xf32>
    %130 = arith.maximumf %128, %129 : vector<8x79xf32>
    %c0_69 = arith.constant 0 : index
    %c0_70 = arith.constant 0 : index
    %c0_71 = arith.constant 0 : index
    %131 = vector.load %arg3[%c0_69, %c0_70, %c0_71] : memref<2x79x128xf32, #tpu.memory_space<vmem>>, vector<1x79x128xf32>
    %132 = vector.shape_cast %131 : vector<1x79x128xf32> to vector<79x128xf32>
    %c1_72 = arith.constant 1 : index
    %c0_73 = arith.constant 0 : index
    %c0_74 = arith.constant 0 : index
    %133 = vector.load %arg3[%c1_72, %c0_73, %c0_74] : memref<2x79x128xf32, #tpu.memory_space<vmem>>, vector<1x79x128xf32>
    %134 = vector.shape_cast %133 : vector<1x79x128xf32> to vector<79x128xf32>
    %c0_75 = arith.constant 0 : index
    %c0_76 = arith.constant 0 : index
    %135 = vector.load %arg4[%c0_75, %c0_76] : memref<1x128xf32, #tpu.memory_space<vmem>>, vector<1x128xf32>
    %cst_77 = arith.constant dense<0.000000e+00> : vector<8x128xf32>
    %136 = tpu.matmul %106, %132, %cst_77 {dimension_numbers = #tpu.dot_dimension_numbers<[1], [0], [0], [1], [0, 0, 1, 1], [], []>} : vector<8x79xf32>, vector<79x128xf32>, vector<8x128xf32> -> vector<8x128xf32>
    %cst_78 = arith.constant dense<0.000000e+00> : vector<8x128xf32>
    %137 = tpu.matmul %112, %134, %cst_78 {dimension_numbers = #tpu.dot_dimension_numbers<[1], [0], [0], [1], [0, 0, 1, 1], [], []>} : vector<8x79xf32>, vector<79x128xf32>, vector<8x128xf32> -> vector<8x128xf32>
    %138 = arith.addf %136, %137 : vector<8x128xf32>
    %139 = vector.broadcast %135 : vector<1x128xf32> to vector<8x128xf32>
    %140 = arith.addf %138, %139 : vector<8x128xf32>
    %cst_79 = arith.constant dense<0.000000e+00> : vector<8x128xf32>
    %141 = tpu.matmul %112, %132, %cst_79 {dimension_numbers = #tpu.dot_dimension_numbers<[1], [0], [0], [1], [0, 0, 1, 1], [], []>} : vector<8x79xf32>, vector<79x128xf32>, vector<8x128xf32> -> vector<8x128xf32>
    %cst_80 = arith.constant dense<0.000000e+00> : vector<8x128xf32>
    %142 = tpu.matmul %118, %134, %cst_80 {dimension_numbers = #tpu.dot_dimension_numbers<[1], [0], [0], [1], [0, 0, 1, 1], [], []>} : vector<8x79xf32>, vector<79x128xf32>, vector<8x128xf32> -> vector<8x128xf32>
    %143 = arith.addf %141, %142 : vector<8x128xf32>
    %144 = vector.broadcast %135 : vector<1x128xf32> to vector<8x128xf32>
    %145 = arith.addf %143, %144 : vector<8x128xf32>
    %cst_81 = arith.constant dense<0.000000e+00> : vector<8x128xf32>
    %146 = tpu.matmul %118, %132, %cst_81 {dimension_numbers = #tpu.dot_dimension_numbers<[1], [0], [0], [1], [0, 0, 1, 1], [], []>} : vector<8x79xf32>, vector<79x128xf32>, vector<8x128xf32> -> vector<8x128xf32>
    %cst_82 = arith.constant dense<0.000000e+00> : vector<8x128xf32>
    %147 = tpu.matmul %124, %134, %cst_82 {dimension_numbers = #tpu.dot_dimension_numbers<[1], [0], [0], [1], [0, 0, 1, 1], [], []>} : vector<8x79xf32>, vector<79x128xf32>, vector<8x128xf32> -> vector<8x128xf32>
    %148 = arith.addf %146, %147 : vector<8x128xf32>
    %149 = vector.broadcast %135 : vector<1x128xf32> to vector<8x128xf32>
    %150 = arith.addf %148, %149 : vector<8x128xf32>
    %cst_83 = arith.constant dense<0.000000e+00> : vector<8x128xf32>
    %151 = tpu.matmul %124, %132, %cst_83 {dimension_numbers = #tpu.dot_dimension_numbers<[1], [0], [0], [1], [0, 0, 1, 1], [], []>} : vector<8x79xf32>, vector<79x128xf32>, vector<8x128xf32> -> vector<8x128xf32>
    %cst_84 = arith.constant dense<0.000000e+00> : vector<8x128xf32>
    %152 = tpu.matmul %130, %134, %cst_84 {dimension_numbers = #tpu.dot_dimension_numbers<[1], [0], [0], [1], [0, 0, 1, 1], [], []>} : vector<8x79xf32>, vector<79x128xf32>, vector<8x128xf32> -> vector<8x128xf32>
    %153 = arith.addf %151, %152 : vector<8x128xf32>
    %154 = vector.broadcast %135 : vector<1x128xf32> to vector<8x128xf32>
    %155 = arith.addf %153, %154 : vector<8x128xf32>
    %156 = arith.maximumf %140, %145 : vector<8x128xf32>
    %157 = vector.extract_strided_slice %156 {offsets = [0, 0], sizes = [8, 96], strides = [1, 1]} : vector<8x128xf32> to vector<8x96xf32>
    %158 = vector.extract_strided_slice %156 {offsets = [0, 32], sizes = [8, 96], strides = [1, 1]} : vector<8x128xf32> to vector<8x96xf32>
    %159 = arith.maximumf %157, %158 : vector<8x96xf32>
    %cst_85 = arith.constant 0.000000e+00 : f32
    %160 = vector.broadcast %cst_85 : f32 to vector<8x96xf32>
    %161 = arith.maximumf %159, %160 : vector<8x96xf32>
    %c0_86 = arith.constant 0 : index
    %c0_87 = arith.constant 0 : index
    %c0_88 = arith.constant 0 : index
    %162 = vector.load %arg5[%c0_86, %c0_87, %c0_88] : memref<3x96x128xf32, #tpu.memory_space<vmem>>, vector<1x96x128xf32>
    %163 = vector.shape_cast %162 : vector<1x96x128xf32> to vector<96x128xf32>
    %cst_89 = arith.constant dense<0.000000e+00> : vector<8x128xf32>
    %164 = tpu.matmul %161, %163, %cst_89 {dimension_numbers = #tpu.dot_dimension_numbers<[1], [0], [0], [1], [0, 0, 1, 1], [], []>} : vector<8x96xf32>, vector<96x128xf32>, vector<8x128xf32> -> vector<8x128xf32>
    %165 = arith.maximumf %145, %150 : vector<8x128xf32>
    %166 = vector.extract_strided_slice %165 {offsets = [0, 0], sizes = [8, 96], strides = [1, 1]} : vector<8x128xf32> to vector<8x96xf32>
    %167 = vector.extract_strided_slice %165 {offsets = [0, 32], sizes = [8, 96], strides = [1, 1]} : vector<8x128xf32> to vector<8x96xf32>
    %168 = arith.maximumf %166, %167 : vector<8x96xf32>
    %cst_90 = arith.constant 0.000000e+00 : f32
    %169 = vector.broadcast %cst_90 : f32 to vector<8x96xf32>
    %170 = arith.maximumf %168, %169 : vector<8x96xf32>
    %c1_91 = arith.constant 1 : index
    %c0_92 = arith.constant 0 : index
    %c0_93 = arith.constant 0 : index
    %171 = vector.load %arg5[%c1_91, %c0_92, %c0_93] : memref<3x96x128xf32, #tpu.memory_space<vmem>>, vector<1x96x128xf32>
    %172 = vector.shape_cast %171 : vector<1x96x128xf32> to vector<96x128xf32>
    %cst_94 = arith.constant dense<0.000000e+00> : vector<8x128xf32>
    %173 = tpu.matmul %170, %172, %cst_94 {dimension_numbers = #tpu.dot_dimension_numbers<[1], [0], [0], [1], [0, 0, 1, 1], [], []>} : vector<8x96xf32>, vector<96x128xf32>, vector<8x128xf32> -> vector<8x128xf32>
    %174 = arith.addf %164, %173 : vector<8x128xf32>
    %175 = arith.maximumf %150, %155 : vector<8x128xf32>
    %176 = vector.extract_strided_slice %175 {offsets = [0, 0], sizes = [8, 96], strides = [1, 1]} : vector<8x128xf32> to vector<8x96xf32>
    %177 = vector.extract_strided_slice %175 {offsets = [0, 32], sizes = [8, 96], strides = [1, 1]} : vector<8x128xf32> to vector<8x96xf32>
    %178 = arith.maximumf %176, %177 : vector<8x96xf32>
    %cst_95 = arith.constant 0.000000e+00 : f32
    %179 = vector.broadcast %cst_95 : f32 to vector<8x96xf32>
    %180 = arith.maximumf %178, %179 : vector<8x96xf32>
    %c2_96 = arith.constant 2 : index
    %c0_97 = arith.constant 0 : index
    %c0_98 = arith.constant 0 : index
    %181 = vector.load %arg5[%c2_96, %c0_97, %c0_98] : memref<3x96x128xf32, #tpu.memory_space<vmem>>, vector<1x96x128xf32>
    %182 = vector.shape_cast %181 : vector<1x96x128xf32> to vector<96x128xf32>
    %cst_99 = arith.constant dense<0.000000e+00> : vector<8x128xf32>
    %183 = tpu.matmul %180, %182, %cst_99 {dimension_numbers = #tpu.dot_dimension_numbers<[1], [0], [0], [1], [0, 0, 1, 1], [], []>} : vector<8x96xf32>, vector<96x128xf32>, vector<8x128xf32> -> vector<8x128xf32>
    %184 = arith.addf %174, %183 : vector<8x128xf32>
    %c0_100 = arith.constant 0 : index
    %c0_101 = arith.constant 0 : index
    %185 = vector.load %arg6[%c0_100, %c0_101] : memref<1x128xf32, #tpu.memory_space<vmem>>, vector<1x128xf32>
    %186 = vector.broadcast %185 : vector<1x128xf32> to vector<8x128xf32>
    %187 = arith.addf %184, %186 : vector<8x128xf32>
    %cst_102 = arith.constant 0.000000e+00 : f32
    %188 = vector.broadcast %cst_102 : f32 to vector<8x128xf32>
    %189 = arith.maximumf %187, %188 : vector<8x128xf32>
    %c0_103 = arith.constant 0 : index
    %c0_104 = arith.constant 0 : index
    %190 = vector.load %arg7[%c0_103, %c0_104] : memref<128x6xf32, #tpu.memory_space<vmem>>, vector<128x6xf32>
    %cst_105 = arith.constant dense<0.000000e+00> : vector<8x6xf32>
    %191 = tpu.matmul %189, %190, %cst_105 {dimension_numbers = #tpu.dot_dimension_numbers<[1], [0], [0], [1], [0, 0, 1, 1], [], []>} : vector<8x128xf32>, vector<128x6xf32>, vector<8x6xf32> -> vector<8x6xf32>
    %c0_106 = arith.constant 0 : index
    %c0_107 = arith.constant 0 : index
    %192 = vector.load %arg8[%c0_106, %c0_107] : memref<1x6xf32, #tpu.memory_space<vmem>>, vector<1x6xf32>
    %193 = vector.broadcast %192 : vector<1x6xf32> to vector<8x6xf32>
    %194 = arith.addf %191, %193 : vector<8x6xf32>
    %cst_108 = arith.constant dense<0xFF800000> : vector<8xf32>
    %195 = vector.multi_reduction <maximumf>, %194, %cst_108 [1] : vector<8x6xf32> to vector<8xf32>
    %196 = vector.shape_cast %195 : vector<8xf32> to vector<8x1xf32>
    %197 = vector.broadcast %196 : vector<8x1xf32> to vector<8x6xf32>
    %198 = arith.subf %194, %197 : vector<8x6xf32>
    %199 = math.exp %198 : vector<8x6xf32>
    %cst_109 = arith.constant dense<0.000000e+00> : vector<8xf32>
    %200 = vector.multi_reduction <add>, %199, %cst_109 [1] : vector<8x6xf32> to vector<8xf32>
    %201 = vector.shape_cast %200 : vector<8xf32> to vector<8x1xf32>
    %202 = vector.broadcast %196 : vector<8x1xf32> to vector<8x6xf32>
    %203 = arith.subf %194, %202 : vector<8x6xf32>
    %204 = math.log %201 : vector<8x1xf32>
    %205 = vector.broadcast %204 : vector<8x1xf32> to vector<8x6xf32>
    %206 = arith.subf %203, %205 : vector<8x6xf32>
    %c0_110 = arith.constant 0 : index
    %c0_111 = arith.constant 0 : index
    %207 = vector.load %arg9[%c0_110, %c0_111] : memref<8x6xf32, #tpu.memory_space<vmem>>, vector<8x6xf32>
    tpu.vector_store %arg9[%c0_110, %c0_111], %206 {strides = array<i32>} : memref<8x6xf32, #tpu.memory_space<vmem>>, vector<8x6xf32>,
    return
  }
}

</mosaic_0001>

<llo_original>
// kernel: cnn_forward.1
$region0: #{cnn_forward.1}
  #allocation0 [shape = 'u32[]', space=smem, size = 0x4, offset = 0x4, fixed_abs, tag = 'smem constant byte address 0x4 - core index']
  #allocation1 [shape = 'u32[144,128]{1,0:T(1,128)}', space=vmem, size = 0x12000, scoped, tag = 'internal scratch']
  %s0 = inlined_call_operand.vmem [shape: f32[12,8,12], index: 0, kind: input, shape index: {}]
  %s1 = inlined_call_operand.vmem [shape: f32[3,12,80], index: 1, kind: input, shape index: {}]
  %s2 = inlined_call_operand.vmem [shape: f32[1,80], index: 2, kind: input, shape index: {}]
  %s3 = inlined_call_operand.vmem [shape: f32[2,79,128], index: 3, kind: input, shape index: {}]
  %s4 = inlined_call_operand.vmem [shape: f32[1,128], index: 4, kind: input, shape index: {}]
  %s5 = inlined_call_operand.vmem [shape: f32[3,96,128], index: 5, kind: input, shape index: {}]
  %s6 = inlined_call_operand.vmem [shape: f32[1,128], index: 6, kind: input, shape index: {}]
  %s7 = inlined_call_operand.vmem [shape: f32[128,6], index: 7, kind: input, shape index: {}]
  %s8 = inlined_call_operand.vmem [shape: f32[1,6], index: 8, kind: input, shape index: {}]
  %s9 = inlined_call_operand.hbm [shape: f32[8,6], index: 9, kind: output, shape index: {}]
  %s10 = sld [smem:[#allocation0]]
  $region46: #{cnn_forward.1} parent=0
    _
  %s12 = ssub.s32 1, %s10
  %s13 = scalar_select 0, %s12, %s10
  $region1: #{cnn_forward.1} parent=0
    #allocation2 [shape = 'u8[4096]{0}', space=vmem, size = 0x1000, scoped, tag = 'output window, operand 0, single buffered']
    #allocation3 [shape = 's32[1]{0}', space=sflag, size = 0x4, scoped, tag = 'scoped memory for cnn_forward.1']
    %14 = vsyncpa [#allocation3], 0
    // Predicated region
    $region2: #{cnn_forward.1} parent=1 // pred_check
      _
    $region3: #{cnn_forward.1} parent=1 // pred_check_branch
      %16 = sbr.rel (0) target = $region5
    $region4: #{cnn_forward.1} parent=1 // pred_region
      _
    $region5: #{cnn_forward.1} parent=1 // pred_fallthru
      _
    // Predicated region
    $region6: #{cnn_forward.1} parent=1 // pred_check
      _
    $region7: #{cnn_forward.1} parent=1 // pred_check_branch
      %18 = sbr.rel (0) target = $region9
    $region8: #{cnn_forward.1} parent=1 // pred_region
      _
    $region9: #{cnn_forward.1} parent=1 // pred_fallthru
      _
    // Predicated region
    $region10: #{cnn_forward.1} parent=1 // pred_check
      _
    $region11: #{cnn_forward.1} parent=1 // pred_check_branch
      %20 = sbr.rel (0) target = $region13
    $region12: #{cnn_forward.1} parent=1 // pred_region
      _
    $region13: #{cnn_forward.1} parent=1 // pred_fallthru
      _
    // Predicated region
    $region14: #{cnn_forward.1} parent=1 // pred_check
      _
    $region15: #{cnn_forward.1} parent=1 // pred_check_branch
      %22 = sbr.rel (0) target = $region17
    $region16: #{cnn_forward.1} parent=1 // pred_region
      _
    $region17: #{cnn_forward.1} parent=1 // pred_fallthru
      _
    // Predicated region
    $region18: #{cnn_forward.1} parent=1 // pred_check
      _
    $region19: #{cnn_forward.1} parent=1 // pred_check_branch
      %24 = sbr.rel (0) target = $region21
    $region20: #{cnn_forward.1} parent=1 // pred_region
      _
    $region21: #{cnn_forward.1} parent=1 // pred_fallthru
      _
    // Predicated region
    $region22: #{cnn_forward.1} parent=1 // pred_check
      _
    $region23: #{cnn_forward.1} parent=1 // pred_check_branch
      %26 = sbr.rel (0) target = $region25
    $region24: #{cnn_forward.1} parent=1 // pred_region
      _
    $region25: #{cnn_forward.1} parent=1 // pred_fallthru
      _
    // Predicated region
    $region26: #{cnn_forward.1} parent=1 // pred_check
      _
    $region27: #{cnn_forward.1} parent=1 // pred_check_branch
      %28 = sbr.rel (0) target = $region29
    $region28: #{cnn_forward.1} parent=1 // pred_region
      _
    $region29: #{cnn_forward.1} parent=1 // pred_fallthru
      _
    // Predicated region
    $region30: #{cnn_forward.1} parent=1 // pred_check
      _
    $region31: #{cnn_forward.1} parent=1 // pred_check_branch
      %30 = sbr.rel (0) target = $region33
    $region32: #{cnn_forward.1} parent=1 // pred_region
      _
    $region33: #{cnn_forward.1} parent=1 // pred_fallthru
      _
    // Predicated region
    $region34: #{cnn_forward.1} parent=1 // pred_check
      _
    $region35: #{cnn_forward.1} parent=1 // pred_check_branch
      %32 = sbr.rel (0) target = $region37
    $region36: #{cnn_forward.1} parent=1 // pred_region
      _
    $region37: #{cnn_forward.1} parent=1 // pred_fallthru
      _
    %v33 = vld [vmem:[%s0] sm:$0xff]
    %s34 = scalar_lea.vmem %s0, 8
    %v35 = vld [vmem:[%s34] sm:$0xff]
    %s36 = scalar_lea.vmem %s0, 16
    %v37 = vld [vmem:[%s36] sm:$0xff]
    %s38 = scalar_lea.vmem %s0, 24
    %v39 = vld [vmem:[%s38] sm:$0xff]
    %s40 = scalar_lea.vmem %s0, 32
    %v41 = vld [vmem:[%s40] sm:$0xff]
    %s42 = scalar_lea.vmem %s0, 40
    %v43 = vld [vmem:[%s42] sm:$0xff]
    %s44 = scalar_lea.vmem %s0, 48
    %v45 = vld [vmem:[%s44] sm:$0xff]
    %s46 = scalar_lea.vmem %s0, 56
    %v47 = vld [vmem:[%s46] sm:$0xff]
    %s48 = scalar_lea.vmem %s0, 64
    %v49 = vld [vmem:[%s48] sm:$0xff]
    %s50 = scalar_lea.vmem %s0, 72
    %v51 = vld [vmem:[%s50] sm:$0xff]
    %s52 = scalar_lea.vmem %s0, 80
    %v53 = vld [vmem:[%s52] sm:$0xff]
    %s54 = scalar_lea.vmem %s0, 88
    %v55 = vld [vmem:[%s54] sm:$0xff]
    %v56 = vld [vmem:[%s1] sm:$0xff]
    %v57 = vld [vmem:[%s1 + $0x8] sm:$0xf]
    %s58 = scalar_lea.vmem %s1, 16
    %v59 = vld [vmem:[%s58] sm:$0xff]
    %v60 = vld [vmem:[%s58 + $0x8] sm:$0xf]
    %s61 = scalar_lea.vmem %s1, 32
    %v62 = vld [vmem:[%s61] sm:$0xff]
    %v63 = vld [vmem:[%s61 + $0x8] sm:$0xf]
    %v64 = vld [vmem:[%s2] sm:$0x1]
    %vm65 = vcmask 97280
    %v67 = vsel %vm65, %v35, 0
    %vm69 = vcmask 1043456
    %v71 = vsel %vm69, %v60, 0
    %73 = vmatprep.subr.mxu0 0.0
    %74 = vmatpush1.msra.mxu0 0.0
    %75 = vmatprep.subr.mxu0 0.0
    %76 = vmatpush1.msra.mxu0 0.0
    %77 = vmatprep.subr.mxu0 0.0
    %78 = vmatpush1.msra.mxu0 0.0
    %79 = vmatprep.subr.mxu0 0.0
    %80 = vmatpush1.msra.mxu0 0.0
    %81 = vmatprep.subr.mxu0 0.0
    %82 = vmatpush1.msra.mxu0 0.0
    %83 = vmatprep.subr.mxu0 0.0
    %84 = vmatpush1.msra.mxu0 0.0
    %85 = vmatprep.subr.mxu0 0.0
    %86 = vmatpush1.msra.mxu0 0.0
    %87 = vmatprep.subr.mxu0 0.0
    %88 = vmatpush1.msra.mxu0 0.0
    %89 = vmatprep.subr.mxu0 0.0
    %90 = vmatpush1.msra.mxu0 0.0
    %91 = vmatprep.subr.mxu0 0.0
    %92 = vmatpush1.msra.mxu0 0.0
    %93 = vmatprep.subr.mxu0 0.0
    %94 = vmatpush1.msra.mxu0 0.0
    %95 = vmatprep.subr.mxu0 0.0
    %96 = vmatpush1.msra.mxu0 0.0
    %97 = vmatprep.subr.mxu0 0.0
    %98 = vmatpush1.msra.mxu0 0.0
    %99 = vmatprep.subr.mxu0 0.0
    %100 = vmatpush1.msra.mxu0 0.0
    %101 = vmatprep.subr.mxu0 0.0
    %102 = vmatpush1.msra.mxu0 %v71
    %103 = vmatprep.subr.mxu0 0.0
    %104 = vmatpush1.msra.mxu0 %v59
    %105 = vmatprep.subr.mxu0 0.0
    %106 = vmatpush2.msra.mxu0 0.0
    %107 = vmatprep.subr.mxu0 0.0
    %108 = vmatpush2.msra.mxu0 0.0
    %109 = vmatprep.subr.mxu0 0.0
    %110 = vmatpush2.msra.mxu0 0.0
    %111 = vmatprep.subr.mxu0 0.0
    %112 = vmatpush2.msra.mxu0 0.0
    %113 = vmatprep.subr.mxu0 0.0
    %114 = vmatpush2.msra.mxu0 0.0
    %115 = vmatprep.subr.mxu0 0.0
    %116 = vmatpush2.msra.mxu0 0.0
    %117 = vmatprep.subr.mxu0 0.0
    %118 = vmatpush2.msra.mxu0 0.0
    %119 = vmatprep.subr.mxu0 0.0
    %120 = vmatpush2.msra.mxu0 0.0
    %121 = vmatprep.subr.mxu0 0.0
    %122 = vmatpush2.msra.mxu0 0.0
    %123 = vmatprep.subr.mxu0 0.0
    %124 = vmatpush2.msra.mxu0 0.0
    %125 = vmatprep.subr.mxu0 0.0
    %126 = vmatpush2.msra.mxu0 0.0
    %127 = vmatprep.subr.mxu0 0.0
    %128 = vmatpush2.msra.mxu0 0.0
    %129 = vmatprep.subr.mxu0 0.0
    %130 = vmatpush2.msra.mxu0 0.0
    %131 = vmatprep.subr.mxu0 0.0
    %132 = vmatpush2.msra.mxu0 0.0
    %133 = vmatprep.subr.mxu0 0.0
    %134 = vmatpush2.msra.mxu0 0.0
    %135 = vmatprep.subr.mxu0 0.0
    %136 = vmatpush2.msra.mxu0 0.0
    %137 = vmatprep.mubr.f32.mxu0 0.0
    %138 = vmatmul.mubr.f32.gmra.mxu0 %v67
    %v139 = vpop.f32.mrf.mxu0
    %v140 = vadd.f32 0.0, %v139
    %v141 = vpop.f32.mrf.mxu0
    %142 = vdwg.mxu0
    %v144 = vsel %vm65, %v33, 0
    %v147 = vsel %vm69, %v57, 0
    %149 = vmatprep.subr.mxu0 0.0
    %150 = vmatpush1.msra.mxu0 0.0
    %151 = vmatprep.subr.mxu0 0.0
    %152 = vmatpush1.msra.mxu0 0.0
    %153 = vmatprep.subr.mxu0 0.0
    %154 = vmatpush1.msra.mxu0 0.0
    %155 = vmatprep.subr.mxu0 0.0
    %156 = vmatpush1.msra.mxu0 0.0
    %157 = vmatprep.subr.mxu0 0.0
    %158 = vmatpush1.msra.mxu0 0.0
    %159 = vmatprep.subr.mxu0 0.0
    %160 = vmatpush1.msra.mxu0 0.0
    %161 = vmatprep.subr.mxu0 0.0
    %162 = vmatpush1.msra.mxu0 0.0
    %163 = vmatprep.subr.mxu0 0.0
    %164 = vmatpush1.msra.mxu0 0.0
    %165 = vmatprep.subr.mxu0 0.0
    %166 = vmatpush1.msra.mxu0 0.0
    %167 = vmatprep.subr.mxu0 0.0
    %168 = vmatpush1.msra.mxu0 0.0
    %169 = vmatprep.subr.mxu0 0.0
    %170 = vmatpush1.msra.mxu0 0.0
    %171 = vmatprep.subr.mxu0 0.0
    %172 = vmatpush1.msra.mxu0 0.0
    %173 = vmatprep.subr.mxu0 0.0
    %174 = vmatpush1.msra.mxu0 0.0
    %175 = vmatprep.subr.mxu0 0.0
    %176 = vmatpush1.msra.mxu0 0.0
    %177 = vmatprep.subr.mxu0 0.0
    %178 = vmatpush1.msra.mxu0 %v147
    %179 = vmatprep.subr.mxu0 0.0
    %180 = vmatpush1.msra.mxu0 %v56
    %181 = vmatprep.subr.mxu0 0.0
    %182 = vmatpush2.msra.mxu0 0.0
    %183 = vmatprep.subr.mxu0 0.0
    %184 = vmatpush2.msra.mxu0 0.0
    %185 = vmatprep.subr.mxu0 0.0
    %186 = vmatpush2.msra.mxu0 0.0
    %187 = vmatprep.subr.mxu0 0.0
    %188 = vmatpush2.msra.mxu0 0.0
    %189 = vmatprep.subr.mxu0 0.0
    %190 = vmatpush2.msra.mxu0 0.0
    %191 = vmatprep.subr.mxu0 0.0
    %192 = vmatpush2.msra.mxu0 0.0
    %193 = vmatprep.subr.mxu0 0.0
    %194 = vmatpush2.msra.mxu0 0.0
    %195 = vmatprep.subr.mxu0 0.0
    %196 = vmatpush2.msra.mxu0 0.0
    %197 = vmatprep.subr.mxu0 0.0
    %198 = vmatpush2.msra.mxu0 0.0
    %199 = vmatprep.subr.mxu0 0.0
    %200 = vmatpush2.msra.mxu0 0.0
    %201 = vmatprep.subr.mxu0 0.0
    %202 = vmatpush2.msra.mxu0 0.0
    %203 = vmatprep.subr.mxu0 0.0
    %204 = vmatpush2.msra.mxu0 0.0
    %205 = vmatprep.subr.mxu0 0.0
    %206 = vmatpush2.msra.mxu0 0.0
    %207 = vmatprep.subr.mxu0 0.0
    %208 = vmatpush2.msra.mxu0 0.0
    %209 = vmatprep.subr.mxu0 0.0
    %210 = vmatpush2.msra.mxu0 0.0
    %211 = vmatprep.subr.mxu0 0.0
    %212 = vmatpush2.msra.mxu0 0.0
    %213 = vmatprep.mubr.f32.mxu0 0.0
    %214 = vmatmul.mubr.f32.gmra.mxu0 %v144
    %v215 = vpop.f32.mrf.mxu0
    %v216 = vadd.f32 %v140, %v215
    %v217 = vpop.f32.mrf.mxu0
    %218 = vdwg.mxu0
    %v220 = vsel %vm65, %v37, 0
    %v223 = vsel %vm69, %v63, 0
    %225 = vmatprep.subr.mxu0 0.0
    %226 = vmatpush1.msra.mxu0 0.0
    %227 = vmatprep.subr.mxu0 0.0
    %228 = vmatpush1.msra.mxu0 0.0
    %229 = vmatprep.subr.mxu0 0.0
    %230 = vmatpush1.msra.mxu0 0.0
    %231 = vmatprep.subr.mxu0 0.0
    %232 = vmatpush1.msra.mxu0 0.0
    %233 = vmatprep.subr.mxu0 0.0
    %234 = vmatpush1.msra.mxu0 0.0
    %235 = vmatprep.subr.mxu0 0.0
    %236 = vmatpush1.msra.mxu0 0.0
    %237 = vmatprep.subr.mxu0 0.0
    %238 = vmatpush1.msra.mxu0 0.0
    %239 = vmatprep.subr.mxu0 0.0
    %240 = vmatpush1.msra.mxu0 0.0
    %241 = vmatprep.subr.mxu0 0.0
    %242 = vmatpush1.msra.mxu0 0.0
    %243 = vmatprep.subr.mxu0 0.0
    %244 = vmatpush1.msra.mxu0 0.0
    %245 = vmatprep.subr.mxu0 0.0
    %246 = vmatpush1.msra.mxu0 0.0
    %247 = vmatprep.subr.mxu0 0.0
    %248 = vmatpush1.msra.mxu0 0.0
    %249 = vmatprep.subr.mxu0 0.0
    %250 = vmatpush1.msra.mxu0 0.0
    %251 = vmatprep.subr.mxu0 0.0
    %252 = vmatpush1.msra.mxu0 0.0
    %253 = vmatprep.subr.mxu0 0.0
    %254 = vmatpush1.msra.mxu0 %v223
    %255 = vmatprep.subr.mxu0 0.0
    %256 = vmatpush1.msra.mxu0 %v62
    %257 = vmatprep.subr.mxu0 0.0
    %258 = vmatpush2.msra.mxu0 0.0
    %259 = vmatprep.subr.mxu0 0.0
    %260 = vmatpush2.msra.mxu0 0.0
    %261 = vmatprep.subr.mxu0 0.0
    %262 = vmatpush2.msra.mxu0 0.0
    %263 = vmatprep.subr.mxu0 0.0
    %264 = vmatpush2.msra.mxu0 0.0
    %265 = vmatprep.subr.mxu0 0.0
    %266 = vmatpush2.msra.mxu0 0.0
    %267 = vmatprep.subr.mxu0 0.0
    %268 = vmatpush2.msra.mxu0 0.0
    %269 = vmatprep.subr.mxu0 0.0
    %270 = vmatpush2.msra.mxu0 0.0
    %271 = vmatprep.subr.mxu0 0.0
    %272 = vmatpush2.msra.mxu0 0.0
    %273 = vmatprep.subr.mxu0 0.0
    %274 = vmatpush2.msra.mxu0 0.0
    %275 = vmatprep.subr.mxu0 0.0
    %276 = vmatpush2.msra.mxu0 0.0
    %277 = vmatprep.subr.mxu0 0.0
    %278 = vmatpush2.msra.mxu0 0.0
    %279 = vmatprep.subr.mxu0 0.0
    %280 = vmatpush2.msra.mxu0 0.0
    %281 = vmatprep.subr.mxu0 0.0
    %282 = vmatpush2.msra.mxu0 0.0
    %283 = vmatprep.subr.mxu0 0.0
    %284 = vmatpush2.msra.mxu0 0.0
    %285 = vmatprep.subr.mxu0 0.0
    %286 = vmatpush2.msra.mxu0 0.0
    %287 = vmatprep.subr.mxu0 0.0
    %288 = vmatpush2.msra.mxu0 0.0
    %289 = vmatprep.mubr.f32.mxu0 0.0
    %290 = vmatmul.mubr.f32.gmra.mxu0 %v220
    %v291 = vpop.f32.mrf.mxu0
    %v292 = vadd.f32 0.0, %v291
    %v293 = vpop.f32.mrf.mxu0
    %294 = vdwg.mxu0
    %v295 = vadd.f32 %v216, %v292
    %v297 = vlaneseq
    %v298 = vshrl.u32 %v297, 7
    %v299 = vsub.s32 0, %v298
    %v300 = vrot.slane %v64, %v299
    %v302 = vadd.f32 %v295, %v300
    %303 = vmatprep.subr.mxu0 0.0
    %304 = vmatpush1.msra.mxu0 0.0
    %305 = vmatprep.subr.mxu0 0.0
    %306 = vmatpush1.msra.mxu0 0.0
    %307 = vmatprep.subr.mxu0 0.0
    %308 = vmatpush1.msra.mxu0 0.0
    %309 = vmatprep.subr.mxu0 0.0
    %310 = vmatpush1.msra.mxu0 0.0
    %311 = vmatprep.subr.mxu0 0.0
    %312 = vmatpush1.msra.mxu0 0.0
    %313 = vmatprep.subr.mxu0 0.0
    %314 = vmatpush1.msra.mxu0 0.0
    %315 = vmatprep.subr.mxu0 0.0
    %316 = vmatpush1.msra.mxu0 0.0
    %317 = vmatprep.subr.mxu0 0.0
    %318 = vmatpush1.msra.mxu0 0.0
    %319 = vmatprep.subr.mxu0 0.0
    %320 = vmatpush1.msra.mxu0 0.0
    %321 = vmatprep.subr.mxu0 0.0
    %322 = vmatpush1.msra.mxu0 0.0
    %323 = vmatprep.subr.mxu0 0.0
    %324 = vmatpush1.msra.mxu0 0.0
    %325 = vmatprep.subr.mxu0 0.0
    %326 = vmatpush1.msra.mxu0 0.0
    %327 = vmatprep.subr.mxu0 0.0
    %328 = vmatpush1.msra.mxu0 0.0
    %329 = vmatprep.subr.mxu0 0.0
    %330 = vmatpush1.msra.mxu0 0.0
    %331 = vmatprep.subr.mxu0 0.0
    %332 = vmatpush1.msra.mxu0 %v71
    %333 = vmatprep.subr.mxu0 0.0
    %334 = vmatpush1.msra.mxu0 %v59
    %335 = vmatprep.subr.mxu0 0.0
    %336 = vmatpush2.msra.mxu0 0.0
    %337 = vmatprep.subr.mxu0 0.0
    %338 = vmatpush2.msra.mxu0 0.0
    %339 = vmatprep.subr.mxu0 0.0
    %340 = vmatpush2.msra.mxu0 0.0
    %341 = vmatprep.subr.mxu0 0.0
    %342 = vmatpush2.msra.mxu0 0.0
    %343 = vmatprep.subr.mxu0 0.0
    %344 = vmatpush2.msra.mxu0 0.0
    %345 = vmatprep.subr.mxu0 0.0
    %346 = vmatpush2.msra.mxu0 0.0
    %347 = vmatprep.subr.mxu0 0.0
    %348 = vmatpush2.msra.mxu0 0.0
    %349 = vmatprep.subr.mxu0 0.0
    %350 = vmatpush2.msra.mxu0 0.0
    %351 = vmatprep.subr.mxu0 0.0
    %352 = vmatpush2.msra.mxu0 0.0
    %353 = vmatprep.subr.mxu0 0.0
    %354 = vmatpush2.msra.mxu0 0.0
    %355 = vmatprep.subr.mxu0 0.0
    %356 = vmatpush2.msra.mxu0 0.0
    %357 = vmatprep.subr.mxu0 0.0
    %358 = vmatpush2.msra.mxu0 0.0
    %359 = vmatprep.subr.mxu0 0.0
    %360 = vmatpush2.msra.mxu0 0.0
    %361 = vmatprep.subr.mxu0 0.0
    %362 = vmatpush2.msra.mxu0 0.0
    %363 = vmatprep.subr.mxu0 0.0
    %364 = vmatpush2.msra.mxu0 0.0
    %365 = vmatprep.subr.mxu0 0.0
    %366 = vmatpush2.msra.mxu0 0.0
    %367 = vmatprep.mubr.f32.mxu0 0.0
    %368 = vmatmul.mubr.f32.gmra.mxu0 %v220
    %v369 = vpop.f32.mrf.mxu0
    %v370 = vadd.f32 0.0, %v369
    %v371 = vpop.f32.mrf.mxu0
    %372 = vdwg.mxu0
    %373 = vmatprep.subr.mxu0 0.0
    %374 = vmatpush1.msra.mxu0 0.0
    %375 = vmatprep.subr.mxu0 0.0
    %376 = vmatpush1.msra.mxu0 0.0
    %377 = vmatprep.subr.mxu0 0.0
    %378 = vmatpush1.msra.mxu0 0.0
    %379 = vmatprep.subr.mxu0 0.0
    %380 = vmatpush1.msra.mxu0 0.0
    %381 = vmatprep.subr.mxu0 0.0
    %382 = vmatpush1.msra.mxu0 0.0
    %383 = vmatprep.subr.mxu0 0.0
    %384 = vmatpush1.msra.mxu0 0.0
    %385 = vmatprep.subr.mxu0 0.0
    %386 = vmatpush1.msra.mxu0 0.0
    %387 = vmatprep.subr.mxu0 0.0
    %388 = vmatpush1.msra.mxu0 0.0
    %389 = vmatprep.subr.mxu0 0.0
    %390 = vmatpush1.msra.mxu0 0.0
    %391 = vmatprep.subr.mxu0 0.0
    %392 = vmatpush1.msra.mxu0 0.0
    %393 = vmatprep.subr.mxu0 0.0
    %394 = vmatpush1.msra.mxu0 0.0
    %395 = vmatprep.subr.mxu0 0.0
    %396 = vmatpush1.msra.mxu0 0.0
    %397 = vmatprep.subr.mxu0 0.0
    %398 = vmatpush1.msra.mxu0 0.0
    %399 = vmatprep.subr.mxu0 0.0
    %400 = vmatpush1.msra.mxu0 0.0
    %401 = vmatprep.subr.mxu0 0.0
    %402 = vmatpush1.msra.mxu0 %v147
    %403 = vmatprep.subr.mxu0 0.0
    %404 = vmatpush1.msra.mxu0 %v56
    %405 = vmatprep.subr.mxu0 0.0
    %406 = vmatpush2.msra.mxu0 0.0
    %407 = vmatprep.subr.mxu0 0.0
    %408 = vmatpush2.msra.mxu0 0.0
    %409 = vmatprep.subr.mxu0 0.0
    %410 = vmatpush2.msra.mxu0 0.0
    %411 = vmatprep.subr.mxu0 0.0
    %412 = vmatpush2.msra.mxu0 0.0
    %413 = vmatprep.subr.mxu0 0.0
    %414 = vmatpush2.msra.mxu0 0.0
    %415 = vmatprep.subr.mxu0 0.0
    %416 = vmatpush2.msra.mxu0 0.0
    %417 = vmatprep.subr.mxu0 0.0
    %418 = vmatpush2.msra.mxu0 0.0
    %419 = vmatprep.subr.mxu0 0.0
    %420 = vmatpush2.msra.mxu0 0.0
    %421 = vmatprep.subr.mxu0 0.0
    %422 = vmatpush2.msra.mxu0 0.0
    %423 = vmatprep.subr.mxu0 0.0
    %424 = vmatpush2.msra.mxu0 0.0
    %425 = vmatprep.subr.mxu0 0.0
    %426 = vmatpush2.msra.mxu0 0.0
    %427 = vmatprep.subr.mxu0 0.0
    %428 = vmatpush2.msra.mxu0 0.0
    %429 = vmatprep.subr.mxu0 0.0
    %430 = vmatpush2.msra.mxu0 0.0
    %431 = vmatprep.subr.mxu0 0.0
    %432 = vmatpush2.msra.mxu0 0.0
    %433 = vmatprep.subr.mxu0 0.0
    %434 = vmatpush2.msra.mxu0 0.0
    %435 = vmatprep.subr.mxu0 0.0
    %436 = vmatpush2.msra.mxu0 0.0
    %437 = vmatprep.mubr.f32.mxu0 0.0
    %438 = vmatmul.mubr.f32.gmra.mxu0 %v67
    %v439 = vpop.f32.mrf.mxu0
    %v440 = vadd.f32 %v370, %v439
    %v441 = vpop.f32.mrf.mxu0
    %442 = vdwg.mxu0
    %v444 = vsel %vm65, %v39, 0
    %446 = vmatprep.subr.mxu0 0.0
    %447 = vmatpush1.msra.mxu0 0.0
    %448 = vmatprep.subr.mxu0 0.0
    %449 = vmatpush1.msra.mxu0 0.0
    %450 = vmatprep.subr.mxu0 0.0
    %451 = vmatpush1.msra.mxu0 0.0
    %452 = vmatprep.subr.mxu0 0.0
    %453 = vmatpush1.msra.mxu0 0.0
    %454 = vmatprep.subr.mxu0 0.0
    %455 = vmatpush1.msra.mxu0 0.0
    %456 = vmatprep.subr.mxu0 0.0
    %457 = vmatpush1.msra.mxu0 0.0
    %458 = vmatprep.subr.mxu0 0.0
    %459 = vmatpush1.msra.mxu0 0.0
    %460 = vmatprep.subr.mxu0 0.0
    %461 = vmatpush1.msra.mxu0 0.0
    %462 = vmatprep.subr.mxu0 0.0
    %463 = vmatpush1.msra.mxu0 0.0
    %464 = vmatprep.subr.mxu0 0.0
    %465 = vmatpush1.msra.mxu0 0.0
    %466 = vmatprep.subr.mxu0 0.0
    %467 = vmatpush1.msra.mxu0 0.0
    %468 = vmatprep.subr.mxu0 0.0
    %469 = vmatpush1.msra.mxu0 0.0
    %470 = vmatprep.subr.mxu0 0.0
    %471 = vmatpush1.msra.mxu0 0.0
    %472 = vmatprep.subr.mxu0 0.0
    %473 = vmatpush1.msra.mxu0 0.0
    %474 = vmatprep.subr.mxu0 0.0
    %475 = vmatpush1.msra.mxu0 %v223
    %476 = vmatprep.subr.mxu0 0.0
    %477 = vmatpush1.msra.mxu0 %v62
    %478 = vmatprep.subr.mxu0 0.0
    %479 = vmatpush2.msra.mxu0 0.0
    %480 = vmatprep.subr.mxu0 0.0
    %481 = vmatpush2.msra.mxu0 0.0
    %482 = vmatprep.subr.mxu0 0.0
    %483 = vmatpush2.msra.mxu0 0.0
    %484 = vmatprep.subr.mxu0 0.0
    %485 = vmatpush2.msra.mxu0 0.0
    %486 = vmatprep.subr.mxu0 0.0
    %487 = vmatpush2.msra.mxu0 0.0
    %488 = vmatprep.subr.mxu0 0.0
    %489 = vmatpush2.msra.mxu0 0.0
    %490 = vmatprep.subr.mxu0 0.0
    %491 = vmatpush2.msra.mxu0 0.0
    %492 = vmatprep.subr.mxu0 0.0
    %493 = vmatpush2.msra.mxu0 0.0
    %494 = vmatprep.subr.mxu0 0.0
    %495 = vmatpush2.msra.mxu0 0.0
    %496 = vmatprep.subr.mxu0 0.0
    %497 = vmatpush2.msra.mxu0 0.0
    %498 = vmatprep.subr.mxu0 0.0
    %499 = vmatpush2.msra.mxu0 0.0
    %500 = vmatprep.subr.mxu0 0.0
    %501 = vmatpush2.msra.mxu0 0.0
    %502 = vmatprep.subr.mxu0 0.0
    %503 = vmatpush2.msra.mxu0 0.0
    %504 = vmatprep.subr.mxu0 0.0
    %505 = vmatpush2.msra.mxu0 0.0
    %506 = vmatprep.subr.mxu0 0.0
    %507 = vmatpush2.msra.mxu0 0.0
    %508 = vmatprep.subr.mxu0 0.0
    %509 = vmatpush2.msra.mxu0 0.0
    %510 = vmatprep.mubr.f32.mxu0 0.0
    %511 = vmatmul.mubr.f32.gmra.mxu0 %v444
    %v512 = vpop.f32.mrf.mxu0
    %v513 = vadd.f32 0.0, %v512
    %v514 = vpop.f32.mrf.mxu0
    %515 = vdwg.mxu0
    %v516 = vadd.f32 %v440, %v513
    %v517 = vadd.f32 %v516, %v300
    %518 = vmatprep.subr.mxu0 0.0
    %519 = vmatpush1.msra.mxu0 0.0
    %520 = vmatprep.subr.mxu0 0.0
    %521 = vmatpush1.msra.mxu0 0.0
    %522 = vmatprep.subr.mxu0 0.0
    %523 = vmatpush1.msra.mxu0 0.0
    %524 = vmatprep.subr.mxu0 0.0
    %525 = vmatpush1.msra.mxu0 0.0
    %526 = vmatprep.subr.mxu0 0.0
    %527 = vmatpush1.msra.mxu0 0.0
    %528 = vmatprep.subr.mxu0 0.0
    %529 = vmatpush1.msra.mxu0 0.0
    %530 = vmatprep.subr.mxu0 0.0
    %531 = vmatpush1.msra.mxu0 0.0
    %532 = vmatprep.subr.mxu0 0.0
    %533 = vmatpush1.msra.mxu0 0.0
    %534 = vmatprep.subr.mxu0 0.0
    %535 = vmatpush1.msra.mxu0 0.0
    %536 = vmatprep.subr.mxu0 0.0
    %537 = vmatpush1.msra.mxu0 0.0
    %538 = vmatprep.subr.mxu0 0.0
    %539 = vmatpush1.msra.mxu0 0.0
    %540 = vmatprep.subr.mxu0 0.0
    %541 = vmatpush1.msra.mxu0 0.0
    %542 = vmatprep.subr.mxu0 0.0
    %543 = vmatpush1.msra.mxu0 0.0
    %544 = vmatprep.subr.mxu0 0.0
    %545 = vmatpush1.msra.mxu0 0.0
    %546 = vmatprep.subr.mxu0 0.0
    %547 = vmatpush1.msra.mxu0 %v71
    %548 = vmatprep.subr.mxu0 0.0
    %549 = vmatpush1.msra.mxu0 %v59
    %550 = vmatprep.subr.mxu0 0.0
    %551 = vmatpush2.msra.mxu0 0.0
    %552 = vmatprep.subr.mxu0 0.0
    %553 = vmatpush2.msra.mxu0 0.0
    %554 = vmatprep.subr.mxu0 0.0
    %555 = vmatpush2.msra.mxu0 0.0
    %556 = vmatprep.subr.mxu0 0.0
    %557 = vmatpush2.msra.mxu0 0.0
    %558 = vmatprep.subr.mxu0 0.0
    %559 = vmatpush2.msra.mxu0 0.0
    %560 = vmatprep.subr.mxu0 0.0
    %561 = vmatpush2.msra.mxu0 0.0
    %562 = vmatprep.subr.mxu0 0.0
    %563 = vmatpush2.msra.mxu0 0.0
    %564 = vmatprep.subr.mxu0 0.0
    %565 = vmatpush2.msra.mxu0 0.0
    %566 = vmatprep.subr.mxu0 0.0
    %567 = vmatpush2.msra.mxu0 0.0
    %568 = vmatprep.subr.mxu0 0.0
    %569 = vmatpush2.msra.mxu0 0.0
    %570 = vmatprep.subr.mxu0 0.0
    %571 = vmatpush2.msra.mxu0 0.0
    %572 = vmatprep.subr.mxu0 0.0
    %573 = vmatpush2.msra.mxu0 0.0
    %574 = vmatprep.subr.mxu0 0.0
    %575 = vmatpush2.msra.mxu0 0.0
    %576 = vmatprep.subr.mxu0 0.0
    %577 = vmatpush2.msra.mxu0 0.0
    %578 = vmatprep.subr.mxu0 0.0
    %579 = vmatpush2.msra.mxu0 0.0
    %580 = vmatprep.subr.mxu0 0.0
    %581 = vmatpush2.msra.mxu0 0.0
    %582 = vmatprep.mubr.f32.mxu0 0.0
    %583 = vmatmul.mubr.f32.gmra.mxu0 %v444
    %v584 = vpop.f32.mrf.mxu0
    %v585 = vadd.f32 0.0, %v584
    %v586 = vpop.f32.mrf.mxu0
    %587 = vdwg.mxu0
    %588 = vmatprep.subr.mxu0 0.0
    %589 = vmatpush1.msra.mxu0 0.0
    %590 = vmatprep.subr.mxu0 0.0
    %591 = vmatpush1.msra.mxu0 0.0
    %592 = vmatprep.subr.mxu0 0.0
    %593 = vmatpush1.msra.mxu0 0.0
    %594 = vmatprep.subr.mxu0 0.0
    %595 = vmatpush1.msra.mxu0 0.0
    %596 = vmatprep.subr.mxu0 0.0
    %597 = vmatpush1.msra.mxu0 0.0
    %598 = vmatprep.subr.mxu0 0.0
    %599 = vmatpush1.msra.mxu0 0.0
    %600 = vmatprep.subr.mxu0 0.0
    %601 = vmatpush1.msra.mxu0 0.0
    %602 = vmatprep.subr.mxu0 0.0
    %603 = vmatpush1.msra.mxu0 0.0
    %604 = vmatprep.subr.mxu0 0.0
    %605 = vmatpush1.msra.mxu0 0.0
    %606 = vmatprep.subr.mxu0 0.0
    %607 = vmatpush1.msra.mxu0 0.0
    %608 = vmatprep.subr.mxu0 0.0
    %609 = vmatpush1.msra.mxu0 0.0
    %610 = vmatprep.subr.mxu0 0.0
    %611 = vmatpush1.msra.mxu0 0.0
    %612 = vmatprep.subr.mxu0 0.0
    %613 = vmatpush1.msra.mxu0 0.0
    %614 = vmatprep.subr.mxu0 0.0
    %615 = vmatpush1.msra.mxu0 0.0
    %616 = vmatprep.subr.mxu0 0.0
    %617 = vmatpush1.msra.mxu0 %v147
    %618 = vmatprep.subr.mxu0 0.0
    %619 = vmatpush1.msra.mxu0 %v56
    %620 = vmatprep.subr.mxu0 0.0
    %621 = vmatpush2.msra.mxu0 0.0
    %622 = vmatprep.subr.mxu0 0.0
    %623 = vmatpush2.msra.mxu0 0.0
    %624 = vmatprep.subr.mxu0 0.0
    %625 = vmatpush2.msra.mxu0 0.0
    %626 = vmatprep.subr.mxu0 0.0
    %627 = vmatpush2.msra.mxu0 0.0
    %628 = vmatprep.subr.mxu0 0.0
    %629 = vmatpush2.msra.mxu0 0.0
    %630 = vmatprep.subr.mxu0 0.0
    %631 = vmatpush2.msra.mxu0 0.0
    %632 = vmatprep.subr.mxu0 0.0
    %633 = vmatpush2.msra.mxu0 0.0
    %634 = vmatprep.subr.mxu0 0.0
    %635 = vmatpush2.msra.mxu0 0.0
    %636 = vmatprep.subr.mxu0 0.0
    %637 = vmatpush2.msra.mxu0 0.0
    %638 = vmatprep.subr.mxu0 0.0
    %639 = vmatpush2.msra.mxu0 0.0
    %640 = vmatprep.subr.mxu0 0.0
    %641 = vmatpush2.msra.mxu0 0.0
    %642 = vmatprep.subr.mxu0 0.0
    %643 = vmatpush2.msra.mxu0 0.0
    %644 = vmatprep.subr.mxu0 0.0
    %645 = vmatpush2.msra.mxu0 0.0
    %646 = vmatprep.subr.mxu0 0.0
    %647 = vmatpush2.msra.mxu0 0.0
    %648 = vmatprep.subr.mxu0 0.0
    %649 = vmatpush2.msra.mxu0 0.0
    %650 = vmatprep.subr.mxu0 0.0
    %651 = vmatpush2.msra.mxu0 0.0
    %652 = vmatprep.mubr.f32.mxu0 0.0
    %653 = vmatmul.mubr.f32.gmra.mxu0 %v220
    %v654 = vpop.f32.mrf.mxu0
    %v655 = vadd.f32 %v585, %v654
    %v656 = vpop.f32.mrf.mxu0
    %657 = vdwg.mxu0
    %v659 = vsel %vm65, %v41, 0
    %661 = vmatprep.subr.mxu0 0.0
    %662 = vmatpush1.msra.mxu0 0.0
    %663 = vmatprep.subr.mxu0 0.0
    %664 = vmatpush1.msra.mxu0 0.0
    %665 = vmatprep.subr.mxu0 0.0
    %666 = vmatpush1.msra.mxu0 0.0
    %667 = vmatprep.subr.mxu0 0.0
    %668 = vmatpush1.msra.mxu0 0.0
    %669 = vmatprep.subr.mxu0 0.0
    %670 = vmatpush1.msra.mxu0 0.0
    %671 = vmatprep.subr.mxu0 0.0
    %672 = vmatpush1.msra.mxu0 0.0
    %673 = vmatprep.subr.mxu0 0.0
    %674 = vmatpush1.msra.mxu0 0.0
    %675 = vmatprep.subr.mxu0 0.0
    %676 = vmatpush1.msra.mxu0 0.0
    %677 = vmatprep.subr.mxu0 0.0
    %678 = vmatpush1.msra.mxu0 0.0
    %679 = vmatprep.subr.mxu0 0.0
    %680 = vmatpush1.msra.mxu0 0.0
    %681 = vmatprep.subr.mxu0 0.0
    %682 = vmatpush1.msra.mxu0 0.0
    %683 = vmatprep.subr.mxu0 0.0
    %684 = vmatpush1.msra.mxu0 0.0
    %685 = vmatprep.subr.mxu0 0.0
    %686 = vmatpush1.msra.mxu0 0.0
    %687 = vmatprep.subr.mxu0 0.0
    %688 = vmatpush1.msra.mxu0 0.0
    %689 = vmatprep.subr.mxu0 0.0
    %690 = vmatpush1.msra.mxu0 %v223
    %691 = vmatprep.subr.mxu0 0.0
    %692 = vmatpush1.msra.mxu0 %v62
    %693 = vmatprep.subr.mxu0 0.0
    %694 = vmatpush2.msra.mxu0 0.0
    %695 = vmatprep.subr.mxu0 0.0
    %696 = vmatpush2.msra.mxu0 0.0
    %697 = vmatprep.subr.mxu0 0.0
    %698 = vmatpush2.msra.mxu0 0.0
    %699 = vmatprep.subr.mxu0 0.0
    %700 = vmatpush2.msra.mxu0 0.0
    %701 = vmatprep.subr.mxu0 0.0
    %702 = vmatpush2.msra.mxu0 0.0
    %703 = vmatprep.subr.mxu0 0.0
    %704 = vmatpush2.msra.mxu0 0.0
    %705 = vmatprep.subr.mxu0 0.0
    %706 = vmatpush2.msra.mxu0 0.0
    %707 = vmatprep.subr.mxu0 0.0
    %708 = vmatpush2.msra.mxu0 0.0
    %709 = vmatprep.subr.mxu0 0.0
    %710 = vmatpush2.msra.mxu0 0.0
    %711 = vmatprep.subr.mxu0 0.0
    %712 = vmatpush2.msra.mxu0 0.0
    %713 = vmatprep.subr.mxu0 0.0
    %714 = vmatpush2.msra.mxu0 0.0
    %715 = vmatprep.subr.mxu0 0.0
    %716 = vmatpush2.msra.mxu0 0.0
    %717 = vmatprep.subr.mxu0 0.0
    %718 = vmatpush2.msra.mxu0 0.0
    %719 = vmatprep.subr.mxu0 0.0
    %720 = vmatpush2.msra.mxu0 0.0
    %721 = vmatprep.subr.mxu0 0.0
    %722 = vmatpush2.msra.mxu0 0.0
    %723 = vmatprep.subr.mxu0 0.0
    %724 = vmatpush2.msra.mxu0 0.0
    %725 = vmatprep.mubr.f32.mxu0 0.0
    %726 = vmatmul.mubr.f32.gmra.mxu0 %v659
    %v727 = vpop.f32.mrf.mxu0
    %v728 = vadd.f32 0.0, %v727
    %v729 = vpop.f32.mrf.mxu0
    %730 = vdwg.mxu0
    %v731 = vadd.f32 %v655, %v728
    %v732 = vadd.f32 %v731, %v300
    %733 = vmatprep.subr.mxu0 0.0
    %734 = vmatpush1.msra.mxu0 0.0
    %735 = vmatprep.subr.mxu0 0.0
    %736 = vmatpush1.msra.mxu0 0.0
    %737 = vmatprep.subr.mxu0 0.0
    %738 = vmatpush1.msra.mxu0 0.0
    %739 = vmatprep.subr.mxu0 0.0
    %740 = vmatpush1.msra.mxu0 0.0
    %741 = vmatprep.subr.mxu0 0.0
    %742 = vmatpush1.msra.mxu0 0.0
    %743 = vmatprep.subr.mxu0 0.0
    %744 = vmatpush1.msra.mxu0 0.0
    %745 = vmatprep.subr.mxu0 0.0
    %746 = vmatpush1.msra.mxu0 0.0
    %747 = vmatprep.subr.mxu0 0.0
    %748 = vmatpush1.msra.mxu0 0.0
    %749 = vmatprep.subr.mxu0 0.0
    %750 = vmatpush1.msra.mxu0 0.0
    %751 = vmatprep.subr.mxu0 0.0
    %752 = vmatpush1.msra.mxu0 0.0
    %753 = vmatprep.subr.mxu0 0.0
    %754 = vmatpush1.msra.mxu0 0.0
    %755 = vmatprep.subr.mxu0 0.0
    %756 = vmatpush1.msra.mxu0 0.0
    %757 = vmatprep.subr.mxu0 0.0
    %758 = vmatpush1.msra.mxu0 0.0
    %759 = vmatprep.subr.mxu0 0.0
    %760 = vmatpush1.msra.mxu0 0.0
    %761 = vmatprep.subr.mxu0 0.0
    %762 = vmatpush1.msra.mxu0 %v71
    %763 = vmatprep.subr.mxu0 0.0
    %764 = vmatpush1.msra.mxu0 %v59
    %765 = vmatprep.subr.mxu0 0.0
    %766 = vmatpush2.msra.mxu0 0.0
    %767 = vmatprep.subr.mxu0 0.0
    %768 = vmatpush2.msra.mxu0 0.0
    %769 = vmatprep.subr.mxu0 0.0
    %770 = vmatpush2.msra.mxu0 0.0
    %771 = vmatprep.subr.mxu0 0.0
    %772 = vmatpush2.msra.mxu0 0.0
    %773 = vmatprep.subr.mxu0 0.0
    %774 = vmatpush2.msra.mxu0 0.0
    %775 = vmatprep.subr.mxu0 0.0
    %776 = vmatpush2.msra.mxu0 0.0
    %777 = vmatprep.subr.mxu0 0.0
    %778 = vmatpush2.msra.mxu0 0.0
    %779 = vmatprep.subr.mxu0 0.0
    %780 = vmatpush2.msra.mxu0 0.0
    %781 = vmatprep.subr.mxu0 0.0
    %782 = vmatpush2.msra.mxu0 0.0
    %783 = vmatprep.subr.mxu0 0.0
    %784 = vmatpush2.msra.mxu0 0.0
    %785 = vmatprep.subr.mxu0 0.0
    %786 = vmatpush2.msra.mxu0 0.0
    %787 = vmatprep.subr.mxu0 0.0
    %788 = vmatpush2.msra.mxu0 0.0
    %789 = vmatprep.subr.mxu0 0.0
    %790 = vmatpush2.msra.mxu0 0.0
    %791 = vmatprep.subr.mxu0 0.0
    %792 = vmatpush2.msra.mxu0 0.0
    %793 = vmatprep.subr.mxu0 0.0
    %794 = vmatpush2.msra.mxu0 0.0
    %795 = vmatprep.subr.mxu0 0.0
    %796 = vmatpush2.msra.mxu0 0.0
    %797 = vmatprep.mubr.f32.mxu0 0.0
    %798 = vmatmul.mubr.f32.gmra.mxu0 %v659
    %v799 = vpop.f32.mrf.mxu0
    %v800 = vadd.f32 0.0, %v799
    %v801 = vpop.f32.mrf.mxu0
    %802 = vdwg.mxu0
    %803 = vmatprep.subr.mxu0 0.0
    %804 = vmatpush1.msra.mxu0 0.0
    %805 = vmatprep.subr.mxu0 0.0
    %806 = vmatpush1.msra.mxu0 0.0
    %807 = vmatprep.subr.mxu0 0.0
    %808 = vmatpush1.msra.mxu0 0.0
    %809 = vmatprep.subr.mxu0 0.0
    %810 = vmatpush1.msra.mxu0 0.0
    %811 = vmatprep.subr.mxu0 0.0
    %812 = vmatpush1.msra.mxu0 0.0
    %813 = vmatprep.subr.mxu0 0.0
    %814 = vmatpush1.msra.mxu0 0.0
    %815 = vmatprep.subr.mxu0 0.0
    %816 = vmatpush1.msra.mxu0 0.0
    %817 = vmatprep.subr.mxu0 0.0
    %818 = vmatpush1.msra.mxu0 0.0
    %819 = vmatprep.subr.mxu0 0.0
    %820 = vmatpush1.msra.mxu0 0.0
    %821 = vmatprep.subr.mxu0 0.0
    %822 = vmatpush1.msra.mxu0 0.0
    %823 = vmatprep.subr.mxu0 0.0
    %824 = vmatpush1.msra.mxu0 0.0
    %825 = vmatprep.subr.mxu0 0.0
    %826 = vmatpush1.msra.mxu0 0.0
    %827 = vmatprep.subr.mxu0 0.0
    %828 = vmatpush1.msra.mxu0 0.0
    %829 = vmatprep.subr.mxu0 0.0
    %830 = vmatpush1.msra.mxu0 0.0
    %831 = vmatprep.subr.mxu0 0.0
    %832 = vmatpush1.msra.mxu0 %v147
    %833 = vmatprep.subr.mxu0 0.0
    %834 = vmatpush1.msra.mxu0 %v56
    %835 = vmatprep.subr.mxu0 0.0
    %836 = vmatpush2.msra.mxu0 0.0
    %837 = vmatprep.subr.mxu0 0.0
    %838 = vmatpush2.msra.mxu0 0.0
    %839 = vmatprep.subr.mxu0 0.0
    %840 = vmatpush2.msra.mxu0 0.0
    %841 = vmatprep.subr.mxu0 0.0
    %842 = vmatpush2.msra.mxu0 0.0
    %843 = vmatprep.subr.mxu0 0.0
    %844 = vmatpush2.msra.mxu0 0.0
    %845 = vmatprep.subr.mxu0 0.0
    %846 = vmatpush2.msra.mxu0 0.0
    %847 = vmatprep.subr.mxu0 0.0
    %848 = vmatpush2.msra.mxu0 0.0
    %849 = vmatprep.subr.mxu0 0.0
    %850 = vmatpush2.msra.mxu0 0.0
    %851 = vmatprep.subr.mxu0 0.0
    %852 = vmatpush2.msra.mxu0 0.0
    %853 = vmatprep.subr.mxu0 0.0
    %854 = vmatpush2.msra.mxu0 0.0
    %855 = vmatprep.subr.mxu0 0.0
    %856 = vmatpush2.msra.mxu0 0.0
    %857 = vmatprep.subr.mxu0 0.0
    %858 = vmatpush2.msra.mxu0 0.0
    %859 = vmatprep.subr.mxu0 0.0
    %860 = vmatpush2.msra.mxu0 0.0
    %861 = vmatprep.subr.mxu0 0.0
    %862 = vmatpush2.msra.mxu0 0.0
    %863 = vmatprep.subr.mxu0 0.0
    %864 = vmatpush2.msra.mxu0 0.0
    %865 = vmatprep.subr.mxu0 0.0
    %866 = vmatpush2.msra.mxu0 0.0
    %867 = vmatprep.mubr.f32.mxu0 0.0
    %868 = vmatmul.mubr.f32.gmra.mxu0 %v444
    %v869 = vpop.f32.mrf.mxu0
    %v870 = vadd.f32 %v800, %v869
    %v871 = vpop.f32.mrf.mxu0
    %872 = vdwg.mxu0
    %v874 = vsel %vm65, %v43, 0
    %876 = vmatprep.subr.mxu0 0.0
    %877 = vmatpush1.msra.mxu0 0.0
    %878 = vmatprep.subr.mxu0 0.0
    %879 = vmatpush1.msra.mxu0 0.0
    %880 = vmatprep.subr.mxu0 0.0
    %881 = vmatpush1.msra.mxu0 0.0
    %882 = vmatprep.subr.mxu0 0.0
    %883 = vmatpush1.msra.mxu0 0.0
    %884 = vmatprep.subr.mxu0 0.0
    %885 = vmatpush1.msra.mxu0 0.0
    %886 = vmatprep.subr.mxu0 0.0
    %887 = vmatpush1.msra.mxu0 0.0
    %888 = vmatprep.subr.mxu0 0.0
    %889 = vmatpush1.msra.mxu0 0.0
    %890 = vmatprep.subr.mxu0 0.0
    %891 = vmatpush1.msra.mxu0 0.0
    %892 = vmatprep.subr.mxu0 0.0
    %893 = vmatpush1.msra.mxu0 0.0
    %894 = vmatprep.subr.mxu0 0.0
    %895 = vmatpush1.msra.mxu0 0.0
    %896 = vmatprep.subr.mxu0 0.0
    %897 = vmatpush1.msra.mxu0 0.0
    %898 = vmatprep.subr.mxu0 0.0
    %899 = vmatpush1.msra.mxu0 0.0
    %900 = vmatprep.subr.mxu0 0.0
    %901 = vmatpush1.msra.mxu0 0.0
    %902 = vmatprep.subr.mxu0 0.0
    %903 = vmatpush1.msra.mxu0 0.0
    %904 = vmatprep.subr.mxu0 0.0
    %905 = vmatpush1.msra.mxu0 %v223
    %906 = vmatprep.subr.mxu0 0.0
    %907 = vmatpush1.msra.mxu0 %v62
    %908 = vmatprep.subr.mxu0 0.0
    %909 = vmatpush2.msra.mxu0 0.0
    %910 = vmatprep.subr.mxu0 0.0
    %911 = vmatpush2.msra.mxu0 0.0
    %912 = vmatprep.subr.mxu0 0.0
    %913 = vmatpush2.msra.mxu0 0.0
    %914 = vmatprep.subr.mxu0 0.0
    %915 = vmatpush2.msra.mxu0 0.0
    %916 = vmatprep.subr.mxu0 0.0
    %917 = vmatpush2.msra.mxu0 0.0
    %918 = vmatprep.subr.mxu0 0.0
    %919 = vmatpush2.msra.mxu0 0.0
    %920 = vmatprep.subr.mxu0 0.0
    %921 = vmatpush2.msra.mxu0 0.0
    %922 = vmatprep.subr.mxu0 0.0
    %923 = vmatpush2.msra.mxu0 0.0
    %924 = vmatprep.subr.mxu0 0.0
    %925 = vmatpush2.msra.mxu0 0.0
    %926 = vmatprep.subr.mxu0 0.0
    %927 = vmatpush2.msra.mxu0 0.0
    %928 = vmatprep.subr.mxu0 0.0
    %929 = vmatpush2.msra.mxu0 0.0
    %930 = vmatprep.subr.mxu0 0.0
    %931 = vmatpush2.msra.mxu0 0.0
    %932 = vmatprep.subr.mxu0 0.0
    %933 = vmatpush2.msra.mxu0 0.0
    %934 = vmatprep.subr.mxu0 0.0
    %935 = vmatpush2.msra.mxu0 0.0
    %936 = vmatprep.subr.mxu0 0.0
    %937 = vmatpush2.msra.mxu0 0.0
    %938 = vmatprep.subr.mxu0 0.0
    %939 = vmatpush2.msra.mxu0 0.0
    %940 = vmatprep.mubr.f32.mxu0 0.0
    %941 = vmatmul.mubr.f32.gmra.mxu0 %v874
    %v942 = vpop.f32.mrf.mxu0
    %v943 = vadd.f32 0.0, %v942
    %v944 = vpop.f32.mrf.mxu0
    %945 = vdwg.mxu0
    %v946 = vadd.f32 %v870, %v943
    %v947 = vadd.f32 %v946, %v300
    %948 = vmatprep.subr.mxu0 0.0
    %949 = vmatpush1.msra.mxu0 0.0
    %950 = vmatprep.subr.mxu0 0.0
    %951 = vmatpush1.msra.mxu0 0.0
    %952 = vmatprep.subr.mxu0 0.0
    %953 = vmatpush1.msra.mxu0 0.0
    %954 = vmatprep.subr.mxu0 0.0
    %955 = vmatpush1.msra.mxu0 0.0
    %956 = vmatprep.subr.mxu0 0.0
    %957 = vmatpush1.msra.mxu0 0.0
    %958 = vmatprep.subr.mxu0 0.0
    %959 = vmatpush1.msra.mxu0 0.0
    %960 = vmatprep.subr.mxu0 0.0
    %961 = vmatpush1.msra.mxu0 0.0
    %962 = vmatprep.subr.mxu0 0.0
    %963 = vmatpush1.msra.mxu0 0.0
    %964 = vmatprep.subr.mxu0 0.0
    %965 = vmatpush1.msra.mxu0 0.0
    %966 = vmatprep.subr.mxu0 0.0
    %967 = vmatpush1.msra.mxu0 0.0
    %968 = vmatprep.subr.mxu0 0.0
    %969 = vmatpush1.msra.mxu0 0.0
    %970 = vmatprep.subr.mxu0 0.0
    %971 = vmatpush1.msra.mxu0 0.0
    %972 = vmatprep.subr.mxu0 0.0
    %973 = vmatpush1.msra.mxu0 0.0
    %974 = vmatprep.subr.mxu0 0.0
    %975 = vmatpush1.msra.mxu0 0.0
    %976 = vmatprep.subr.mxu0 0.0
    %977 = vmatpush1.msra.mxu0 %v71
    %978 = vmatprep.subr.mxu0 0.0
    %979 = vmatpush1.msra.mxu0 %v59
    %980 = vmatprep.subr.mxu0 0.0
    %981 = vmatpush2.msra.mxu0 0.0
    %982 = vmatprep.subr.mxu0 0.0
    %983 = vmatpush2.msra.mxu0 0.0
    %984 = vmatprep.subr.mxu0 0.0
    %985 = vmatpush2.msra.mxu0 0.0
    %986 = vmatprep.subr.mxu0 0.0
    %987 = vmatpush2.msra.mxu0 0.0
    %988 = vmatprep.subr.mxu0 0.0
    %989 = vmatpush2.msra.mxu0 0.0
    %990 = vmatprep.subr.mxu0 0.0
    %991 = vmatpush2.msra.mxu0 0.0
    %992 = vmatprep.subr.mxu0 0.0
    %993 = vmatpush2.msra.mxu0 0.0
    %994 = vmatprep.subr.mxu0 0.0
    %995 = vmatpush2.msra.mxu0 0.0
    %996 = vmatprep.subr.mxu0 0.0
    %997 = vmatpush2.msra.mxu0 0.0
    %998 = vmatprep.subr.mxu0 0.0
    %999 = vmatpush2.msra.mxu0 0.0
    %1000 = vmatprep.subr.mxu0 0.0
    %1001 = vmatpush2.msra.mxu0 0.0
    %1002 = vmatprep.subr.mxu0 0.0
    %1003 = vmatpush2.msra.mxu0 0.0
    %1004 = vmatprep.subr.mxu0 0.0
    %1005 = vmatpush2.msra.mxu0 0.0
    %1006 = vmatprep.subr.mxu0 0.0
    %1007 = vmatpush2.msra.mxu0 0.0
    %1008 = vmatprep.subr.mxu0 0.0
    %1009 = vmatpush2.msra.mxu0 0.0
    %1010 = vmatprep.subr.mxu0 0.0
    %1011 = vmatpush2.msra.mxu0 0.0
    %1012 = vmatprep.mubr.f32.mxu0 0.0
    %1013 = vmatmul.mubr.f32.gmra.mxu0 %v874
    %v1014 = vpop.f32.mrf.mxu0
    %v1015 = vadd.f32 0.0, %v1014
    %v1016 = vpop.f32.mrf.mxu0
    %1017 = vdwg.mxu0
    %1018 = vmatprep.subr.mxu0 0.0
    %1019 = vmatpush1.msra.mxu0 0.0
    %1020 = vmatprep.subr.mxu0 0.0
    %1021 = vmatpush1.msra.mxu0 0.0
    %1022 = vmatprep.subr.mxu0 0.0
    %1023 = vmatpush1.msra.mxu0 0.0
    %1024 = vmatprep.subr.mxu0 0.0
    %1025 = vmatpush1.msra.mxu0 0.0
    %1026 = vmatprep.subr.mxu0 0.0
    %1027 = vmatpush1.msra.mxu0 0.0
    %1028 = vmatprep.subr.mxu0 0.0
    %1029 = vmatpush1.msra.mxu0 0.0
    %1030 = vmatprep.subr.mxu0 0.0
    %1031 = vmatpush1.msra.mxu0 0.0
    %1032 = vmatprep.subr.mxu0 0.0
    %1033 = vmatpush1.msra.mxu0 0.0
    %1034 = vmatprep.subr.mxu0 0.0
    %1035 = vmatpush1.msra.mxu0 0.0
    %1036 = vmatprep.subr.mxu0 0.0
    %1037 = vmatpush1.msra.mxu0 0.0
    %1038 = vmatprep.subr.mxu0 0.0
    %1039 = vmatpush1.msra.mxu0 0.0
    %1040 = vmatprep.subr.mxu0 0.0
    %1041 = vmatpush1.msra.mxu0 0.0
    %1042 = vmatprep.subr.mxu0 0.0
    %1043 = vmatpush1.msra.mxu0 0.0
    %1044 = vmatprep.subr.mxu0 0.0
    %1045 = vmatpush1.msra.mxu0 0.0
    %1046 = vmatprep.subr.mxu0 0.0
    %1047 = vmatpush1.msra.mxu0 %v147
    %1048 = vmatprep.subr.mxu0 0.0
    %1049 = vmatpush1.msra.mxu0 %v56
    %1050 = vmatprep.subr.mxu0 0.0
    %1051 = vmatpush2.msra.mxu0 0.0
    %1052 = vmatprep.subr.mxu0 0.0
    %1053 = vmatpush2.msra.mxu0 0.0
    %1054 = vmatprep.subr.mxu0 0.0
    %1055 = vmatpush2.msra.mxu0 0.0
    %1056 = vmatprep.subr.mxu0 0.0
    %1057 = vmatpush2.msra.mxu0 0.0
    %1058 = vmatprep.subr.mxu0 0.0
    %1059 = vmatpush2.msra.mxu0 0.0
    %1060 = vmatprep.subr.mxu0 0.0
    %1061 = vmatpush2.msra.mxu0 0.0
    %1062 = vmatprep.subr.mxu0 0.0
    %1063 = vmatpush2.msra.mxu0 0.0
    %1064 = vmatprep.subr.mxu0 0.0
    %1065 = vmatpush2.msra.mxu0 0.0
    %1066 = vmatprep.subr.mxu0 0.0
    %1067 = vmatpush2.msra.mxu0 0.0
    %1068 = vmatprep.subr.mxu0 0.0
    %1069 = vmatpush2.msra.mxu0 0.0
    %1070 = vmatprep.subr.mxu0 0.0
    %1071 = vmatpush2.msra.mxu0 0.0
    %1072 = vmatprep.subr.mxu0 0.0
    %1073 = vmatpush2.msra.mxu0 0.0
    %1074 = vmatprep.subr.mxu0 0.0
    %1075 = vmatpush2.msra.mxu0 0.0
    %1076 = vmatprep.subr.mxu0 0.0
    %1077 = vmatpush2.msra.mxu0 0.0
    %1078 = vmatprep.subr.mxu0 0.0
    %1079 = vmatpush2.msra.mxu0 0.0
    %1080 = vmatprep.subr.mxu0 0.0
    %1081 = vmatpush2.msra.mxu0 0.0
    %1082 = vmatprep.mubr.f32.mxu0 0.0
    %1083 = vmatmul.mubr.f32.gmra.mxu0 %v659
    %v1084 = vpop.f32.mrf.mxu0
    %v1085 = vadd.f32 %v1015, %v1084
    %v1086 = vpop.f32.mrf.mxu0
    %1087 = vdwg.mxu0
    %v1089 = vsel %vm65, %v45, 0
    %1091 = vmatprep.subr.mxu0 0.0
    %1092 = vmatpush1.msra.mxu0 0.0
    %1093 = vmatprep.subr.mxu0 0.0
    %1094 = vmatpush1.msra.mxu0 0.0
    %1095 = vmatprep.subr.mxu0 0.0
    %1096 = vmatpush1.msra.mxu0 0.0
    %1097 = vmatprep.subr.mxu0 0.0
    %1098 = vmatpush1.msra.mxu0 0.0
    %1099 = vmatprep.subr.mxu0 0.0
    %1100 = vmatpush1.msra.mxu0 0.0
    %1101 = vmatprep.subr.mxu0 0.0
    %1102 = vmatpush1.msra.mxu0 0.0
    %1103 = vmatprep.subr.mxu0 0.0
    %1104 = vmatpush1.msra.mxu0 0.0
    %1105 = vmatprep.subr.mxu0 0.0
    %1106 = vmatpush1.msra.mxu0 0.0
    %1107 = vmatprep.subr.mxu0 0.0
    %1108 = vmatpush1.msra.mxu0 0.0
    %1109 = vmatprep.subr.mxu0 0.0
    %1110 = vmatpush1.msra.mxu0 0.0
    %1111 = vmatprep.subr.mxu0 0.0
    %1112 = vmatpush1.msra.mxu0 0.0
    %1113 = vmatprep.subr.mxu0 0.0
    %1114 = vmatpush1.msra.mxu0 0.0
    %1115 = vmatprep.subr.mxu0 0.0
    %1116 = vmatpush1.msra.mxu0 0.0
    %1117 = vmatprep.subr.mxu0 0.0
    %1118 = vmatpush1.msra.mxu0 0.0
    %1119 = vmatprep.subr.mxu0 0.0
    %1120 = vmatpush1.msra.mxu0 %v223
    %1121 = vmatprep.subr.mxu0 0.0
    %1122 = vmatpush1.msra.mxu0 %v62
    %1123 = vmatprep.subr.mxu0 0.0
    %1124 = vmatpush2.msra.mxu0 0.0
    %1125 = vmatprep.subr.mxu0 0.0
    %1126 = vmatpush2.msra.mxu0 0.0
    %1127 = vmatprep.subr.mxu0 0.0
    %1128 = vmatpush2.msra.mxu0 0.0
    %1129 = vmatprep.subr.mxu0 0.0
    %1130 = vmatpush2.msra.mxu0 0.0
    %1131 = vmatprep.subr.mxu0 0.0
    %1132 = vmatpush2.msra.mxu0 0.0
    %1133 = vmatprep.subr.mxu0 0.0
    %1134 = vmatpush2.msra.mxu0 0.0
    %1135 = vmatprep.subr.mxu0 0.0
    %1136 = vmatpush2.msra.mxu0 0.0
    %1137 = vmatprep.subr.mxu0 0.0
    %1138 = vmatpush2.msra.mxu0 0.0
    %1139 = vmatprep.subr.mxu0 0.0
    %1140 = vmatpush2.msra.mxu0 0.0
    %1141 = vmatprep.subr.mxu0 0.0
    %1142 = vmatpush2.msra.mxu0 0.0
    %1143 = vmatprep.subr.mxu0 0.0
    %1144 = vmatpush2.msra.mxu0 0.0
    %1145 = vmatprep.subr.mxu0 0.0
    %1146 = vmatpush2.msra.mxu0 0.0
    %1147 = vmatprep.subr.mxu0 0.0
    %1148 = vmatpush2.msra.mxu0 0.0
    %1149 = vmatprep.subr.mxu0 0.0
    %1150 = vmatpush2.msra.mxu0 0.0
    %1151 = vmatprep.subr.mxu0 0.0
    %1152 = vmatpush2.msra.mxu0 0.0
    %1153 = vmatprep.subr.mxu0 0.0
    %1154 = vmatpush2.msra.mxu0 0.0
    %1155 = vmatprep.mubr.f32.mxu0 0.0
    %1156 = vmatmul.mubr.f32.gmra.mxu0 %v1089
    %v1157 = vpop.f32.mrf.mxu0
    %v1158 = vadd.f32 0.0, %v1157
    %v1159 = vpop.f32.mrf.mxu0
    %1160 = vdwg.mxu0
    %v1161 = vadd.f32 %v1085, %v1158
    %v1162 = vadd.f32 %v1161, %v300
    %1163 = vmatprep.subr.mxu0 0.0
    %1164 = vmatpush1.msra.mxu0 0.0
    %1165 = vmatprep.subr.mxu0 0.0
    %1166 = vmatpush1.msra.mxu0 0.0
    %1167 = vmatprep.subr.mxu0 0.0
    %1168 = vmatpush1.msra.mxu0 0.0
    %1169 = vmatprep.subr.mxu0 0.0
    %1170 = vmatpush1.msra.mxu0 0.0
    %1171 = vmatprep.subr.mxu0 0.0
    %1172 = vmatpush1.msra.mxu0 0.0
    %1173 = vmatprep.subr.mxu0 0.0
    %1174 = vmatpush1.msra.mxu0 0.0
    %1175 = vmatprep.subr.mxu0 0.0
    %1176 = vmatpush1.msra.mxu0 0.0
    %1177 = vmatprep.subr.mxu0 0.0
    %1178 = vmatpush1.msra.mxu0 0.0
    %1179 = vmatprep.subr.mxu0 0.0
    %1180 = vmatpush1.msra.mxu0 0.0
    %1181 = vmatprep.subr.mxu0 0.0
    %1182 = vmatpush1.msra.mxu0 0.0
    %1183 = vmatprep.subr.mxu0 0.0
    %1184 = vmatpush1.msra.mxu0 0.0
    %1185 = vmatprep.subr.mxu0 0.0
    %1186 = vmatpush1.msra.mxu0 0.0
    %1187 = vmatprep.subr.mxu0 0.0
    %1188 = vmatpush1.msra.mxu0 0.0
    %1189 = vmatprep.subr.mxu0 0.0
    %1190 = vmatpush1.msra.mxu0 0.0
    %1191 = vmatprep.subr.mxu0 0.0
    %1192 = vmatpush1.msra.mxu0 %v71
    %1193 = vmatprep.subr.mxu0 0.0
    %1194 = vmatpush1.msra.mxu0 %v59
    %1195 = vmatprep.subr.mxu0 0.0
    %1196 = vmatpush2.msra.mxu0 0.0
    %1197 = vmatprep.subr.mxu0 0.0
    %1198 = vmatpush2.msra.mxu0 0.0
    %1199 = vmatprep.subr.mxu0 0.0
    %1200 = vmatpush2.msra.mxu0 0.0
    %1201 = vmatprep.subr.mxu0 0.0
    %1202 = vmatpush2.msra.mxu0 0.0
    %1203 = vmatprep.subr.mxu0 0.0
    %1204 = vmatpush2.msra.mxu0 0.0
    %1205 = vmatprep.subr.mxu0 0.0
    %1206 = vmatpush2.msra.mxu0 0.0
    %1207 = vmatprep.subr.mxu0 0.0
    %1208 = vmatpush2.msra.mxu0 0.0
    %1209 = vmatprep.subr.mxu0 0.0
    %1210 = vmatpush2.msra.mxu0 0.0
    %1211 = vmatprep.subr.mxu0 0.0
    %1212 = vmatpush2.msra.mxu0 0.0
    %1213 = vmatprep.subr.mxu0 0.0
    %1214 = vmatpush2.msra.mxu0 0.0
    %1215 = vmatprep.subr.mxu0 0.0
    %1216 = vmatpush2.msra.mxu0 0.0
    %1217 = vmatprep.subr.mxu0 0.0
    %1218 = vmatpush2.msra.mxu0 0.0
    %1219 = vmatprep.subr.mxu0 0.0
    %1220 = vmatpush2.msra.mxu0 0.0
    %1221 = vmatprep.subr.mxu0 0.0
    %1222 = vmatpush2.msra.mxu0 0.0
    %1223 = vmatprep.subr.mxu0 0.0
    %1224 = vmatpush2.msra.mxu0 0.0
    %1225 = vmatprep.subr.mxu0 0.0
    %1226 = vmatpush2.msra.mxu0 0.0
    %1227 = vmatprep.mubr.f32.mxu0 0.0
    %1228 = vmatmul.mubr.f32.gmra.mxu0 %v1089
    %v1229 = vpop.f32.mrf.mxu0
    %v1230 = vadd.f32 0.0, %v1229
    %v1231 = vpop.f32.mrf.mxu0
    %1232 = vdwg.mxu0
    %1233 = vmatprep.subr.mxu0 0.0
    %1234 = vmatpush1.msra.mxu0 0.0
    %1235 = vmatprep.subr.mxu0 0.0
    %1236 = vmatpush1.msra.mxu0 0.0
    %1237 = vmatprep.subr.mxu0 0.0
    %1238 = vmatpush1.msra.mxu0 0.0
    %1239 = vmatprep.subr.mxu0 0.0
    %1240 = vmatpush1.msra.mxu0 0.0
    %1241 = vmatprep.subr.mxu0 0.0
    %1242 = vmatpush1.msra.mxu0 0.0
    %1243 = vmatprep.subr.mxu0 0.0
    %1244 = vmatpush1.msra.mxu0 0.0
    %1245 = vmatprep.subr.mxu0 0.0
    %1246 = vmatpush1.msra.mxu0 0.0
    %1247 = vmatprep.subr.mxu0 0.0
    %1248 = vmatpush1.msra.mxu0 0.0
    %1249 = vmatprep.subr.mxu0 0.0
    %1250 = vmatpush1.msra.mxu0 0.0
    %1251 = vmatprep.subr.mxu0 0.0
    %1252 = vmatpush1.msra.mxu0 0.0
    %1253 = vmatprep.subr.mxu0 0.0
    %1254 = vmatpush1.msra.mxu0 0.0
    %1255 = vmatprep.subr.mxu0 0.0
    %1256 = vmatpush1.msra.mxu0 0.0
    %1257 = vmatprep.subr.mxu0 0.0
    %1258 = vmatpush1.msra.mxu0 0.0
    %1259 = vmatprep.subr.mxu0 0.0
    %1260 = vmatpush1.msra.mxu0 0.0
    %1261 = vmatprep.subr.mxu0 0.0
    %1262 = vmatpush1.msra.mxu0 %v147
    %1263 = vmatprep.subr.mxu0 0.0
    %1264 = vmatpush1.msra.mxu0 %v56
    %1265 = vmatprep.subr.mxu0 0.0
    %1266 = vmatpush2.msra.mxu0 0.0
    %1267 = vmatprep.subr.mxu0 0.0
    %1268 = vmatpush2.msra.mxu0 0.0
    %1269 = vmatprep.subr.mxu0 0.0
    %1270 = vmatpush2.msra.mxu0 0.0
    %1271 = vmatprep.subr.mxu0 0.0
    %1272 = vmatpush2.msra.mxu0 0.0
    %1273 = vmatprep.subr.mxu0 0.0
    %1274 = vmatpush2.msra.mxu0 0.0
    %1275 = vmatprep.subr.mxu0 0.0
    %1276 = vmatpush2.msra.mxu0 0.0
    %1277 = vmatprep.subr.mxu0 0.0
    %1278 = vmatpush2.msra.mxu0 0.0
    %1279 = vmatprep.subr.mxu0 0.0
    %1280 = vmatpush2.msra.mxu0 0.0
    %1281 = vmatprep.subr.mxu0 0.0
    %1282 = vmatpush2.msra.mxu0 0.0
    %1283 = vmatprep.subr.mxu0 0.0
    %1284 = vmatpush2.msra.mxu0 0.0
    %1285 = vmatprep.subr.mxu0 0.0
    %1286 = vmatpush2.msra.mxu0 0.0
    %1287 = vmatprep.subr.mxu0 0.0
    %1288 = vmatpush2.msra.mxu0 0.0
    %1289 = vmatprep.subr.mxu0 0.0
    %1290 = vmatpush2.msra.mxu0 0.0
    %1291 = vmatprep.subr.mxu0 0.0
    %1292 = vmatpush2.msra.mxu0 0.0
    %1293 = vmatprep.subr.mxu0 0.0
    %1294 = vmatpush2.msra.mxu0 0.0
    %1295 = vmatprep.subr.mxu0 0.0
    %1296 = vmatpush2.msra.mxu0 0.0
    %1297 = vmatprep.mubr.f32.mxu0 0.0
    %1298 = vmatmul.mubr.f32.gmra.mxu0 %v874
    %v1299 = vpop.f32.mrf.mxu0
    %v1300 = vadd.f32 %v1230, %v1299
    %v1301 = vpop.f32.mrf.mxu0
    %1302 = vdwg.mxu0
    %v1304 = vsel %vm65, %v47, 0
    %1306 = vmatprep.subr.mxu0 0.0
    %1307 = vmatpush1.msra.mxu0 0.0
    %1308 = vmatprep.subr.mxu0 0.0
    %1309 = vmatpush1.msra.mxu0 0.0
    %1310 = vmatprep.subr.mxu0 0.0
    %1311 = vmatpush1.msra.mxu0 0.0
    %1312 = vmatprep.subr.mxu0 0.0
    %1313 = vmatpush1.msra.mxu0 0.0
    %1314 = vmatprep.subr.mxu0 0.0
    %1315 = vmatpush1.msra.mxu0 0.0
    %1316 = vmatprep.subr.mxu0 0.0
    %1317 = vmatpush1.msra.mxu0 0.0
    %1318 = vmatprep.subr.mxu0 0.0
    %1319 = vmatpush1.msra.mxu0 0.0
    %1320 = vmatprep.subr.mxu0 0.0
    %1321 = vmatpush1.msra.mxu0 0.0
    %1322 = vmatprep.subr.mxu0 0.0
    %1323 = vmatpush1.msra.mxu0 0.0
    %1324 = vmatprep.subr.mxu0 0.0
    %1325 = vmatpush1.msra.mxu0 0.0
    %1326 = vmatprep.subr.mxu0 0.0
    %1327 = vmatpush1.msra.mxu0 0.0
    %1328 = vmatprep.subr.mxu0 0.0
    %1329 = vmatpush1.msra.mxu0 0.0
    %1330 = vmatprep.subr.mxu0 0.0
    %1331 = vmatpush1.msra.mxu0 0.0
    %1332 = vmatprep.subr.mxu0 0.0
    %1333 = vmatpush1.msra.mxu0 0.0
    %1334 = vmatprep.subr.mxu0 0.0
    %1335 = vmatpush1.msra.mxu0 %v223
    %1336 = vmatprep.subr.mxu0 0.0
    %1337 = vmatpush1.msra.mxu0 %v62
    %1338 = vmatprep.subr.mxu0 0.0
    %1339 = vmatpush2.msra.mxu0 0.0
    %1340 = vmatprep.subr.mxu0 0.0
    %1341 = vmatpush2.msra.mxu0 0.0
    %1342 = vmatprep.subr.mxu0 0.0
    %1343 = vmatpush2.msra.mxu0 0.0
    %1344 = vmatprep.subr.mxu0 0.0
    %1345 = vmatpush2.msra.mxu0 0.0
    %1346 = vmatprep.subr.mxu0 0.0
    %1347 = vmatpush2.msra.mxu0 0.0
    %1348 = vmatprep.subr.mxu0 0.0
    %1349 = vmatpush2.msra.mxu0 0.0
    %1350 = vmatprep.subr.mxu0 0.0
    %1351 = vmatpush2.msra.mxu0 0.0
    %1352 = vmatprep.subr.mxu0 0.0
    %1353 = vmatpush2.msra.mxu0 0.0
    %1354 = vmatprep.subr.mxu0 0.0
    %1355 = vmatpush2.msra.mxu0 0.0
    %1356 = vmatprep.subr.mxu0 0.0
    %1357 = vmatpush2.msra.mxu0 0.0
    %1358 = vmatprep.subr.mxu0 0.0
    %1359 = vmatpush2.msra.mxu0 0.0
    %1360 = vmatprep.subr.mxu0 0.0
    %1361 = vmatpush2.msra.mxu0 0.0
    %1362 = vmatprep.subr.mxu0 0.0
    %1363 = vmatpush2.msra.mxu0 0.0
    %1364 = vmatprep.subr.mxu0 0.0
    %1365 = vmatpush2.msra.mxu0 0.0
    %1366 = vmatprep.subr.mxu0 0.0
    %1367 = vmatpush2.msra.mxu0 0.0
    %1368 = vmatprep.subr.mxu0 0.0
    %1369 = vmatpush2.msra.mxu0 0.0
    %1370 = vmatprep.mubr.f32.mxu0 0.0
    %1371 = vmatmul.mubr.f32.gmra.mxu0 %v1304
    %v1372 = vpop.f32.mrf.mxu0
    %v1373 = vadd.f32 0.0, %v1372
    %v1374 = vpop.f32.mrf.mxu0
    %1375 = vdwg.mxu0
    %v1376 = vadd.f32 %v1300, %v1373
    %v1377 = vadd.f32 %v1376, %v300
    %1378 = vmatprep.subr.mxu0 0.0
    %1379 = vmatpush1.msra.mxu0 0.0
    %1380 = vmatprep.subr.mxu0 0.0
    %1381 = vmatpush1.msra.mxu0 0.0
    %1382 = vmatprep.subr.mxu0 0.0
    %1383 = vmatpush1.msra.mxu0 0.0
    %1384 = vmatprep.subr.mxu0 0.0
    %1385 = vmatpush1.msra.mxu0 0.0
    %1386 = vmatprep.subr.mxu0 0.0
    %1387 = vmatpush1.msra.mxu0 0.0
    %1388 = vmatprep.subr.mxu0 0.0
    %1389 = vmatpush1.msra.mxu0 0.0
    %1390 = vmatprep.subr.mxu0 0.0
    %1391 = vmatpush1.msra.mxu0 0.0
    %1392 = vmatprep.subr.mxu0 0.0
    %1393 = vmatpush1.msra.mxu0 0.0
    %1394 = vmatprep.subr.mxu0 0.0
    %1395 = vmatpush1.msra.mxu0 0.0
    %1396 = vmatprep.subr.mxu0 0.0
    %1397 = vmatpush1.msra.mxu0 0.0
    %1398 = vmatprep.subr.mxu0 0.0
    %1399 = vmatpush1.msra.mxu0 0.0
    %1400 = vmatprep.subr.mxu0 0.0
    %1401 = vmatpush1.msra.mxu0 0.0
    %1402 = vmatprep.subr.mxu0 0.0
    %1403 = vmatpush1.msra.mxu0 0.0
    %1404 = vmatprep.subr.mxu0 0.0
    %1405 = vmatpush1.msra.mxu0 0.0
    %1406 = vmatprep.subr.mxu0 0.0
    %1407 = vmatpush1.msra.mxu0 %v71
    %1408 = vmatprep.subr.mxu0 0.0
    %1409 = vmatpush1.msra.mxu0 %v59
    %1410 = vmatprep.subr.mxu0 0.0
    %1411 = vmatpush2.msra.mxu0 0.0
    %1412 = vmatprep.subr.mxu0 0.0
    %1413 = vmatpush2.msra.mxu0 0.0
    %1414 = vmatprep.subr.mxu0 0.0
    %1415 = vmatpush2.msra.mxu0 0.0
    %1416 = vmatprep.subr.mxu0 0.0
    %1417 = vmatpush2.msra.mxu0 0.0
    %1418 = vmatprep.subr.mxu0 0.0
    %1419 = vmatpush2.msra.mxu0 0.0
    %1420 = vmatprep.subr.mxu0 0.0
    %1421 = vmatpush2.msra.mxu0 0.0
    %1422 = vmatprep.subr.mxu0 0.0
    %1423 = vmatpush2.msra.mxu0 0.0
    %1424 = vmatprep.subr.mxu0 0.0
    %1425 = vmatpush2.msra.mxu0 0.0
    %1426 = vmatprep.subr.mxu0 0.0
    %1427 = vmatpush2.msra.mxu0 0.0
    %1428 = vmatprep.subr.mxu0 0.0
    %1429 = vmatpush2.msra.mxu0 0.0
    %1430 = vmatprep.subr.mxu0 0.0
    %1431 = vmatpush2.msra.mxu0 0.0
    %1432 = vmatprep.subr.mxu0 0.0
    %1433 = vmatpush2.msra.mxu0 0.0
    %1434 = vmatprep.subr.mxu0 0.0
    %1435 = vmatpush2.msra.mxu0 0.0
    %1436 = vmatprep.subr.mxu0 0.0
    %1437 = vmatpush2.msra.mxu0 0.0
    %1438 = vmatprep.subr.mxu0 0.0
    %1439 = vmatpush2.msra.mxu0 0.0
    %1440 = vmatprep.subr.mxu0 0.0
    %1441 = vmatpush2.msra.mxu0 0.0
    %1442 = vmatprep.mubr.f32.mxu0 0.0
    %1443 = vmatmul.mubr.f32.gmra.mxu0 %v1304
    %v1444 = vpop.f32.mrf.mxu0
    %v1445 = vadd.f32 0.0, %v1444
    %v1446 = vpop.f32.mrf.mxu0
    %1447 = vdwg.mxu0
    %1448 = vmatprep.subr.mxu0 0.0
    %1449 = vmatpush1.msra.mxu0 0.0
    %1450 = vmatprep.subr.mxu0 0.0
    %1451 = vmatpush1.msra.mxu0 0.0
    %1452 = vmatprep.subr.mxu0 0.0
    %1453 = vmatpush1.msra.mxu0 0.0
    %1454 = vmatprep.subr.mxu0 0.0
    %1455 = vmatpush1.msra.mxu0 0.0
    %1456 = vmatprep.subr.mxu0 0.0
    %1457 = vmatpush1.msra.mxu0 0.0
    %1458 = vmatprep.subr.mxu0 0.0
    %1459 = vmatpush1.msra.mxu0 0.0
    %1460 = vmatprep.subr.mxu0 0.0
    %1461 = vmatpush1.msra.mxu0 0.0
    %1462 = vmatprep.subr.mxu0 0.0
    %1463 = vmatpush1.msra.mxu0 0.0
    %1464 = vmatprep.subr.mxu0 0.0
    %1465 = vmatpush1.msra.mxu0 0.0
    %1466 = vmatprep.subr.mxu0 0.0
    %1467 = vmatpush1.msra.mxu0 0.0
    %1468 = vmatprep.subr.mxu0 0.0
    %1469 = vmatpush1.msra.mxu0 0.0
    %1470 = vmatprep.subr.mxu0 0.0
    %1471 = vmatpush1.msra.mxu0 0.0
    %1472 = vmatprep.subr.mxu0 0.0
    %1473 = vmatpush1.msra.mxu0 0.0
    %1474 = vmatprep.subr.mxu0 0.0
    %1475 = vmatpush1.msra.mxu0 0.0
    %1476 = vmatprep.subr.mxu0 0.0
    %1477 = vmatpush1.msra.mxu0 %v147
    %1478 = vmatprep.subr.mxu0 0.0
    %1479 = vmatpush1.msra.mxu0 %v56
    %1480 = vmatprep.subr.mxu0 0.0
    %1481 = vmatpush2.msra.mxu0 0.0
    %1482 = vmatprep.subr.mxu0 0.0
    %1483 = vmatpush2.msra.mxu0 0.0
    %1484 = vmatprep.subr.mxu0 0.0
    %1485 = vmatpush2.msra.mxu0 0.0
    %1486 = vmatprep.subr.mxu0 0.0
    %1487 = vmatpush2.msra.mxu0 0.0
    %1488 = vmatprep.subr.mxu0 0.0
    %1489 = vmatpush2.msra.mxu0 0.0
    %1490 = vmatprep.subr.mxu0 0.0
    %1491 = vmatpush2.msra.mxu0 0.0
    %1492 = vmatprep.subr.mxu0 0.0
    %1493 = vmatpush2.msra.mxu0 0.0
    %1494 = vmatprep.subr.mxu0 0.0
    %1495 = vmatpush2.msra.mxu0 0.0
    %1496 = vmatprep.subr.mxu0 0.0
    %1497 = vmatpush2.msra.mxu0 0.0
    %1498 = vmatprep.subr.mxu0 0.0
    %1499 = vmatpush2.msra.mxu0 0.0
    %1500 = vmatprep.subr.mxu0 0.0
    %1501 = vmatpush2.msra.mxu0 0.0
    %1502 = vmatprep.subr.mxu0 0.0
    %1503 = vmatpush2.msra.mxu0 0.0
    %1504 = vmatprep.subr.mxu0 0.0
    %1505 = vmatpush2.msra.mxu0 0.0
    %1506 = vmatprep.subr.mxu0 0.0
    %1507 = vmatpush2.msra.mxu0 0.0
    %1508 = vmatprep.subr.mxu0 0.0
    %1509 = vmatpush2.msra.mxu0 0.0
    %1510 = vmatprep.subr.mxu0 0.0
    %1511 = vmatpush2.msra.mxu0 0.0
    %1512 = vmatprep.mubr.f32.mxu0 0.0
    %1513 = vmatmul.mubr.f32.gmra.mxu0 %v1089
    %v1514 = vpop.f32.mrf.mxu0
    %v1515 = vadd.f32 %v1445, %v1514
    %v1516 = vpop.f32.mrf.mxu0
    %1517 = vdwg.mxu0
    %v1519 = vsel %vm65, %v49, 0
    %1521 = vmatprep.subr.mxu0 0.0
    %1522 = vmatpush1.msra.mxu0 0.0
    %1523 = vmatprep.subr.mxu0 0.0
    %1524 = vmatpush1.msra.mxu0 0.0
    %1525 = vmatprep.subr.mxu0 0.0
    %1526 = vmatpush1.msra.mxu0 0.0
    %1527 = vmatprep.subr.mxu0 0.0
    %1528 = vmatpush1.msra.mxu0 0.0
    %1529 = vmatprep.subr.mxu0 0.0
    %1530 = vmatpush1.msra.mxu0 0.0
    %1531 = vmatprep.subr.mxu0 0.0
    %1532 = vmatpush1.msra.mxu0 0.0
    %1533 = vmatprep.subr.mxu0 0.0
    %1534 = vmatpush1.msra.mxu0 0.0
    %1535 = vmatprep.subr.mxu0 0.0
    %1536 = vmatpush1.msra.mxu0 0.0
    %1537 = vmatprep.subr.mxu0 0.0
    %1538 = vmatpush1.msra.mxu0 0.0
    %1539 = vmatprep.subr.mxu0 0.0
    %1540 = vmatpush1.msra.mxu0 0.0
    %1541 = vmatprep.subr.mxu0 0.0
    %1542 = vmatpush1.msra.mxu0 0.0
    %1543 = vmatprep.subr.mxu0 0.0
    %1544 = vmatpush1.msra.mxu0 0.0
    %1545 = vmatprep.subr.mxu0 0.0
    %1546 = vmatpush1.msra.mxu0 0.0
    %1547 = vmatprep.subr.mxu0 0.0
    %1548 = vmatpush1.msra.mxu0 0.0
    %1549 = vmatprep.subr.mxu0 0.0
    %1550 = vmatpush1.msra.mxu0 %v223
    %1551 = vmatprep.subr.mxu0 0.0
    %1552 = vmatpush1.msra.mxu0 %v62
    %1553 = vmatprep.subr.mxu0 0.0
    %1554 = vmatpush2.msra.mxu0 0.0
    %1555 = vmatprep.subr.mxu0 0.0
    %1556 = vmatpush2.msra.mxu0 0.0
    %1557 = vmatprep.subr.mxu0 0.0
    %1558 = vmatpush2.msra.mxu0 0.0
    %1559 = vmatprep.subr.mxu0 0.0
    %1560 = vmatpush2.msra.mxu0 0.0
    %1561 = vmatprep.subr.mxu0 0.0
    %1562 = vmatpush2.msra.mxu0 0.0
    %1563 = vmatprep.subr.mxu0 0.0
    %1564 = vmatpush2.msra.mxu0 0.0
    %1565 = vmatprep.subr.mxu0 0.0
    %1566 = vmatpush2.msra.mxu0 0.0
    %1567 = vmatprep.subr.mxu0 0.0
    %1568 = vmatpush2.msra.mxu0 0.0
    %1569 = vmatprep.subr.mxu0 0.0
    %1570 = vmatpush2.msra.mxu0 0.0
    %1571 = vmatprep.subr.mxu0 0.0
    %1572 = vmatpush2.msra.mxu0 0.0
    %1573 = vmatprep.subr.mxu0 0.0
    %1574 = vmatpush2.msra.mxu0 0.0
    %1575 = vmatprep.subr.mxu0 0.0
    %1576 = vmatpush2.msra.mxu0 0.0
    %1577 = vmatprep.subr.mxu0 0.0
    %1578 = vmatpush2.msra.mxu0 0.0
    %1579 = vmatprep.subr.mxu0 0.0
    %1580 = vmatpush2.msra.mxu0 0.0
    %1581 = vmatprep.subr.mxu0 0.0
    %1582 = vmatpush2.msra.mxu0 0.0
    %1583 = vmatprep.subr.mxu0 0.0
    %1584 = vmatpush2.msra.mxu0 0.0
    %1585 = vmatprep.mubr.f32.mxu0 0.0
    %1586 = vmatmul.mubr.f32.gmra.mxu0 %v1519
    %v1587 = vpop.f32.mrf.mxu0
    %v1588 = vadd.f32 0.0, %v1587
    %v1589 = vpop.f32.mrf.mxu0
    %1590 = vdwg.mxu0
    %v1591 = vadd.f32 %v1515, %v1588
    %v1592 = vadd.f32 %v1591, %v300
    %1593 = vmatprep.subr.mxu0 0.0
    %1594 = vmatpush1.msra.mxu0 0.0
    %1595 = vmatprep.subr.mxu0 0.0
    %1596 = vmatpush1.msra.mxu0 0.0
    %1597 = vmatprep.subr.mxu0 0.0
    %1598 = vmatpush1.msra.mxu0 0.0
    %1599 = vmatprep.subr.mxu0 0.0
    %1600 = vmatpush1.msra.mxu0 0.0
    %1601 = vmatprep.subr.mxu0 0.0
    %1602 = vmatpush1.msra.mxu0 0.0
    %1603 = vmatprep.subr.mxu0 0.0
    %1604 = vmatpush1.msra.mxu0 0.0
    %1605 = vmatprep.subr.mxu0 0.0
    %1606 = vmatpush1.msra.mxu0 0.0
    %1607 = vmatprep.subr.mxu0 0.0
    %1608 = vmatpush1.msra.mxu0 0.0
    %1609 = vmatprep.subr.mxu0 0.0
    %1610 = vmatpush1.msra.mxu0 0.0
    %1611 = vmatprep.subr.mxu0 0.0
    %1612 = vmatpush1.msra.mxu0 0.0
    %1613 = vmatprep.subr.mxu0 0.0
    %1614 = vmatpush1.msra.mxu0 0.0
    %1615 = vmatprep.subr.mxu0 0.0
    %1616 = vmatpush1.msra.mxu0 0.0
    %1617 = vmatprep.subr.mxu0 0.0
    %1618 = vmatpush1.msra.mxu0 0.0
    %1619 = vmatprep.subr.mxu0 0.0
    %1620 = vmatpush1.msra.mxu0 0.0
    %1621 = vmatprep.subr.mxu0 0.0
    %1622 = vmatpush1.msra.mxu0 %v71
    %1623 = vmatprep.subr.mxu0 0.0
    %1624 = vmatpush1.msra.mxu0 %v59
    %1625 = vmatprep.subr.mxu0 0.0
    %1626 = vmatpush2.msra.mxu0 0.0
    %1627 = vmatprep.subr.mxu0 0.0
    %1628 = vmatpush2.msra.mxu0 0.0
    %1629 = vmatprep.subr.mxu0 0.0
    %1630 = vmatpush2.msra.mxu0 0.0
    %1631 = vmatprep.subr.mxu0 0.0
    %1632 = vmatpush2.msra.mxu0 0.0
    %1633 = vmatprep.subr.mxu0 0.0
    %1634 = vmatpush2.msra.mxu0 0.0
    %1635 = vmatprep.subr.mxu0 0.0
    %1636 = vmatpush2.msra.mxu0 0.0
    %1637 = vmatprep.subr.mxu0 0.0
    %1638 = vmatpush2.msra.mxu0 0.0
    %1639 = vmatprep.subr.mxu0 0.0
    %1640 = vmatpush2.msra.mxu0 0.0
    %1641 = vmatprep.subr.mxu0 0.0
    %1642 = vmatpush2.msra.mxu0 0.0
    %1643 = vmatprep.subr.mxu0 0.0
    %1644 = vmatpush2.msra.mxu0 0.0
    %1645 = vmatprep.subr.mxu0 0.0
    %1646 = vmatpush2.msra.mxu0 0.0
    %1647 = vmatprep.subr.mxu0 0.0
    %1648 = vmatpush2.msra.mxu0 0.0
    %1649 = vmatprep.subr.mxu0 0.0
    %1650 = vmatpush2.msra.mxu0 0.0
    %1651 = vmatprep.subr.mxu0 0.0
    %1652 = vmatpush2.msra.mxu0 0.0
    %1653 = vmatprep.subr.mxu0 0.0
    %1654 = vmatpush2.msra.mxu0 0.0
    %1655 = vmatprep.subr.mxu0 0.0
    %1656 = vmatpush2.msra.mxu0 0.0
    %1657 = vmatprep.mubr.f32.mxu0 0.0
    %1658 = vmatmul.mubr.f32.gmra.mxu0 %v1519
    %v1659 = vpop.f32.mrf.mxu0
    %v1660 = vadd.f32 0.0, %v1659
    %v1661 = vpop.f32.mrf.mxu0
    %1662 = vdwg.mxu0
    %1663 = vmatprep.subr.mxu0 0.0
    %1664 = vmatpush1.msra.mxu0 0.0
    %1665 = vmatprep.subr.mxu0 0.0
    %1666 = vmatpush1.msra.mxu0 0.0
    %1667 = vmatprep.subr.mxu0 0.0
    %1668 = vmatpush1.msra.mxu0 0.0
    %1669 = vmatprep.subr.mxu0 0.0
    %1670 = vmatpush1.msra.mxu0 0.0
    %1671 = vmatprep.subr.mxu0 0.0
    %1672 = vmatpush1.msra.mxu0 0.0
    %1673 = vmatprep.subr.mxu0 0.0
    %1674 = vmatpush1.msra.mxu0 0.0
    %1675 = vmatprep.subr.mxu0 0.0
    %1676 = vmatpush1.msra.mxu0 0.0
    %1677 = vmatprep.subr.mxu0 0.0
    %1678 = vmatpush1.msra.mxu0 0.0
    %1679 = vmatprep.subr.mxu0 0.0
    %1680 = vmatpush1.msra.mxu0 0.0
    %1681 = vmatprep.subr.mxu0 0.0
    %1682 = vmatpush1.msra.mxu0 0.0
    %1683 = vmatprep.subr.mxu0 0.0
    %1684 = vmatpush1.msra.mxu0 0.0
    %1685 = vmatprep.subr.mxu0 0.0
    %1686 = vmatpush1.msra.mxu0 0.0
    %1687 = vmatprep.subr.mxu0 0.0
    %1688 = vmatpush1.msra.mxu0 0.0
    %1689 = vmatprep.subr.mxu0 0.0
    %1690 = vmatpush1.msra.mxu0 0.0
    %1691 = vmatprep.subr.mxu0 0.0
    %1692 = vmatpush1.msra.mxu0 %v147
    %1693 = vmatprep.subr.mxu0 0.0
    %1694 = vmatpush1.msra.mxu0 %v56
    %1695 = vmatprep.subr.mxu0 0.0
    %1696 = vmatpush2.msra.mxu0 0.0
    %1697 = vmatprep.subr.mxu0 0.0
    %1698 = vmatpush2.msra.mxu0 0.0
    %1699 = vmatprep.subr.mxu0 0.0
    %1700 = vmatpush2.msra.mxu0 0.0
    %1701 = vmatprep.subr.mxu0 0.0
    %1702 = vmatpush2.msra.mxu0 0.0
    %1703 = vmatprep.subr.mxu0 0.0
    %1704 = vmatpush2.msra.mxu0 0.0
    %1705 = vmatprep.subr.mxu0 0.0
    %1706 = vmatpush2.msra.mxu0 0.0
    %1707 = vmatprep.subr.mxu0 0.0
    %1708 = vmatpush2.msra.mxu0 0.0
    %1709 = vmatprep.subr.mxu0 0.0
    %1710 = vmatpush2.msra.mxu0 0.0
    %1711 = vmatprep.subr.mxu0 0.0
    %1712 = vmatpush2.msra.mxu0 0.0
    %1713 = vmatprep.subr.mxu0 0.0
    %1714 = vmatpush2.msra.mxu0 0.0
    %1715 = vmatprep.subr.mxu0 0.0
    %1716 = vmatpush2.msra.mxu0 0.0
    %1717 = vmatprep.subr.mxu0 0.0
    %1718 = vmatpush2.msra.mxu0 0.0
    %1719 = vmatprep.subr.mxu0 0.0
    %1720 = vmatpush2.msra.mxu0 0.0
    %1721 = vmatprep.subr.mxu0 0.0
    %1722 = vmatpush2.msra.mxu0 0.0
    %1723 = vmatprep.subr.mxu0 0.0
    %1724 = vmatpush2.msra.mxu0 0.0
    %1725 = vmatprep.subr.mxu0 0.0
    %1726 = vmatpush2.msra.mxu0 0.0
    %1727 = vmatprep.mubr.f32.mxu0 0.0
    %1728 = vmatmul.mubr.f32.gmra.mxu0 %v1304
    %v1729 = vpop.f32.mrf.mxu0
    %v1730 = vadd.f32 %v1660, %v1729
    %v1731 = vpop.f32.mrf.mxu0
    %1732 = vdwg.mxu0
    %v1734 = vsel %vm65, %v51, 0
    %1736 = vmatprep.subr.mxu0 0.0
    %1737 = vmatpush1.msra.mxu0 0.0
    %1738 = vmatprep.subr.mxu0 0.0
    %1739 = vmatpush1.msra.mxu0 0.0
    %1740 = vmatprep.subr.mxu0 0.0
    %1741 = vmatpush1.msra.mxu0 0.0
    %1742 = vmatprep.subr.mxu0 0.0
    %1743 = vmatpush1.msra.mxu0 0.0
    %1744 = vmatprep.subr.mxu0 0.0
    %1745 = vmatpush1.msra.mxu0 0.0
    %1746 = vmatprep.subr.mxu0 0.0
    %1747 = vmatpush1.msra.mxu0 0.0
    %1748 = vmatprep.subr.mxu0 0.0
    %1749 = vmatpush1.msra.mxu0 0.0
    %1750 = vmatprep.subr.mxu0 0.0
    %1751 = vmatpush1.msra.mxu0 0.0
    %1752 = vmatprep.subr.mxu0 0.0
    %1753 = vmatpush1.msra.mxu0 0.0
    %1754 = vmatprep.subr.mxu0 0.0
    %1755 = vmatpush1.msra.mxu0 0.0
    %1756 = vmatprep.subr.mxu0 0.0
    %1757 = vmatpush1.msra.mxu0 0.0
    %1758 = vmatprep.subr.mxu0 0.0
    %1759 = vmatpush1.msra.mxu0 0.0
    %1760 = vmatprep.subr.mxu0 0.0
    %1761 = vmatpush1.msra.mxu0 0.0
    %1762 = vmatprep.subr.mxu0 0.0
    %1763 = vmatpush1.msra.mxu0 0.0
    %1764 = vmatprep.subr.mxu0 0.0
    %1765 = vmatpush1.msra.mxu0 %v223
    %1766 = vmatprep.subr.mxu0 0.0
    %1767 = vmatpush1.msra.mxu0 %v62
    %1768 = vmatprep.subr.mxu0 0.0
    %1769 = vmatpush2.msra.mxu0 0.0
    %1770 = vmatprep.subr.mxu0 0.0
    %1771 = vmatpush2.msra.mxu0 0.0
    %1772 = vmatprep.subr.mxu0 0.0
    %1773 = vmatpush2.msra.mxu0 0.0
    %1774 = vmatprep.subr.mxu0 0.0
    %1775 = vmatpush2.msra.mxu0 0.0
    %1776 = vmatprep.subr.mxu0 0.0
    %1777 = vmatpush2.msra.mxu0 0.0
    %1778 = vmatprep.subr.mxu0 0.0
    %1779 = vmatpush2.msra.mxu0 0.0
    %1780 = vmatprep.subr.mxu0 0.0
    %1781 = vmatpush2.msra.mxu0 0.0
    %1782 = vmatprep.subr.mxu0 0.0
    %1783 = vmatpush2.msra.mxu0 0.0
    %1784 = vmatprep.subr.mxu0 0.0
    %1785 = vmatpush2.msra.mxu0 0.0
    %1786 = vmatprep.subr.mxu0 0.0
    %1787 = vmatpush2.msra.mxu0 0.0
    %1788 = vmatprep.subr.mxu0 0.0
    %1789 = vmatpush2.msra.mxu0 0.0
    %1790 = vmatprep.subr.mxu0 0.0
    %1791 = vmatpush2.msra.mxu0 0.0
    %1792 = vmatprep.subr.mxu0 0.0
    %1793 = vmatpush2.msra.mxu0 0.0
    %1794 = vmatprep.subr.mxu0 0.0
    %1795 = vmatpush2.msra.mxu0 0.0
    %1796 = vmatprep.subr.mxu0 0.0
    %1797 = vmatpush2.msra.mxu0 0.0
    %1798 = vmatprep.subr.mxu0 0.0
    %1799 = vmatpush2.msra.mxu0 0.0
    %1800 = vmatprep.mubr.f32.mxu0 0.0
    %1801 = vmatmul.mubr.f32.gmra.mxu0 %v1734
    %v1802 = vpop.f32.mrf.mxu0
    %v1803 = vadd.f32 0.0, %v1802
    %v1804 = vpop.f32.mrf.mxu0
    %1805 = vdwg.mxu0
    %v1806 = vadd.f32 %v1730, %v1803
    %v1807 = vadd.f32 %v1806, %v300
    %1808 = vmatprep.subr.mxu0 0.0
    %1809 = vmatpush1.msra.mxu0 0.0
    %1810 = vmatprep.subr.mxu0 0.0
    %1811 = vmatpush1.msra.mxu0 0.0
    %1812 = vmatprep.subr.mxu0 0.0
    %1813 = vmatpush1.msra.mxu0 0.0
    %1814 = vmatprep.subr.mxu0 0.0
    %1815 = vmatpush1.msra.mxu0 0.0
    %1816 = vmatprep.subr.mxu0 0.0
    %1817 = vmatpush1.msra.mxu0 0.0
    %1818 = vmatprep.subr.mxu0 0.0
    %1819 = vmatpush1.msra.mxu0 0.0
    %1820 = vmatprep.subr.mxu0 0.0
    %1821 = vmatpush1.msra.mxu0 0.0
    %1822 = vmatprep.subr.mxu0 0.0
    %1823 = vmatpush1.msra.mxu0 0.0
    %1824 = vmatprep.subr.mxu0 0.0
    %1825 = vmatpush1.msra.mxu0 0.0
    %1826 = vmatprep.subr.mxu0 0.0
    %1827 = vmatpush1.msra.mxu0 0.0
    %1828 = vmatprep.subr.mxu0 0.0
    %1829 = vmatpush1.msra.mxu0 0.0
    %1830 = vmatprep.subr.mxu0 0.0
    %1831 = vmatpush1.msra.mxu0 0.0
    %1832 = vmatprep.subr.mxu0 0.0
    %1833 = vmatpush1.msra.mxu0 0.0
    %1834 = vmatprep.subr.mxu0 0.0
    %1835 = vmatpush1.msra.mxu0 0.0
    %1836 = vmatprep.subr.mxu0 0.0
    %1837 = vmatpush1.msra.mxu0 %v71
    %1838 = vmatprep.subr.mxu0 0.0
    %1839 = vmatpush1.msra.mxu0 %v59
    %1840 = vmatprep.subr.mxu0 0.0
    %1841 = vmatpush2.msra.mxu0 0.0
    %1842 = vmatprep.subr.mxu0 0.0
    %1843 = vmatpush2.msra.mxu0 0.0
    %1844 = vmatprep.subr.mxu0 0.0
    %1845 = vmatpush2.msra.mxu0 0.0
    %1846 = vmatprep.subr.mxu0 0.0
    %1847 = vmatpush2.msra.mxu0 0.0
    %1848 = vmatprep.subr.mxu0 0.0
    %1849 = vmatpush2.msra.mxu0 0.0
    %1850 = vmatprep.subr.mxu0 0.0
    %1851 = vmatpush2.msra.mxu0 0.0
    %1852 = vmatprep.subr.mxu0 0.0
    %1853 = vmatpush2.msra.mxu0 0.0
    %1854 = vmatprep.subr.mxu0 0.0
    %1855 = vmatpush2.msra.mxu0 0.0
    %1856 = vmatprep.subr.mxu0 0.0
    %1857 = vmatpush2.msra.mxu0 0.0
    %1858 = vmatprep.subr.mxu0 0.0
    %1859 = vmatpush2.msra.mxu0 0.0
    %1860 = vmatprep.subr.mxu0 0.0
    %1861 = vmatpush2.msra.mxu0 0.0
    %1862 = vmatprep.subr.mxu0 0.0
    %1863 = vmatpush2.msra.mxu0 0.0
    %1864 = vmatprep.subr.mxu0 0.0
    %1865 = vmatpush2.msra.mxu0 0.0
    %1866 = vmatprep.subr.mxu0 0.0
    %1867 = vmatpush2.msra.mxu0 0.0
    %1868 = vmatprep.subr.mxu0 0.0
    %1869 = vmatpush2.msra.mxu0 0.0
    %1870 = vmatprep.subr.mxu0 0.0
    %1871 = vmatpush2.msra.mxu0 0.0
    %1872 = vmatprep.mubr.f32.mxu0 0.0
    %1873 = vmatmul.mubr.f32.gmra.mxu0 %v1734
    %v1874 = vpop.f32.mrf.mxu0
    %v1875 = vadd.f32 0.0, %v1874
    %v1876 = vpop.f32.mrf.mxu0
    %1877 = vdwg.mxu0
    %1878 = vmatprep.subr.mxu0 0.0
    %1879 = vmatpush1.msra.mxu0 0.0
    %1880 = vmatprep.subr.mxu0 0.0
    %1881 = vmatpush1.msra.mxu0 0.0
    %1882 = vmatprep.subr.mxu0 0.0
    %1883 = vmatpush1.msra.mxu0 0.0
    %1884 = vmatprep.subr.mxu0 0.0
    %1885 = vmatpush1.msra.mxu0 0.0
    %1886 = vmatprep.subr.mxu0 0.0
    %1887 = vmatpush1.msra.mxu0 0.0
    %1888 = vmatprep.subr.mxu0 0.0
    %1889 = vmatpush1.msra.mxu0 0.0
    %1890 = vmatprep.subr.mxu0 0.0
    %1891 = vmatpush1.msra.mxu0 0.0
    %1892 = vmatprep.subr.mxu0 0.0
    %1893 = vmatpush1.msra.mxu0 0.0
    %1894 = vmatprep.subr.mxu0 0.0
    %1895 = vmatpush1.msra.mxu0 0.0
    %1896 = vmatprep.subr.mxu0 0.0
    %1897 = vmatpush1.msra.mxu0 0.0
    %1898 = vmatprep.subr.mxu0 0.0
    %1899 = vmatpush1.msra.mxu0 0.0
    %1900 = vmatprep.subr.mxu0 0.0
    %1901 = vmatpush1.msra.mxu0 0.0
    %1902 = vmatprep.subr.mxu0 0.0
    %1903 = vmatpush1.msra.mxu0 0.0
    %1904 = vmatprep.subr.mxu0 0.0
    %1905 = vmatpush1.msra.mxu0 0.0
    %1906 = vmatprep.subr.mxu0 0.0
    %1907 = vmatpush1.msra.mxu0 %v147
    %1908 = vmatprep.subr.mxu0 0.0
    %1909 = vmatpush1.msra.mxu0 %v56
    %1910 = vmatprep.subr.mxu0 0.0
    %1911 = vmatpush2.msra.mxu0 0.0
    %1912 = vmatprep.subr.mxu0 0.0
    %1913 = vmatpush2.msra.mxu0 0.0
    %1914 = vmatprep.subr.mxu0 0.0
    %1915 = vmatpush2.msra.mxu0 0.0
    %1916 = vmatprep.subr.mxu0 0.0
    %1917 = vmatpush2.msra.mxu0 0.0
    %1918 = vmatprep.subr.mxu0 0.0
    %1919 = vmatpush2.msra.mxu0 0.0
    %1920 = vmatprep.subr.mxu0 0.0
    %1921 = vmatpush2.msra.mxu0 0.0
    %1922 = vmatprep.subr.mxu0 0.0
    %1923 = vmatpush2.msra.mxu0 0.0
    %1924 = vmatprep.subr.mxu0 0.0
    %1925 = vmatpush2.msra.mxu0 0.0
    %1926 = vmatprep.subr.mxu0 0.0
    %1927 = vmatpush2.msra.mxu0 0.0
    %1928 = vmatprep.subr.mxu0 0.0
    %1929 = vmatpush2.msra.mxu0 0.0
    %1930 = vmatprep.subr.mxu0 0.0
    %1931 = vmatpush2.msra.mxu0 0.0
    %1932 = vmatprep.subr.mxu0 0.0
    %1933 = vmatpush2.msra.mxu0 0.0
    %1934 = vmatprep.subr.mxu0 0.0
    %1935 = vmatpush2.msra.mxu0 0.0
    %1936 = vmatprep.subr.mxu0 0.0
    %1937 = vmatpush2.msra.mxu0 0.0
    %1938 = vmatprep.subr.mxu0 0.0
    %1939 = vmatpush2.msra.mxu0 0.0
    %1940 = vmatprep.subr.mxu0 0.0
    %1941 = vmatpush2.msra.mxu0 0.0
    %1942 = vmatprep.mubr.f32.mxu0 0.0
    %1943 = vmatmul.mubr.f32.gmra.mxu0 %v1519
    %v1944 = vpop.f32.mrf.mxu0
    %v1945 = vadd.f32 %v1875, %v1944
    %v1946 = vpop.f32.mrf.mxu0
    %1947 = vdwg.mxu0
    %v1949 = vsel %vm65, %v53, 0
    %1951 = vmatprep.subr.mxu0 0.0
    %1952 = vmatpush1.msra.mxu0 0.0
    %1953 = vmatprep.subr.mxu0 0.0
    %1954 = vmatpush1.msra.mxu0 0.0
    %1955 = vmatprep.subr.mxu0 0.0
    %1956 = vmatpush1.msra.mxu0 0.0
    %1957 = vmatprep.subr.mxu0 0.0
    %1958 = vmatpush1.msra.mxu0 0.0
    %1959 = vmatprep.subr.mxu0 0.0
    %1960 = vmatpush1.msra.mxu0 0.0
    %1961 = vmatprep.subr.mxu0 0.0
    %1962 = vmatpush1.msra.mxu0 0.0
    %1963 = vmatprep.subr.mxu0 0.0
    %1964 = vmatpush1.msra.mxu0 0.0
    %1965 = vmatprep.subr.mxu0 0.0
    %1966 = vmatpush1.msra.mxu0 0.0
    %1967 = vmatprep.subr.mxu0 0.0
    %1968 = vmatpush1.msra.mxu0 0.0
    %1969 = vmatprep.subr.mxu0 0.0
    %1970 = vmatpush1.msra.mxu0 0.0
    %1971 = vmatprep.subr.mxu0 0.0
    %1972 = vmatpush1.msra.mxu0 0.0
    %1973 = vmatprep.subr.mxu0 0.0
    %1974 = vmatpush1.msra.mxu0 0.0
    %1975 = vmatprep.subr.mxu0 0.0
    %1976 = vmatpush1.msra.mxu0 0.0
    %1977 = vmatprep.subr.mxu0 0.0
    %1978 = vmatpush1.msra.mxu0 0.0
    %1979 = vmatprep.subr.mxu0 0.0
    %1980 = vmatpush1.msra.mxu0 %v223
    %1981 = vmatprep.subr.mxu0 0.0
    %1982 = vmatpush1.msra.mxu0 %v62
    %1983 = vmatprep.subr.mxu0 0.0
    %1984 = vmatpush2.msra.mxu0 0.0
    %1985 = vmatprep.subr.mxu0 0.0
    %1986 = vmatpush2.msra.mxu0 0.0
    %1987 = vmatprep.subr.mxu0 0.0
    %1988 = vmatpush2.msra.mxu0 0.0
    %1989 = vmatprep.subr.mxu0 0.0
    %1990 = vmatpush2.msra.mxu0 0.0
    %1991 = vmatprep.subr.mxu0 0.0
    %1992 = vmatpush2.msra.mxu0 0.0
    %1993 = vmatprep.subr.mxu0 0.0
    %1994 = vmatpush2.msra.mxu0 0.0
    %1995 = vmatprep.subr.mxu0 0.0
    %1996 = vmatpush2.msra.mxu0 0.0
    %1997 = vmatprep.subr.mxu0 0.0
    %1998 = vmatpush2.msra.mxu0 0.0
    %1999 = vmatprep.subr.mxu0 0.0
    %2000 = vmatpush2.msra.mxu0 0.0
    %2001 = vmatprep.subr.mxu0 0.0
    %2002 = vmatpush2.msra.mxu0 0.0
    %2003 = vmatprep.subr.mxu0 0.0
    %2004 = vmatpush2.msra.mxu0 0.0
    %2005 = vmatprep.subr.mxu0 0.0
    %2006 = vmatpush2.msra.mxu0 0.0
    %2007 = vmatprep.subr.mxu0 0.0
    %2008 = vmatpush2.msra.mxu0 0.0
    %2009 = vmatprep.subr.mxu0 0.0
    %2010 = vmatpush2.msra.mxu0 0.0
    %2011 = vmatprep.subr.mxu0 0.0
    %2012 = vmatpush2.msra.mxu0 0.0
    %2013 = vmatprep.subr.mxu0 0.0
    %2014 = vmatpush2.msra.mxu0 0.0
    %2015 = vmatprep.mubr.f32.mxu0 0.0
    %2016 = vmatmul.mubr.f32.gmra.mxu0 %v1949
    %v2017 = vpop.f32.mrf.mxu0
    %v2018 = vadd.f32 0.0, %v2017
    %v2019 = vpop.f32.mrf.mxu0
    %2020 = vdwg.mxu0
    %v2021 = vadd.f32 %v1945, %v2018
    %v2022 = vadd.f32 %v2021, %v300
    %2023 = vmatprep.subr.mxu0 0.0
    %2024 = vmatpush1.msra.mxu0 0.0
    %2025 = vmatprep.subr.mxu0 0.0
    %2026 = vmatpush1.msra.mxu0 0.0
    %2027 = vmatprep.subr.mxu0 0.0
    %2028 = vmatpush1.msra.mxu0 0.0
    %2029 = vmatprep.subr.mxu0 0.0
    %2030 = vmatpush1.msra.mxu0 0.0
    %2031 = vmatprep.subr.mxu0 0.0
    %2032 = vmatpush1.msra.mxu0 0.0
    %2033 = vmatprep.subr.mxu0 0.0
    %2034 = vmatpush1.msra.mxu0 0.0
    %2035 = vmatprep.subr.mxu0 0.0
    %2036 = vmatpush1.msra.mxu0 0.0
    %2037 = vmatprep.subr.mxu0 0.0
    %2038 = vmatpush1.msra.mxu0 0.0
    %2039 = vmatprep.subr.mxu0 0.0
    %2040 = vmatpush1.msra.mxu0 0.0
    %2041 = vmatprep.subr.mxu0 0.0
    %2042 = vmatpush1.msra.mxu0 0.0
    %2043 = vmatprep.subr.mxu0 0.0
    %2044 = vmatpush1.msra.mxu0 0.0
    %2045 = vmatprep.subr.mxu0 0.0
    %2046 = vmatpush1.msra.mxu0 0.0
    %2047 = vmatprep.subr.mxu0 0.0
    %2048 = vmatpush1.msra.mxu0 0.0
    %2049 = vmatprep.subr.mxu0 0.0
    %2050 = vmatpush1.msra.mxu0 0.0
    %2051 = vmatprep.subr.mxu0 0.0
    %2052 = vmatpush1.msra.mxu0 %v71
    %2053 = vmatprep.subr.mxu0 0.0
    %2054 = vmatpush1.msra.mxu0 %v59
    %2055 = vmatprep.subr.mxu0 0.0
    %2056 = vmatpush2.msra.mxu0 0.0
    %2057 = vmatprep.subr.mxu0 0.0
    %2058 = vmatpush2.msra.mxu0 0.0
    %2059 = vmatprep.subr.mxu0 0.0
    %2060 = vmatpush2.msra.mxu0 0.0
    %2061 = vmatprep.subr.mxu0 0.0
    %2062 = vmatpush2.msra.mxu0 0.0
    %2063 = vmatprep.subr.mxu0 0.0
    %2064 = vmatpush2.msra.mxu0 0.0
    %2065 = vmatprep.subr.mxu0 0.0
    %2066 = vmatpush2.msra.mxu0 0.0
    %2067 = vmatprep.subr.mxu0 0.0
    %2068 = vmatpush2.msra.mxu0 0.0
    %2069 = vmatprep.subr.mxu0 0.0
    %2070 = vmatpush2.msra.mxu0 0.0
    %2071 = vmatprep.subr.mxu0 0.0
    %2072 = vmatpush2.msra.mxu0 0.0
    %2073 = vmatprep.subr.mxu0 0.0
    %2074 = vmatpush2.msra.mxu0 0.0
    %2075 = vmatprep.subr.mxu0 0.0
    %2076 = vmatpush2.msra.mxu0 0.0
    %2077 = vmatprep.subr.mxu0 0.0
    %2078 = vmatpush2.msra.mxu0 0.0
    %2079 = vmatprep.subr.mxu0 0.0
    %2080 = vmatpush2.msra.mxu0 0.0
    %2081 = vmatprep.subr.mxu0 0.0
    %2082 = vmatpush2.msra.mxu0 0.0
    %2083 = vmatprep.subr.mxu0 0.0
    %2084 = vmatpush2.msra.mxu0 0.0
    %2085 = vmatprep.subr.mxu0 0.0
    %2086 = vmatpush2.msra.mxu0 0.0
    %2087 = vmatprep.mubr.f32.mxu0 0.0
    %2088 = vmatmul.mubr.f32.gmra.mxu0 %v1949
    %v2089 = vpop.f32.mrf.mxu0
    %v2090 = vadd.f32 0.0, %v2089
    %v2091 = vpop.f32.mrf.mxu0
    %2092 = vdwg.mxu0
    %2093 = vmatprep.subr.mxu0 0.0
    %2094 = vmatpush1.msra.mxu0 0.0
    %2095 = vmatprep.subr.mxu0 0.0
    %2096 = vmatpush1.msra.mxu0 0.0
    %2097 = vmatprep.subr.mxu0 0.0
    %2098 = vmatpush1.msra.mxu0 0.0
    %2099 = vmatprep.subr.mxu0 0.0
    %2100 = vmatpush1.msra.mxu0 0.0
    %2101 = vmatprep.subr.mxu0 0.0
    %2102 = vmatpush1.msra.mxu0 0.0
    %2103 = vmatprep.subr.mxu0 0.0
    %2104 = vmatpush1.msra.mxu0 0.0
    %2105 = vmatprep.subr.mxu0 0.0
    %2106 = vmatpush1.msra.mxu0 0.0
    %2107 = vmatprep.subr.mxu0 0.0
    %2108 = vmatpush1.msra.mxu0 0.0
    %2109 = vmatprep.subr.mxu0 0.0
    %2110 = vmatpush1.msra.mxu0 0.0
    %2111 = vmatprep.subr.mxu0 0.0
    %2112 = vmatpush1.msra.mxu0 0.0
    %2113 = vmatprep.subr.mxu0 0.0
    %2114 = vmatpush1.msra.mxu0 0.0
    %2115 = vmatprep.subr.mxu0 0.0
    %2116 = vmatpush1.msra.mxu0 0.0
    %2117 = vmatprep.subr.mxu0 0.0
    %2118 = vmatpush1.msra.mxu0 0.0
    %2119 = vmatprep.subr.mxu0 0.0
    %2120 = vmatpush1.msra.mxu0 0.0
    %2121 = vmatprep.subr.mxu0 0.0
    %2122 = vmatpush1.msra.mxu0 %v147
    %2123 = vmatprep.subr.mxu0 0.0
    %2124 = vmatpush1.msra.mxu0 %v56
    %2125 = vmatprep.subr.mxu0 0.0
    %2126 = vmatpush2.msra.mxu0 0.0
    %2127 = vmatprep.subr.mxu0 0.0
    %2128 = vmatpush2.msra.mxu0 0.0
    %2129 = vmatprep.subr.mxu0 0.0
    %2130 = vmatpush2.msra.mxu0 0.0
    %2131 = vmatprep.subr.mxu0 0.0
    %2132 = vmatpush2.msra.mxu0 0.0
    %2133 = vmatprep.subr.mxu0 0.0
    %2134 = vmatpush2.msra.mxu0 0.0
    %2135 = vmatprep.subr.mxu0 0.0
    %2136 = vmatpush2.msra.mxu0 0.0
    %2137 = vmatprep.subr.mxu0 0.0
    %2138 = vmatpush2.msra.mxu0 0.0
    %2139 = vmatprep.subr.mxu0 0.0
    %2140 = vmatpush2.msra.mxu0 0.0
    %2141 = vmatprep.subr.mxu0 0.0
    %2142 = vmatpush2.msra.mxu0 0.0
    %2143 = vmatprep.subr.mxu0 0.0
    %2144 = vmatpush2.msra.mxu0 0.0
    %2145 = vmatprep.subr.mxu0 0.0
    %2146 = vmatpush2.msra.mxu0 0.0
    %2147 = vmatprep.subr.mxu0 0.0
    %2148 = vmatpush2.msra.mxu0 0.0
    %2149 = vmatprep.subr.mxu0 0.0
    %2150 = vmatpush2.msra.mxu0 0.0
    %2151 = vmatprep.subr.mxu0 0.0
    %2152 = vmatpush2.msra.mxu0 0.0
    %2153 = vmatprep.subr.mxu0 0.0
    %2154 = vmatpush2.msra.mxu0 0.0
    %2155 = vmatprep.subr.mxu0 0.0
    %2156 = vmatpush2.msra.mxu0 0.0
    %2157 = vmatprep.mubr.f32.mxu0 0.0
    %2158 = vmatmul.mubr.f32.gmra.mxu0 %v1734
    %v2159 = vpop.f32.mrf.mxu0
    %v2160 = vadd.f32 %v2090, %v2159
    %v2161 = vpop.f32.mrf.mxu0
    %2162 = vdwg.mxu0
    %v2164 = vsel %vm65, %v55, 0
    %2166 = vmatprep.subr.mxu0 0.0
    %2167 = vmatpush1.msra.mxu0 0.0
    %2168 = vmatprep.subr.mxu0 0.0
    %2169 = vmatpush1.msra.mxu0 0.0
    %2170 = vmatprep.subr.mxu0 0.0
    %2171 = vmatpush1.msra.mxu0 0.0
    %2172 = vmatprep.subr.mxu0 0.0
    %2173 = vmatpush1.msra.mxu0 0.0
    %2174 = vmatprep.subr.mxu0 0.0
    %2175 = vmatpush1.msra.mxu0 0.0
    %2176 = vmatprep.subr.mxu0 0.0
    %2177 = vmatpush1.msra.mxu0 0.0
    %2178 = vmatprep.subr.mxu0 0.0
    %2179 = vmatpush1.msra.mxu0 0.0
    %2180 = vmatprep.subr.mxu0 0.0
    %2181 = vmatpush1.msra.mxu0 0.0
    %2182 = vmatprep.subr.mxu0 0.0
    %2183 = vmatpush1.msra.mxu0 0.0
    %2184 = vmatprep.subr.mxu0 0.0
    %2185 = vmatpush1.msra.mxu0 0.0
    %2186 = vmatprep.subr.mxu0 0.0
    %2187 = vmatpush1.msra.mxu0 0.0
    %2188 = vmatprep.subr.mxu0 0.0
    %2189 = vmatpush1.msra.mxu0 0.0
    %2190 = vmatprep.subr.mxu0 0.0
    %2191 = vmatpush1.msra.mxu0 0.0
    %2192 = vmatprep.subr.mxu0 0.0
    %2193 = vmatpush1.msra.mxu0 0.0
    %2194 = vmatprep.subr.mxu0 0.0
    %2195 = vmatpush1.msra.mxu0 %v223
    %2196 = vmatprep.subr.mxu0 0.0
    %2197 = vmatpush1.msra.mxu0 %v62
    %2198 = vmatprep.subr.mxu0 0.0
    %2199 = vmatpush2.msra.mxu0 0.0
    %2200 = vmatprep.subr.mxu0 0.0
    %2201 = vmatpush2.msra.mxu0 0.0
    %2202 = vmatprep.subr.mxu0 0.0
    %2203 = vmatpush2.msra.mxu0 0.0
    %2204 = vmatprep.subr.mxu0 0.0
    %2205 = vmatpush2.msra.mxu0 0.0
    %2206 = vmatprep.subr.mxu0 0.0
    %2207 = vmatpush2.msra.mxu0 0.0
    %2208 = vmatprep.subr.mxu0 0.0
    %2209 = vmatpush2.msra.mxu0 0.0
    %2210 = vmatprep.subr.mxu0 0.0
    %2211 = vmatpush2.msra.mxu0 0.0
    %2212 = vmatprep.subr.mxu0 0.0
    %2213 = vmatpush2.msra.mxu0 0.0
    %2214 = vmatprep.subr.mxu0 0.0
    %2215 = vmatpush2.msra.mxu0 0.0
    %2216 = vmatprep.subr.mxu0 0.0
    %2217 = vmatpush2.msra.mxu0 0.0
    %2218 = vmatprep.subr.mxu0 0.0
    %2219 = vmatpush2.msra.mxu0 0.0
    %2220 = vmatprep.subr.mxu0 0.0
    %2221 = vmatpush2.msra.mxu0 0.0
    %2222 = vmatprep.subr.mxu0 0.0
    %2223 = vmatpush2.msra.mxu0 0.0
    %2224 = vmatprep.subr.mxu0 0.0
    %2225 = vmatpush2.msra.mxu0 0.0
    %2226 = vmatprep.subr.mxu0 0.0
    %2227 = vmatpush2.msra.mxu0 0.0
    %2228 = vmatprep.subr.mxu0 0.0
    %2229 = vmatpush2.msra.mxu0 0.0
    %2230 = vmatprep.mubr.f32.mxu0 0.0
    %2231 = vmatmul.mubr.f32.gmra.mxu0 %v2164
    %v2232 = vpop.f32.mrf.mxu0
    %v2233 = vadd.f32 0.0, %v2232
    %v2234 = vpop.f32.mrf.mxu0
    %2235 = vdwg.mxu0
    %v2236 = vadd.f32 %v2160, %v2233
    %v2237 = vadd.f32 %v2236, %v300
    %v2238 = vmax.f32 %v302, %v517
    %2240 = vrot.lane.b32.xlu0 %v2238, 127
    %v2241 = vpop.permute.xlu0 %2240
    %v2243 = vmax.f32 %v2238, %v2241
    %v2244 = vmax.f32 %v2243, 0.0
    %v2245 = vmax.f32 %v732, %v947
    %2247 = vrot.lane.b32.xlu0 %v2245, 127
    %v2248 = vpop.permute.xlu0 %2247
    %v2250 = vmax.f32 %v2245, %v2248
    %v2251 = vmax.f32 %v2250, 0.0
    %v2252 = vmax.f32 %v1162, %v1377
    %2254 = vrot.lane.b32.xlu0 %v2252, 127
    %v2255 = vpop.permute.xlu0 %2254
    %v2257 = vmax.f32 %v2252, %v2255
    %v2258 = vmax.f32 %v2257, 0.0
    %v2259 = vmax.f32 %v1592, %v1807
    %2261 = vrot.lane.b32.xlu0 %v2259, 127
    %v2262 = vpop.permute.xlu0 %2261
    %v2264 = vmax.f32 %v2259, %v2262
    %v2265 = vmax.f32 %v2264, 0.0
    %v2266 = vmax.f32 %v2022, %v2237
    %2268 = vrot.lane.b32.xlu0 %v2266, 127
    %v2269 = vpop.permute.xlu0 %2268
    %v2271 = vmax.f32 %v2266, %v2269
    %v2272 = vmax.f32 %v2271, 0.0
    %v2273 = vld [vmem:[%s3] sm:$0xff]
    %v2274 = vld [vmem:[%s3 + $0x8] sm:$0xff]
    %v2275 = vld [vmem:[%s3 + $0x10] sm:$0xff]
    %v2276 = vld [vmem:[%s3 + $0x18] sm:$0xff]
    %v2277 = vld [vmem:[%s3 + $0x20] sm:$0xff]
    %v2278 = vld [vmem:[%s3 + $0x28] sm:$0xff]
    %v2279 = vld [vmem:[%s3 + $0x30] sm:$0xff]
    %v2280 = vld [vmem:[%s3 + $0x38] sm:$0xff]
    %v2281 = vld [vmem:[%s3 + $0x40] sm:$0xff]
    %v2282 = vld [vmem:[%s3 + $0x48] sm:$0x7f]
    %s2283 = scalar_lea.vmem %s3, 80
    %v2284 = vld [vmem:[%s2283] sm:$0xff]
    %v2285 = vld [vmem:[%s2283 + $0x8] sm:$0xff]
    %v2286 = vld [vmem:[%s2283 + $0x10] sm:$0xff]
    %v2287 = vld [vmem:[%s2283 + $0x18] sm:$0xff]
    %v2288 = vld [vmem:[%s2283 + $0x20] sm:$0xff]
    %v2289 = vld [vmem:[%s2283 + $0x28] sm:$0xff]
    %v2290 = vld [vmem:[%s2283 + $0x30] sm:$0xff]
    %v2291 = vld [vmem:[%s2283 + $0x38] sm:$0xff]
    %v2292 = vld [vmem:[%s2283 + $0x40] sm:$0xff]
    %v2293 = vld [vmem:[%s2283 + $0x48] sm:$0x7f]
    %v2294 = vld [vmem:[%s4] sm:$0x1]
    %vm2295 = vcmask 646144
    %v2297 = vsel %vm2295, %v2251, 0
    %vm2299 = vcmask 1046528
    %v2301 = vsel %vm2299, %v2293, 0
    %2303 = vmatprep.subr.mxu0 0.0
    %2304 = vmatpush1.msra.mxu0 0.0
    %2305 = vmatprep.subr.mxu0 0.0
    %2306 = vmatpush1.msra.mxu0 0.0
    %2307 = vmatprep.subr.mxu0 0.0
    %2308 = vmatpush1.msra.mxu0 0.0
    %2309 = vmatprep.subr.mxu0 0.0
    %2310 = vmatpush1.msra.mxu0 0.0
    %2311 = vmatprep.subr.mxu0 0.0
    %2312 = vmatpush1.msra.mxu0 0.0
    %2313 = vmatprep.subr.mxu0 0.0
    %2314 = vmatpush1.msra.mxu0 0.0
    %2315 = vmatprep.subr.mxu0 0.0
    %2316 = vmatpush1.msra.mxu0 %v2301
    %2317 = vmatprep.subr.mxu0 0.0
    %2318 = vmatpush1.msra.mxu0 %v2292
    %2319 = vmatprep.subr.mxu0 0.0
    %2320 = vmatpush1.msra.mxu0 %v2291
    %2321 = vmatprep.subr.mxu0 0.0
    %2322 = vmatpush1.msra.mxu0 %v2290
    %2323 = vmatprep.subr.mxu0 0.0
    %2324 = vmatpush1.msra.mxu0 %v2289
    %2325 = vmatprep.subr.mxu0 0.0
    %2326 = vmatpush1.msra.mxu0 %v2288
    %2327 = vmatprep.subr.mxu0 0.0
    %2328 = vmatpush1.msra.mxu0 %v2287
    %2329 = vmatprep.subr.mxu0 0.0
    %2330 = vmatpush1.msra.mxu0 %v2286
    %2331 = vmatprep.subr.mxu0 0.0
    %2332 = vmatpush1.msra.mxu0 %v2285
    %2333 = vmatprep.subr.mxu0 0.0
    %2334 = vmatpush1.msra.mxu0 %v2284
    %2335 = vmatprep.subr.mxu0 0.0
    %2336 = vmatpush2.msra.mxu0 0.0
    %2337 = vmatprep.subr.mxu0 0.0
    %2338 = vmatpush2.msra.mxu0 0.0
    %2339 = vmatprep.subr.mxu0 0.0
    %2340 = vmatpush2.msra.mxu0 0.0
    %2341 = vmatprep.subr.mxu0 0.0
    %2342 = vmatpush2.msra.mxu0 0.0
    %2343 = vmatprep.subr.mxu0 0.0
    %2344 = vmatpush2.msra.mxu0 0.0
    %2345 = vmatprep.subr.mxu0 0.0
    %2346 = vmatpush2.msra.mxu0 0.0
    %2347 = vmatprep.subr.mxu0 0.0
    %2348 = vmatpush2.msra.mxu0 0.0
    %2349 = vmatprep.subr.mxu0 0.0
    %2350 = vmatpush2.msra.mxu0 0.0
    %2351 = vmatprep.subr.mxu0 0.0
    %2352 = vmatpush2.msra.mxu0 0.0
    %2353 = vmatprep.subr.mxu0 0.0
    %2354 = vmatpush2.msra.mxu0 0.0
    %2355 = vmatprep.subr.mxu0 0.0
    %2356 = vmatpush2.msra.mxu0 0.0
    %2357 = vmatprep.subr.mxu0 0.0
    %2358 = vmatpush2.msra.mxu0 0.0
    %2359 = vmatprep.subr.mxu0 0.0
    %2360 = vmatpush2.msra.mxu0 0.0
    %2361 = vmatprep.subr.mxu0 0.0
    %2362 = vmatpush2.msra.mxu0 0.0
    %2363 = vmatprep.subr.mxu0 0.0
    %2364 = vmatpush2.msra.mxu0 0.0
    %2365 = vmatprep.subr.mxu0 0.0
    %2366 = vmatpush2.msra.mxu0 0.0
    %2367 = vmatprep.mubr.f32.mxu0 0.0
    %2368 = vmatmul.mubr.f32.gmra.mxu0 %v2297
    %v2369 = vpop.f32.mrf.mxu0
    %v2370 = vadd.f32 0.0, %v2369
    %v2371 = vpop.f32.mrf.mxu0
    %2372 = vdwg.mxu0
    %v2374 = vsel %vm2295, %v2244, 0
    %v2377 = vsel %vm2299, %v2282, 0
    %2379 = vmatprep.subr.mxu0 0.0
    %2380 = vmatpush1.msra.mxu0 0.0
    %2381 = vmatprep.subr.mxu0 0.0
    %2382 = vmatpush1.msra.mxu0 0.0
    %2383 = vmatprep.subr.mxu0 0.0
    %2384 = vmatpush1.msra.mxu0 0.0
    %2385 = vmatprep.subr.mxu0 0.0
    %2386 = vmatpush1.msra.mxu0 0.0
    %2387 = vmatprep.subr.mxu0 0.0
    %2388 = vmatpush1.msra.mxu0 0.0
    %2389 = vmatprep.subr.mxu0 0.0
    %2390 = vmatpush1.msra.mxu0 0.0
    %2391 = vmatprep.subr.mxu0 0.0
    %2392 = vmatpush1.msra.mxu0 %v2377
    %2393 = vmatprep.subr.mxu0 0.0
    %2394 = vmatpush1.msra.mxu0 %v2281
    %2395 = vmatprep.subr.mxu0 0.0
    %2396 = vmatpush1.msra.mxu0 %v2280
    %2397 = vmatprep.subr.mxu0 0.0
    %2398 = vmatpush1.msra.mxu0 %v2279
    %2399 = vmatprep.subr.mxu0 0.0
    %2400 = vmatpush1.msra.mxu0 %v2278
    %2401 = vmatprep.subr.mxu0 0.0
    %2402 = vmatpush1.msra.mxu0 %v2277
    %2403 = vmatprep.subr.mxu0 0.0
    %2404 = vmatpush1.msra.mxu0 %v2276
    %2405 = vmatprep.subr.mxu0 0.0
    %2406 = vmatpush1.msra.mxu0 %v2275
    %2407 = vmatprep.subr.mxu0 0.0
    %2408 = vmatpush1.msra.mxu0 %v2274
    %2409 = vmatprep.subr.mxu0 0.0
    %2410 = vmatpush1.msra.mxu0 %v2273
    %2411 = vmatprep.subr.mxu0 0.0
    %2412 = vmatpush2.msra.mxu0 0.0
    %2413 = vmatprep.subr.mxu0 0.0
    %2414 = vmatpush2.msra.mxu0 0.0
    %2415 = vmatprep.subr.mxu0 0.0
    %2416 = vmatpush2.msra.mxu0 0.0
    %2417 = vmatprep.subr.mxu0 0.0
    %2418 = vmatpush2.msra.mxu0 0.0
    %2419 = vmatprep.subr.mxu0 0.0
    %2420 = vmatpush2.msra.mxu0 0.0
    %2421 = vmatprep.subr.mxu0 0.0
    %2422 = vmatpush2.msra.mxu0 0.0
    %2423 = vmatprep.subr.mxu0 0.0
    %2424 = vmatpush2.msra.mxu0 0.0
    %2425 = vmatprep.subr.mxu0 0.0
    %2426 = vmatpush2.msra.mxu0 0.0
    %2427 = vmatprep.subr.mxu0 0.0
    %2428 = vmatpush2.msra.mxu0 0.0
    %2429 = vmatprep.subr.mxu0 0.0
    %2430 = vmatpush2.msra.mxu0 0.0
    %2431 = vmatprep.subr.mxu0 0.0
    %2432 = vmatpush2.msra.mxu0 0.0
    %2433 = vmatprep.subr.mxu0 0.0
    %2434 = vmatpush2.msra.mxu0 0.0
    %2435 = vmatprep.subr.mxu0 0.0
    %2436 = vmatpush2.msra.mxu0 0.0
    %2437 = vmatprep.subr.mxu0 0.0
    %2438 = vmatpush2.msra.mxu0 0.0
    %2439 = vmatprep.subr.mxu0 0.0
    %2440 = vmatpush2.msra.mxu0 0.0
    %2441 = vmatprep.subr.mxu0 0.0
    %2442 = vmatpush2.msra.mxu0 0.0
    %2443 = vmatprep.mubr.f32.mxu0 0.0
    %2444 = vmatmul.mubr.f32.gmra.mxu0 %v2374
    %v2445 = vpop.f32.mrf.mxu0
    %v2446 = vadd.f32 %v2370, %v2445
    %v2447 = vpop.f32.mrf.mxu0
    %2448 = vdwg.mxu0
    %v2450 = vlaneseq
    %v2451 = vshrl.u32 %v2450, 7
    %v2452 = vsub.s32 0, %v2451
    %v2453 = vrot.slane %v2294, %v2452
    %v2455 = vadd.f32 %v2446, %v2453
    %v2457 = vsel %vm2295, %v2258, 0
    %2459 = vmatprep.subr.mxu0 0.0
    %2460 = vmatpush1.msra.mxu0 0.0
    %2461 = vmatprep.subr.mxu0 0.0
    %2462 = vmatpush1.msra.mxu0 0.0
    %2463 = vmatprep.subr.mxu0 0.0
    %2464 = vmatpush1.msra.mxu0 0.0
    %2465 = vmatprep.subr.mxu0 0.0
    %2466 = vmatpush1.msra.mxu0 0.0
    %2467 = vmatprep.subr.mxu0 0.0
    %2468 = vmatpush1.msra.mxu0 0.0
    %2469 = vmatprep.subr.mxu0 0.0
    %2470 = vmatpush1.msra.mxu0 0.0
    %2471 = vmatprep.subr.mxu0 0.0
    %2472 = vmatpush1.msra.mxu0 %v2301
    %2473 = vmatprep.subr.mxu0 0.0
    %2474 = vmatpush1.msra.mxu0 %v2292
    %2475 = vmatprep.subr.mxu0 0.0
    %2476 = vmatpush1.msra.mxu0 %v2291
    %2477 = vmatprep.subr.mxu0 0.0
    %2478 = vmatpush1.msra.mxu0 %v2290
    %2479 = vmatprep.subr.mxu0 0.0
    %2480 = vmatpush1.msra.mxu0 %v2289
    %2481 = vmatprep.subr.mxu0 0.0
    %2482 = vmatpush1.msra.mxu0 %v2288
    %2483 = vmatprep.subr.mxu0 0.0
    %2484 = vmatpush1.msra.mxu0 %v2287
    %2485 = vmatprep.subr.mxu0 0.0
    %2486 = vmatpush1.msra.mxu0 %v2286
    %2487 = vmatprep.subr.mxu0 0.0
    %2488 = vmatpush1.msra.mxu0 %v2285
    %2489 = vmatprep.subr.mxu0 0.0
    %2490 = vmatpush1.msra.mxu0 %v2284
    %2491 = vmatprep.subr.mxu0 0.0
    %2492 = vmatpush2.msra.mxu0 0.0
    %2493 = vmatprep.subr.mxu0 0.0
    %2494 = vmatpush2.msra.mxu0 0.0
    %2495 = vmatprep.subr.mxu0 0.0
    %2496 = vmatpush2.msra.mxu0 0.0
    %2497 = vmatprep.subr.mxu0 0.0
    %2498 = vmatpush2.msra.mxu0 0.0
    %2499 = vmatprep.subr.mxu0 0.0
    %2500 = vmatpush2.msra.mxu0 0.0
    %2501 = vmatprep.subr.mxu0 0.0
    %2502 = vmatpush2.msra.mxu0 0.0
    %2503 = vmatprep.subr.mxu0 0.0
    %2504 = vmatpush2.msra.mxu0 0.0
    %2505 = vmatprep.subr.mxu0 0.0
    %2506 = vmatpush2.msra.mxu0 0.0
    %2507 = vmatprep.subr.mxu0 0.0
    %2508 = vmatpush2.msra.mxu0 0.0
    %2509 = vmatprep.subr.mxu0 0.0
    %2510 = vmatpush2.msra.mxu0 0.0
    %2511 = vmatprep.subr.mxu0 0.0
    %2512 = vmatpush2.msra.mxu0 0.0
    %2513 = vmatprep.subr.mxu0 0.0
    %2514 = vmatpush2.msra.mxu0 0.0
    %2515 = vmatprep.subr.mxu0 0.0
    %2516 = vmatpush2.msra.mxu0 0.0
    %2517 = vmatprep.subr.mxu0 0.0
    %2518 = vmatpush2.msra.mxu0 0.0
    %2519 = vmatprep.subr.mxu0 0.0
    %2520 = vmatpush2.msra.mxu0 0.0
    %2521 = vmatprep.subr.mxu0 0.0
    %2522 = vmatpush2.msra.mxu0 0.0
    %2523 = vmatprep.mubr.f32.mxu0 0.0
    %2524 = vmatmul.mubr.f32.gmra.mxu0 %v2457
    %v2525 = vpop.f32.mrf.mxu0
    %v2526 = vadd.f32 0.0, %v2525
    %v2527 = vpop.f32.mrf.mxu0
    %2528 = vdwg.mxu0
    %2529 = vmatprep.subr.mxu0 0.0
    %2530 = vmatpush1.msra.mxu0 0.0
    %2531 = vmatprep.subr.mxu0 0.0
    %2532 = vmatpush1.msra.mxu0 0.0
    %2533 = vmatprep.subr.mxu0 0.0
    %2534 = vmatpush1.msra.mxu0 0.0
    %2535 = vmatprep.subr.mxu0 0.0
    %2536 = vmatpush1.msra.mxu0 0.0
    %2537 = vmatprep.subr.mxu0 0.0
    %2538 = vmatpush1.msra.mxu0 0.0
    %2539 = vmatprep.subr.mxu0 0.0
    %2540 = vmatpush1.msra.mxu0 0.0
    %2541 = vmatprep.subr.mxu0 0.0
    %2542 = vmatpush1.msra.mxu0 %v2377
    %2543 = vmatprep.subr.mxu0 0.0
    %2544 = vmatpush1.msra.mxu0 %v2281
    %2545 = vmatprep.subr.mxu0 0.0
    %2546 = vmatpush1.msra.mxu0 %v2280
    %2547 = vmatprep.subr.mxu0 0.0
    %2548 = vmatpush1.msra.mxu0 %v2279
    %2549 = vmatprep.subr.mxu0 0.0
    %2550 = vmatpush1.msra.mxu0 %v2278
    %2551 = vmatprep.subr.mxu0 0.0
    %2552 = vmatpush1.msra.mxu0 %v2277
    %2553 = vmatprep.subr.mxu0 0.0
    %2554 = vmatpush1.msra.mxu0 %v2276
    %2555 = vmatprep.subr.mxu0 0.0
    %2556 = vmatpush1.msra.mxu0 %v2275
    %2557 = vmatprep.subr.mxu0 0.0
    %2558 = vmatpush1.msra.mxu0 %v2274
    %2559 = vmatprep.subr.mxu0 0.0
    %2560 = vmatpush1.msra.mxu0 %v2273
    %2561 = vmatprep.subr.mxu0 0.0
    %2562 = vmatpush2.msra.mxu0 0.0
    %2563 = vmatprep.subr.mxu0 0.0
    %2564 = vmatpush2.msra.mxu0 0.0
    %2565 = vmatprep.subr.mxu0 0.0
    %2566 = vmatpush2.msra.mxu0 0.0
    %2567 = vmatprep.subr.mxu0 0.0
    %2568 = vmatpush2.msra.mxu0 0.0
    %2569 = vmatprep.subr.mxu0 0.0
    %2570 = vmatpush2.msra.mxu0 0.0
    %2571 = vmatprep.subr.mxu0 0.0
    %2572 = vmatpush2.msra.mxu0 0.0
    %2573 = vmatprep.subr.mxu0 0.0
    %2574 = vmatpush2.msra.mxu0 0.0
    %2575 = vmatprep.subr.mxu0 0.0
    %2576 = vmatpush2.msra.mxu0 0.0
    %2577 = vmatprep.subr.mxu0 0.0
    %2578 = vmatpush2.msra.mxu0 0.0
    %2579 = vmatprep.subr.mxu0 0.0
    %2580 = vmatpush2.msra.mxu0 0.0
    %2581 = vmatprep.subr.mxu0 0.0
    %2582 = vmatpush2.msra.mxu0 0.0
    %2583 = vmatprep.subr.mxu0 0.0
    %2584 = vmatpush2.msra.mxu0 0.0
    %2585 = vmatprep.subr.mxu0 0.0
    %2586 = vmatpush2.msra.mxu0 0.0
    %2587 = vmatprep.subr.mxu0 0.0
    %2588 = vmatpush2.msra.mxu0 0.0
    %2589 = vmatprep.subr.mxu0 0.0
    %2590 = vmatpush2.msra.mxu0 0.0
    %2591 = vmatprep.subr.mxu0 0.0
    %2592 = vmatpush2.msra.mxu0 0.0
    %2593 = vmatprep.mubr.f32.mxu0 0.0
    %2594 = vmatmul.mubr.f32.gmra.mxu0 %v2297
    %v2595 = vpop.f32.mrf.mxu0
    %v2596 = vadd.f32 %v2526, %v2595
    %v2597 = vpop.f32.mrf.mxu0
    %2598 = vdwg.mxu0
    %v2599 = vadd.f32 %v2596, %v2453
    %v2601 = vsel %vm2295, %v2265, 0
    %2603 = vmatprep.subr.mxu0 0.0
    %2604 = vmatpush1.msra.mxu0 0.0
    %2605 = vmatprep.subr.mxu0 0.0
    %2606 = vmatpush1.msra.mxu0 0.0
    %2607 = vmatprep.subr.mxu0 0.0
    %2608 = vmatpush1.msra.mxu0 0.0
    %2609 = vmatprep.subr.mxu0 0.0
    %2610 = vmatpush1.msra.mxu0 0.0
    %2611 = vmatprep.subr.mxu0 0.0
    %2612 = vmatpush1.msra.mxu0 0.0
    %2613 = vmatprep.subr.mxu0 0.0
    %2614 = vmatpush1.msra.mxu0 0.0
    %2615 = vmatprep.subr.mxu0 0.0
    %2616 = vmatpush1.msra.mxu0 %v2301
    %2617 = vmatprep.subr.mxu0 0.0
    %2618 = vmatpush1.msra.mxu0 %v2292
    %2619 = vmatprep.subr.mxu0 0.0
    %2620 = vmatpush1.msra.mxu0 %v2291
    %2621 = vmatprep.subr.mxu0 0.0
    %2622 = vmatpush1.msra.mxu0 %v2290
    %2623 = vmatprep.subr.mxu0 0.0
    %2624 = vmatpush1.msra.mxu0 %v2289
    %2625 = vmatprep.subr.mxu0 0.0
    %2626 = vmatpush1.msra.mxu0 %v2288
    %2627 = vmatprep.subr.mxu0 0.0
    %2628 = vmatpush1.msra.mxu0 %v2287
    %2629 = vmatprep.subr.mxu0 0.0
    %2630 = vmatpush1.msra.mxu0 %v2286
    %2631 = vmatprep.subr.mxu0 0.0
    %2632 = vmatpush1.msra.mxu0 %v2285
    %2633 = vmatprep.subr.mxu0 0.0
    %2634 = vmatpush1.msra.mxu0 %v2284
    %2635 = vmatprep.subr.mxu0 0.0
    %2636 = vmatpush2.msra.mxu0 0.0
    %2637 = vmatprep.subr.mxu0 0.0
    %2638 = vmatpush2.msra.mxu0 0.0
    %2639 = vmatprep.subr.mxu0 0.0
    %2640 = vmatpush2.msra.mxu0 0.0
    %2641 = vmatprep.subr.mxu0 0.0
    %2642 = vmatpush2.msra.mxu0 0.0
    %2643 = vmatprep.subr.mxu0 0.0
    %2644 = vmatpush2.msra.mxu0 0.0
    %2645 = vmatprep.subr.mxu0 0.0
    %2646 = vmatpush2.msra.mxu0 0.0
    %2647 = vmatprep.subr.mxu0 0.0
    %2648 = vmatpush2.msra.mxu0 0.0
    %2649 = vmatprep.subr.mxu0 0.0
    %2650 = vmatpush2.msra.mxu0 0.0
    %2651 = vmatprep.subr.mxu0 0.0
    %2652 = vmatpush2.msra.mxu0 0.0
    %2653 = vmatprep.subr.mxu0 0.0
    %2654 = vmatpush2.msra.mxu0 0.0
    %2655 = vmatprep.subr.mxu0 0.0
    %2656 = vmatpush2.msra.mxu0 0.0
    %2657 = vmatprep.subr.mxu0 0.0
    %2658 = vmatpush2.msra.mxu0 0.0
    %2659 = vmatprep.subr.mxu0 0.0
    %2660 = vmatpush2.msra.mxu0 0.0
    %2661 = vmatprep.subr.mxu0 0.0
    %2662 = vmatpush2.msra.mxu0 0.0
    %2663 = vmatprep.subr.mxu0 0.0
    %2664 = vmatpush2.msra.mxu0 0.0
    %2665 = vmatprep.subr.mxu0 0.0
    %2666 = vmatpush2.msra.mxu0 0.0
    %2667 = vmatprep.mubr.f32.mxu0 0.0
    %2668 = vmatmul.mubr.f32.gmra.mxu0 %v2601
    %v2669 = vpop.f32.mrf.mxu0
    %v2670 = vadd.f32 0.0, %v2669
    %v2671 = vpop.f32.mrf.mxu0
    %2672 = vdwg.mxu0
    %2673 = vmatprep.subr.mxu0 0.0
    %2674 = vmatpush1.msra.mxu0 0.0
    %2675 = vmatprep.subr.mxu0 0.0
    %2676 = vmatpush1.msra.mxu0 0.0
    %2677 = vmatprep.subr.mxu0 0.0
    %2678 = vmatpush1.msra.mxu0 0.0
    %2679 = vmatprep.subr.mxu0 0.0
    %2680 = vmatpush1.msra.mxu0 0.0
    %2681 = vmatprep.subr.mxu0 0.0
    %2682 = vmatpush1.msra.mxu0 0.0
    %2683 = vmatprep.subr.mxu0 0.0
    %2684 = vmatpush1.msra.mxu0 0.0
    %2685 = vmatprep.subr.mxu0 0.0
    %2686 = vmatpush1.msra.mxu0 %v2377
    %2687 = vmatprep.subr.mxu0 0.0
    %2688 = vmatpush1.msra.mxu0 %v2281
    %2689 = vmatprep.subr.mxu0 0.0
    %2690 = vmatpush1.msra.mxu0 %v2280
    %2691 = vmatprep.subr.mxu0 0.0
    %2692 = vmatpush1.msra.mxu0 %v2279
    %2693 = vmatprep.subr.mxu0 0.0
    %2694 = vmatpush1.msra.mxu0 %v2278
    %2695 = vmatprep.subr.mxu0 0.0
    %2696 = vmatpush1.msra.mxu0 %v2277
    %2697 = vmatprep.subr.mxu0 0.0
    %2698 = vmatpush1.msra.mxu0 %v2276
    %2699 = vmatprep.subr.mxu0 0.0
    %2700 = vmatpush1.msra.mxu0 %v2275
    %2701 = vmatprep.subr.mxu0 0.0
    %2702 = vmatpush1.msra.mxu0 %v2274
    %2703 = vmatprep.subr.mxu0 0.0
    %2704 = vmatpush1.msra.mxu0 %v2273
    %2705 = vmatprep.subr.mxu0 0.0
    %2706 = vmatpush2.msra.mxu0 0.0
    %2707 = vmatprep.subr.mxu0 0.0
    %2708 = vmatpush2.msra.mxu0 0.0
    %2709 = vmatprep.subr.mxu0 0.0
    %2710 = vmatpush2.msra.mxu0 0.0
    %2711 = vmatprep.subr.mxu0 0.0
    %2712 = vmatpush2.msra.mxu0 0.0
    %2713 = vmatprep.subr.mxu0 0.0
    %2714 = vmatpush2.msra.mxu0 0.0
    %2715 = vmatprep.subr.mxu0 0.0
    %2716 = vmatpush2.msra.mxu0 0.0
    %2717 = vmatprep.subr.mxu0 0.0
    %2718 = vmatpush2.msra.mxu0 0.0
    %2719 = vmatprep.subr.mxu0 0.0
    %2720 = vmatpush2.msra.mxu0 0.0
    %2721 = vmatprep.subr.mxu0 0.0
    %2722 = vmatpush2.msra.mxu0 0.0
    %2723 = vmatprep.subr.mxu0 0.0
    %2724 = vmatpush2.msra.mxu0 0.0
    %2725 = vmatprep.subr.mxu0 0.0
    %2726 = vmatpush2.msra.mxu0 0.0
    %2727 = vmatprep.subr.mxu0 0.0
    %2728 = vmatpush2.msra.mxu0 0.0
    %2729 = vmatprep.subr.mxu0 0.0
    %2730 = vmatpush2.msra.mxu0 0.0
    %2731 = vmatprep.subr.mxu0 0.0
    %2732 = vmatpush2.msra.mxu0 0.0
    %2733 = vmatprep.subr.mxu0 0.0
    %2734 = vmatpush2.msra.mxu0 0.0
    %2735 = vmatprep.subr.mxu0 0.0
    %2736 = vmatpush2.msra.mxu0 0.0
    %2737 = vmatprep.mubr.f32.mxu0 0.0
    %2738 = vmatmul.mubr.f32.gmra.mxu0 %v2457
    %v2739 = vpop.f32.mrf.mxu0
    %v2740 = vadd.f32 %v2670, %v2739
    %v2741 = vpop.f32.mrf.mxu0
    %2742 = vdwg.mxu0
    %v2743 = vadd.f32 %v2740, %v2453
    %v2745 = vsel %vm2295, %v2272, 0
    %2747 = vmatprep.subr.mxu0 0.0
    %2748 = vmatpush1.msra.mxu0 0.0
    %2749 = vmatprep.subr.mxu0 0.0
    %2750 = vmatpush1.msra.mxu0 0.0
    %2751 = vmatprep.subr.mxu0 0.0
    %2752 = vmatpush1.msra.mxu0 0.0
    %2753 = vmatprep.subr.mxu0 0.0
    %2754 = vmatpush1.msra.mxu0 0.0
    %2755 = vmatprep.subr.mxu0 0.0
    %2756 = vmatpush1.msra.mxu0 0.0
    %2757 = vmatprep.subr.mxu0 0.0
    %2758 = vmatpush1.msra.mxu0 0.0
    %2759 = vmatprep.subr.mxu0 0.0
    %2760 = vmatpush1.msra.mxu0 %v2301
    %2761 = vmatprep.subr.mxu0 0.0
    %2762 = vmatpush1.msra.mxu0 %v2292
    %2763 = vmatprep.subr.mxu0 0.0
    %2764 = vmatpush1.msra.mxu0 %v2291
    %2765 = vmatprep.subr.mxu0 0.0
    %2766 = vmatpush1.msra.mxu0 %v2290
    %2767 = vmatprep.subr.mxu0 0.0
    %2768 = vmatpush1.msra.mxu0 %v2289
    %2769 = vmatprep.subr.mxu0 0.0
    %2770 = vmatpush1.msra.mxu0 %v2288
    %2771 = vmatprep.subr.mxu0 0.0
    %2772 = vmatpush1.msra.mxu0 %v2287
    %2773 = vmatprep.subr.mxu0 0.0
    %2774 = vmatpush1.msra.mxu0 %v2286
    %2775 = vmatprep.subr.mxu0 0.0
    %2776 = vmatpush1.msra.mxu0 %v2285
    %2777 = vmatprep.subr.mxu0 0.0
    %2778 = vmatpush1.msra.mxu0 %v2284
    %2779 = vmatprep.subr.mxu0 0.0
    %2780 = vmatpush2.msra.mxu0 0.0
    %2781 = vmatprep.subr.mxu0 0.0
    %2782 = vmatpush2.msra.mxu0 0.0
    %2783 = vmatprep.subr.mxu0 0.0
    %2784 = vmatpush2.msra.mxu0 0.0
    %2785 = vmatprep.subr.mxu0 0.0
    %2786 = vmatpush2.msra.mxu0 0.0
    %2787 = vmatprep.subr.mxu0 0.0
    %2788 = vmatpush2.msra.mxu0 0.0
    %2789 = vmatprep.subr.mxu0 0.0
    %2790 = vmatpush2.msra.mxu0 0.0
    %2791 = vmatprep.subr.mxu0 0.0
    %2792 = vmatpush2.msra.mxu0 0.0
    %2793 = vmatprep.subr.mxu0 0.0
    %2794 = vmatpush2.msra.mxu0 0.0
    %2795 = vmatprep.subr.mxu0 0.0
    %2796 = vmatpush2.msra.mxu0 0.0
    %2797 = vmatprep.subr.mxu0 0.0
    %2798 = vmatpush2.msra.mxu0 0.0
    %2799 = vmatprep.subr.mxu0 0.0
    %2800 = vmatpush2.msra.mxu0 0.0
    %2801 = vmatprep.subr.mxu0 0.0
    %2802 = vmatpush2.msra.mxu0 0.0
    %2803 = vmatprep.subr.mxu0 0.0
    %2804 = vmatpush2.msra.mxu0 0.0
    %2805 = vmatprep.subr.mxu0 0.0
    %2806 = vmatpush2.msra.mxu0 0.0
    %2807 = vmatprep.subr.mxu0 0.0
    %2808 = vmatpush2.msra.mxu0 0.0
    %2809 = vmatprep.subr.mxu0 0.0
    %2810 = vmatpush2.msra.mxu0 0.0
    %2811 = vmatprep.mubr.f32.mxu0 0.0
    %2812 = vmatmul.mubr.f32.gmra.mxu0 %v2745
    %v2813 = vpop.f32.mrf.mxu0
    %v2814 = vadd.f32 0.0, %v2813
    %v2815 = vpop.f32.mrf.mxu0
    %2816 = vdwg.mxu0
    %2817 = vmatprep.subr.mxu0 0.0
    %2818 = vmatpush1.msra.mxu0 0.0
    %2819 = vmatprep.subr.mxu0 0.0
    %2820 = vmatpush1.msra.mxu0 0.0
    %2821 = vmatprep.subr.mxu0 0.0
    %2822 = vmatpush1.msra.mxu0 0.0
    %2823 = vmatprep.subr.mxu0 0.0
    %2824 = vmatpush1.msra.mxu0 0.0
    %2825 = vmatprep.subr.mxu0 0.0
    %2826 = vmatpush1.msra.mxu0 0.0
    %2827 = vmatprep.subr.mxu0 0.0
    %2828 = vmatpush1.msra.mxu0 0.0
    %2829 = vmatprep.subr.mxu0 0.0
    %2830 = vmatpush1.msra.mxu0 %v2377
    %2831 = vmatprep.subr.mxu0 0.0
    %2832 = vmatpush1.msra.mxu0 %v2281
    %2833 = vmatprep.subr.mxu0 0.0
    %2834 = vmatpush1.msra.mxu0 %v2280
    %2835 = vmatprep.subr.mxu0 0.0
    %2836 = vmatpush1.msra.mxu0 %v2279
    %2837 = vmatprep.subr.mxu0 0.0
    %2838 = vmatpush1.msra.mxu0 %v2278
    %2839 = vmatprep.subr.mxu0 0.0
    %2840 = vmatpush1.msra.mxu0 %v2277
    %2841 = vmatprep.subr.mxu0 0.0
    %2842 = vmatpush1.msra.mxu0 %v2276
    %2843 = vmatprep.subr.mxu0 0.0
    %2844 = vmatpush1.msra.mxu0 %v2275
    %2845 = vmatprep.subr.mxu0 0.0
    %2846 = vmatpush1.msra.mxu0 %v2274
    %2847 = vmatprep.subr.mxu0 0.0
    %2848 = vmatpush1.msra.mxu0 %v2273
    %2849 = vmatprep.subr.mxu0 0.0
    %2850 = vmatpush2.msra.mxu0 0.0
    %2851 = vmatprep.subr.mxu0 0.0
    %2852 = vmatpush2.msra.mxu0 0.0
    %2853 = vmatprep.subr.mxu0 0.0
    %2854 = vmatpush2.msra.mxu0 0.0
    %2855 = vmatprep.subr.mxu0 0.0
    %2856 = vmatpush2.msra.mxu0 0.0
    %2857 = vmatprep.subr.mxu0 0.0
    %2858 = vmatpush2.msra.mxu0 0.0
    %2859 = vmatprep.subr.mxu0 0.0
    %2860 = vmatpush2.msra.mxu0 0.0
    %2861 = vmatprep.subr.mxu0 0.0
    %2862 = vmatpush2.msra.mxu0 0.0
    %2863 = vmatprep.subr.mxu0 0.0
    %2864 = vmatpush2.msra.mxu0 0.0
    %2865 = vmatprep.subr.mxu0 0.0
    %2866 = vmatpush2.msra.mxu0 0.0
    %2867 = vmatprep.subr.mxu0 0.0
    %2868 = vmatpush2.msra.mxu0 0.0
    %2869 = vmatprep.subr.mxu0 0.0
    %2870 = vmatpush2.msra.mxu0 0.0
    %2871 = vmatprep.subr.mxu0 0.0
    %2872 = vmatpush2.msra.mxu0 0.0
    %2873 = vmatprep.subr.mxu0 0.0
    %2874 = vmatpush2.msra.mxu0 0.0
    %2875 = vmatprep.subr.mxu0 0.0
    %2876 = vmatpush2.msra.mxu0 0.0
    %2877 = vmatprep.subr.mxu0 0.0
    %2878 = vmatpush2.msra.mxu0 0.0
    %2879 = vmatprep.subr.mxu0 0.0
    %2880 = vmatpush2.msra.mxu0 0.0
    %2881 = vmatprep.mubr.f32.mxu0 0.0
    %2882 = vmatmul.mubr.f32.gmra.mxu0 %v2601
    %v2883 = vpop.f32.mrf.mxu0
    %v2884 = vadd.f32 %v2814, %v2883
    %v2885 = vpop.f32.mrf.mxu0
    %2886 = vdwg.mxu0
    %v2887 = vadd.f32 %v2884, %v2453
    %v2888 = vmax.f32 %v2455, %v2599
    %2890 = vrot.lane.b32.xlu0 %v2888, 96
    %v2891 = vpop.permute.xlu0 %2890
    %v2893 = vmax.f32 %v2888, %v2891
    %v2894 = vmax.f32 %v2893, 0.0
    %v2895 = vld [vmem:[%s5] sm:$0xff]
    %v2896 = vld [vmem:[%s5 + $0x8] sm:$0xff]
    %v2897 = vld [vmem:[%s5 + $0x10] sm:$0xff]
    %v2898 = vld [vmem:[%s5 + $0x18] sm:$0xff]
    %v2899 = vld [vmem:[%s5 + $0x20] sm:$0xff]
    %v2900 = vld [vmem:[%s5 + $0x28] sm:$0xff]
    %v2901 = vld [vmem:[%s5 + $0x30] sm:$0xff]
    %v2902 = vld [vmem:[%s5 + $0x38] sm:$0xff]
    %v2903 = vld [vmem:[%s5 + $0x40] sm:$0xff]
    %v2904 = vld [vmem:[%s5 + $0x48] sm:$0xff]
    %v2905 = vld [vmem:[%s5 + $0x50] sm:$0xff]
    %v2906 = vld [vmem:[%s5 + $0x58] sm:$0xff]
    %v2907 = vmax.f32 %v2599, %v2743
    %2909 = vrot.lane.b32.xlu0 %v2907, 96
    %v2910 = vpop.permute.xlu0 %2909
    %v2912 = vmax.f32 %v2907, %v2910
    %v2913 = vmax.f32 %v2912, 0.0
    %s2914 = scalar_lea.vmem %s5, 96
    %v2915 = vld [vmem:[%s2914] sm:$0xff]
    %v2916 = vld [vmem:[%s2914 + $0x8] sm:$0xff]
    %v2917 = vld [vmem:[%s2914 + $0x10] sm:$0xff]
    %v2918 = vld [vmem:[%s2914 + $0x18] sm:$0xff]
    %v2919 = vld [vmem:[%s2914 + $0x20] sm:$0xff]
    %v2920 = vld [vmem:[%s2914 + $0x28] sm:$0xff]
    %v2921 = vld [vmem:[%s2914 + $0x30] sm:$0xff]
    %v2922 = vld [vmem:[%s2914 + $0x38] sm:$0xff]
    %v2923 = vld [vmem:[%s2914 + $0x40] sm:$0xff]
    %v2924 = vld [vmem:[%s2914 + $0x48] sm:$0xff]
    %v2925 = vld [vmem:[%s2914 + $0x50] sm:$0xff]
    %v2926 = vld [vmem:[%s2914 + $0x58] sm:$0xff]
    %vm2927 = vcmask 785408
    %v2929 = vsel %vm2927, %v2913, 0
    %2931 = vmatprep.subr.mxu0 0.0
    %2932 = vmatpush1.msra.mxu0 0.0
    %2933 = vmatprep.subr.mxu0 0.0
    %2934 = vmatpush1.msra.mxu0 0.0
    %2935 = vmatprep.subr.mxu0 0.0
    %2936 = vmatpush1.msra.mxu0 0.0
    %2937 = vmatprep.subr.mxu0 0.0
    %2938 = vmatpush1.msra.mxu0 0.0
    %2939 = vmatprep.subr.mxu0 0.0
    %2940 = vmatpush1.msra.mxu0 %v2926
    %2941 = vmatprep.subr.mxu0 0.0
    %2942 = vmatpush1.msra.mxu0 %v2925
    %2943 = vmatprep.subr.mxu0 0.0
    %2944 = vmatpush1.msra.mxu0 %v2924
    %2945 = vmatprep.subr.mxu0 0.0
    %2946 = vmatpush1.msra.mxu0 %v2923
    %2947 = vmatprep.subr.mxu0 0.0
    %2948 = vmatpush1.msra.mxu0 %v2922
    %2949 = vmatprep.subr.mxu0 0.0
    %2950 = vmatpush1.msra.mxu0 %v2921
    %2951 = vmatprep.subr.mxu0 0.0
    %2952 = vmatpush1.msra.mxu0 %v2920
    %2953 = vmatprep.subr.mxu0 0.0
    %2954 = vmatpush1.msra.mxu0 %v2919
    %2955 = vmatprep.subr.mxu0 0.0
    %2956 = vmatpush1.msra.mxu0 %v2918
    %2957 = vmatprep.subr.mxu0 0.0
    %2958 = vmatpush1.msra.mxu0 %v2917
    %2959 = vmatprep.subr.mxu0 0.0
    %2960 = vmatpush1.msra.mxu0 %v2916
    %2961 = vmatprep.subr.mxu0 0.0
    %2962 = vmatpush1.msra.mxu0 %v2915
    %2963 = vmatprep.subr.mxu0 0.0
    %2964 = vmatpush2.msra.mxu0 0.0
    %2965 = vmatprep.subr.mxu0 0.0
    %2966 = vmatpush2.msra.mxu0 0.0
    %2967 = vmatprep.subr.mxu0 0.0
    %2968 = vmatpush2.msra.mxu0 0.0
    %2969 = vmatprep.subr.mxu0 0.0
    %2970 = vmatpush2.msra.mxu0 0.0
    %2971 = vmatprep.subr.mxu0 0.0
    %2972 = vmatpush2.msra.mxu0 0.0
    %2973 = vmatprep.subr.mxu0 0.0
    %2974 = vmatpush2.msra.mxu0 0.0
    %2975 = vmatprep.subr.mxu0 0.0
    %2976 = vmatpush2.msra.mxu0 0.0
    %2977 = vmatprep.subr.mxu0 0.0
    %2978 = vmatpush2.msra.mxu0 0.0
    %2979 = vmatprep.subr.mxu0 0.0
    %2980 = vmatpush2.msra.mxu0 0.0
    %2981 = vmatprep.subr.mxu0 0.0
    %2982 = vmatpush2.msra.mxu0 0.0
    %2983 = vmatprep.subr.mxu0 0.0
    %2984 = vmatpush2.msra.mxu0 0.0
    %2985 = vmatprep.subr.mxu0 0.0
    %2986 = vmatpush2.msra.mxu0 0.0
    %2987 = vmatprep.subr.mxu0 0.0
    %2988 = vmatpush2.msra.mxu0 0.0
    %2989 = vmatprep.subr.mxu0 0.0
    %2990 = vmatpush2.msra.mxu0 0.0
    %2991 = vmatprep.subr.mxu0 0.0
    %2992 = vmatpush2.msra.mxu0 0.0
    %2993 = vmatprep.subr.mxu0 0.0
    %2994 = vmatpush2.msra.mxu0 0.0
    %2995 = vmatprep.mubr.f32.mxu0 0.0
    %2996 = vmatmul.mubr.f32.gmra.mxu0 %v2929
    %v2997 = vpop.f32.mrf.mxu0
    %v2998 = vadd.f32 0.0, %v2997
    %v2999 = vpop.f32.mrf.mxu0
    %3000 = vdwg.mxu0
    %v3002 = vsel %vm2927, %v2894, 0
    %3004 = vmatprep.subr.mxu0 0.0
    %3005 = vmatpush1.msra.mxu0 0.0
    %3006 = vmatprep.subr.mxu0 0.0
    %3007 = vmatpush1.msra.mxu0 0.0
    %3008 = vmatprep.subr.mxu0 0.0
    %3009 = vmatpush1.msra.mxu0 0.0
    %3010 = vmatprep.subr.mxu0 0.0
    %3011 = vmatpush1.msra.mxu0 0.0
    %3012 = vmatprep.subr.mxu0 0.0
    %3013 = vmatpush1.msra.mxu0 %v2906
    %3014 = vmatprep.subr.mxu0 0.0
    %3015 = vmatpush1.msra.mxu0 %v2905
    %3016 = vmatprep.subr.mxu0 0.0
    %3017 = vmatpush1.msra.mxu0 %v2904
    %3018 = vmatprep.subr.mxu0 0.0
    %3019 = vmatpush1.msra.mxu0 %v2903
    %3020 = vmatprep.subr.mxu0 0.0
    %3021 = vmatpush1.msra.mxu0 %v2902
    %3022 = vmatprep.subr.mxu0 0.0
    %3023 = vmatpush1.msra.mxu0 %v2901
    %3024 = vmatprep.subr.mxu0 0.0
    %3025 = vmatpush1.msra.mxu0 %v2900
    %3026 = vmatprep.subr.mxu0 0.0
    %3027 = vmatpush1.msra.mxu0 %v2899
    %3028 = vmatprep.subr.mxu0 0.0
    %3029 = vmatpush1.msra.mxu0 %v2898
    %3030 = vmatprep.subr.mxu0 0.0
    %3031 = vmatpush1.msra.mxu0 %v2897
    %3032 = vmatprep.subr.mxu0 0.0
    %3033 = vmatpush1.msra.mxu0 %v2896
    %3034 = vmatprep.subr.mxu0 0.0
    %3035 = vmatpush1.msra.mxu0 %v2895
    %3036 = vmatprep.subr.mxu0 0.0
    %3037 = vmatpush2.msra.mxu0 0.0
    %3038 = vmatprep.subr.mxu0 0.0
    %3039 = vmatpush2.msra.mxu0 0.0
    %3040 = vmatprep.subr.mxu0 0.0
    %3041 = vmatpush2.msra.mxu0 0.0
    %3042 = vmatprep.subr.mxu0 0.0
    %3043 = vmatpush2.msra.mxu0 0.0
    %3044 = vmatprep.subr.mxu0 0.0
    %3045 = vmatpush2.msra.mxu0 0.0
    %3046 = vmatprep.subr.mxu0 0.0
    %3047 = vmatpush2.msra.mxu0 0.0
    %3048 = vmatprep.subr.mxu0 0.0
    %3049 = vmatpush2.msra.mxu0 0.0
    %3050 = vmatprep.subr.mxu0 0.0
    %3051 = vmatpush2.msra.mxu0 0.0
    %3052 = vmatprep.subr.mxu0 0.0
    %3053 = vmatpush2.msra.mxu0 0.0
    %3054 = vmatprep.subr.mxu0 0.0
    %3055 = vmatpush2.msra.mxu0 0.0
    %3056 = vmatprep.subr.mxu0 0.0
    %3057 = vmatpush2.msra.mxu0 0.0
    %3058 = vmatprep.subr.mxu0 0.0
    %3059 = vmatpush2.msra.mxu0 0.0
    %3060 = vmatprep.subr.mxu0 0.0
    %3061 = vmatpush2.msra.mxu0 0.0
    %3062 = vmatprep.subr.mxu0 0.0
    %3063 = vmatpush2.msra.mxu0 0.0
    %3064 = vmatprep.subr.mxu0 0.0
    %3065 = vmatpush2.msra.mxu0 0.0
    %3066 = vmatprep.subr.mxu0 0.0
    %3067 = vmatpush2.msra.mxu0 0.0
    %3068 = vmatprep.mubr.f32.mxu0 0.0
    %3069 = vmatmul.mubr.f32.gmra.mxu0 %v3002
    %v3070 = vpop.f32.mrf.mxu0
    %v3071 = vadd.f32 %v2998, %v3070
    %v3072 = vpop.f32.mrf.mxu0
    %3073 = vdwg.mxu0
    %v3074 = vmax.f32 %v2743, %v2887
    %3076 = vrot.lane.b32.xlu0 %v3074, 96
    %v3077 = vpop.permute.xlu0 %3076
    %v3079 = vmax.f32 %v3074, %v3077
    %v3080 = vmax.f32 %v3079, 0.0
    %s3081 = scalar_lea.vmem %s5, 192
    %v3082 = vld [vmem:[%s3081] sm:$0xff]
    %v3083 = vld [vmem:[%s3081 + $0x8] sm:$0xff]
    %v3084 = vld [vmem:[%s3081 + $0x10] sm:$0xff]
    %v3085 = vld [vmem:[%s3081 + $0x18] sm:$0xff]
    %v3086 = vld [vmem:[%s3081 + $0x20] sm:$0xff]
    %v3087 = vld [vmem:[%s3081 + $0x28] sm:$0xff]
    %v3088 = vld [vmem:[%s3081 + $0x30] sm:$0xff]
    %v3089 = vld [vmem:[%s3081 + $0x38] sm:$0xff]
    %v3090 = vld [vmem:[%s3081 + $0x40] sm:$0xff]
    %v3091 = vld [vmem:[%s3081 + $0x48] sm:$0xff]
    %v3092 = vld [vmem:[%s3081 + $0x50] sm:$0xff]
    %v3093 = vld [vmem:[%s3081 + $0x58] sm:$0xff]
    %v3095 = vsel %vm2927, %v3080, 0
    %3097 = vmatprep.subr.mxu0 0.0
    %3098 = vmatpush1.msra.mxu0 0.0
    %3099 = vmatprep.subr.mxu0 0.0
    %3100 = vmatpush1.msra.mxu0 0.0
    %3101 = vmatprep.subr.mxu0 0.0
    %3102 = vmatpush1.msra.mxu0 0.0
    %3103 = vmatprep.subr.mxu0 0.0
    %3104 = vmatpush1.msra.mxu0 0.0
    %3105 = vmatprep.subr.mxu0 0.0
    %3106 = vmatpush1.msra.mxu0 %v3093
    %3107 = vmatprep.subr.mxu0 0.0
    %3108 = vmatpush1.msra.mxu0 %v3092
    %3109 = vmatprep.subr.mxu0 0.0
    %3110 = vmatpush1.msra.mxu0 %v3091
    %3111 = vmatprep.subr.mxu0 0.0
    %3112 = vmatpush1.msra.mxu0 %v3090
    %3113 = vmatprep.subr.mxu0 0.0
    %3114 = vmatpush1.msra.mxu0 %v3089
    %3115 = vmatprep.subr.mxu0 0.0
    %3116 = vmatpush1.msra.mxu0 %v3088
    %3117 = vmatprep.subr.mxu0 0.0
    %3118 = vmatpush1.msra.mxu0 %v3087
    %3119 = vmatprep.subr.mxu0 0.0
    %3120 = vmatpush1.msra.mxu0 %v3086
    %3121 = vmatprep.subr.mxu0 0.0
    %3122 = vmatpush1.msra.mxu0 %v3085
    %3123 = vmatprep.subr.mxu0 0.0
    %3124 = vmatpush1.msra.mxu0 %v3084
    %3125 = vmatprep.subr.mxu0 0.0
    %3126 = vmatpush1.msra.mxu0 %v3083
    %3127 = vmatprep.subr.mxu0 0.0
    %3128 = vmatpush1.msra.mxu0 %v3082
    %3129 = vmatprep.subr.mxu0 0.0
    %3130 = vmatpush2.msra.mxu0 0.0
    %3131 = vmatprep.subr.mxu0 0.0
    %3132 = vmatpush2.msra.mxu0 0.0
    %3133 = vmatprep.subr.mxu0 0.0
    %3134 = vmatpush2.msra.mxu0 0.0
    %3135 = vmatprep.subr.mxu0 0.0
    %3136 = vmatpush2.msra.mxu0 0.0
    %3137 = vmatprep.subr.mxu0 0.0
    %3138 = vmatpush2.msra.mxu0 0.0
    %3139 = vmatprep.subr.mxu0 0.0
    %3140 = vmatpush2.msra.mxu0 0.0
    %3141 = vmatprep.subr.mxu0 0.0
    %3142 = vmatpush2.msra.mxu0 0.0
    %3143 = vmatprep.subr.mxu0 0.0
    %3144 = vmatpush2.msra.mxu0 0.0
    %3145 = vmatprep.subr.mxu0 0.0
    %3146 = vmatpush2.msra.mxu0 0.0
    %3147 = vmatprep.subr.mxu0 0.0
    %3148 = vmatpush2.msra.mxu0 0.0
    %3149 = vmatprep.subr.mxu0 0.0
    %3150 = vmatpush2.msra.mxu0 0.0
    %3151 = vmatprep.subr.mxu0 0.0
    %3152 = vmatpush2.msra.mxu0 0.0
    %3153 = vmatprep.subr.mxu0 0.0
    %3154 = vmatpush2.msra.mxu0 0.0
    %3155 = vmatprep.subr.mxu0 0.0
    %3156 = vmatpush2.msra.mxu0 0.0
    %3157 = vmatprep.subr.mxu0 0.0
    %3158 = vmatpush2.msra.mxu0 0.0
    %3159 = vmatprep.subr.mxu0 0.0
    %3160 = vmatpush2.msra.mxu0 0.0
    %3161 = vmatprep.mubr.f32.mxu0 0.0
    %3162 = vmatmul.mubr.f32.gmra.mxu0 %v3095
    %v3163 = vpop.f32.mrf.mxu0
    %v3164 = vadd.f32 0.0, %v3163
    %v3165 = vpop.f32.mrf.mxu0
    %3166 = vdwg.mxu0
    %v3167 = vadd.f32 %v3071, %v3164
    %v3168 = vld [vmem:[%s6] sm:$0x1]
    %v3170 = vlaneseq
    %v3171 = vshrl.u32 %v3170, 7
    %v3172 = vsub.s32 0, %v3171
    %v3173 = vrot.slane %v3168, %v3172
    %v3175 = vadd.f32 %v3167, %v3173
    %v3176 = vmax.f32 %v3175, 0.0
    %v3177 = vld [vmem:[%s7] sm:$0xff]
    %v3178 = vld [vmem:[%s7 + $0x8] sm:$0xff]
    %v3179 = vld [vmem:[%s7 + $0x10] sm:$0xff]
    %v3180 = vld [vmem:[%s7 + $0x18] sm:$0xff]
    %v3181 = vld [vmem:[%s7 + $0x20] sm:$0xff]
    %v3182 = vld [vmem:[%s7 + $0x28] sm:$0xff]
    %v3183 = vld [vmem:[%s7 + $0x30] sm:$0xff]
    %v3184 = vld [vmem:[%s7 + $0x38] sm:$0xff]
    %v3185 = vld [vmem:[%s7 + $0x40] sm:$0xff]
    %v3186 = vld [vmem:[%s7 + $0x48] sm:$0xff]
    %v3187 = vld [vmem:[%s7 + $0x50] sm:$0xff]
    %v3188 = vld [vmem:[%s7 + $0x58] sm:$0xff]
    %v3189 = vld [vmem:[%s7 + $0x60] sm:$0xff]
    %v3190 = vld [vmem:[%s7 + $0x68] sm:$0xff]
    %v3191 = vld [vmem:[%s7 + $0x70] sm:$0xff]
    %v3192 = vld [vmem:[%s7 + $0x78] sm:$0xff]
    %v3193 = vld [vmem:[%s8] sm:$0x1]
    %v3195 = vlaneseq
    %v3196 = vshrl.u32 %v3195, 7
    %v3197 = vsub.s32 0, %v3196
    %v3198 = vrot.slane %v3193, %v3197
    %3200 = vmatprep.subr.mxu0 0.0
    %3201 = vmatpush1.msra.mxu0 %v3192
    %3202 = vmatprep.subr.mxu0 0.0
    %3203 = vmatpush1.msra.mxu0 %v3191
    %3204 = vmatprep.subr.mxu0 0.0
    %3205 = vmatpush1.msra.mxu0 %v3190
    %3206 = vmatprep.subr.mxu0 0.0
    %3207 = vmatpush1.msra.mxu0 %v3189
    %3208 = vmatprep.subr.mxu0 0.0
    %3209 = vmatpush1.msra.mxu0 %v3188
    %3210 = vmatprep.subr.mxu0 0.0
    %3211 = vmatpush1.msra.mxu0 %v3187
    %3212 = vmatprep.subr.mxu0 0.0
    %3213 = vmatpush1.msra.mxu0 %v3186
    %3214 = vmatprep.subr.mxu0 0.0
    %3215 = vmatpush1.msra.mxu0 %v3185
    %3216 = vmatprep.subr.mxu0 0.0
    %3217 = vmatpush1.msra.mxu0 %v3184
    %3218 = vmatprep.subr.mxu0 0.0
    %3219 = vmatpush1.msra.mxu0 %v3183
    %3220 = vmatprep.subr.mxu0 0.0
    %3221 = vmatpush1.msra.mxu0 %v3182
    %3222 = vmatprep.subr.mxu0 0.0
    %3223 = vmatpush1.msra.mxu0 %v3181
    %3224 = vmatprep.subr.mxu0 0.0
    %3225 = vmatpush1.msra.mxu0 %v3180
    %3226 = vmatprep.subr.mxu0 0.0
    %3227 = vmatpush1.msra.mxu0 %v3179
    %3228 = vmatprep.subr.mxu0 0.0
    %3229 = vmatpush1.msra.mxu0 %v3178
    %3230 = vmatprep.subr.mxu0 0.0
    %3231 = vmatpush1.msra.mxu0 %v3177
    %3232 = vmatprep.subr.mxu0 0.0
    %3233 = vmatpush2.msra.mxu0 0.0
    %3234 = vmatprep.subr.mxu0 0.0
    %3235 = vmatpush2.msra.mxu0 0.0
    %3236 = vmatprep.subr.mxu0 0.0
    %3237 = vmatpush2.msra.mxu0 0.0
    %3238 = vmatprep.subr.mxu0 0.0
    %3239 = vmatpush2.msra.mxu0 0.0
    %3240 = vmatprep.subr.mxu0 0.0
    %3241 = vmatpush2.msra.mxu0 0.0
    %3242 = vmatprep.subr.mxu0 0.0
    %3243 = vmatpush2.msra.mxu0 0.0
    %3244 = vmatprep.subr.mxu0 0.0
    %3245 = vmatpush2.msra.mxu0 0.0
    %3246 = vmatprep.subr.mxu0 0.0
    %3247 = vmatpush2.msra.mxu0 0.0
    %3248 = vmatprep.subr.mxu0 0.0
    %3249 = vmatpush2.msra.mxu0 0.0
    %3250 = vmatprep.subr.mxu0 0.0
    %3251 = vmatpush2.msra.mxu0 0.0
    %3252 = vmatprep.subr.mxu0 0.0
    %3253 = vmatpush2.msra.mxu0 0.0
    %3254 = vmatprep.subr.mxu0 0.0
    %3255 = vmatpush2.msra.mxu0 0.0
    %3256 = vmatprep.subr.mxu0 0.0
    %3257 = vmatpush2.msra.mxu0 0.0
    %3258 = vmatprep.subr.mxu0 0.0
    %3259 = vmatpush2.msra.mxu0 0.0
    %3260 = vmatprep.subr.mxu0 0.0
    %3261 = vmatpush2.msra.mxu0 0.0
    %3262 = vmatprep.subr.mxu0 0.0
    %3263 = vmatpush2.msra.mxu0 0.0
    %3264 = vmatprep.mubr.f32.mxu0 0.0
    %3265 = vmatmul.mubr.f32.gmra.mxu0 %v3176
    %v3266 = vpop.f32.mrf.mxu0
    %v3267 = vadd.f32 %v3198, %v3266
    %v3268 = vpop.f32.mrf.mxu0
    %3269 = vdwg.mxu0
    %vm3270 = vcmask 48128
    %v3271 = vsel %vm3270, %v3267, -inf
    %3272 = vmax.xlane.f32.xlu0 %v3271
    %v3273 = vpop.xlane.xlu0 %3272
    %v3274 = vsub.f32 %v3267, %v3273
    %v3275 = vmul.f32 %v3274, 1.442695
    %v3276 = vpow.pop %v3275
    %v3277 = vsel %vm3270, %v3276, 0.0
    %3278 = vadd.xlane.f32.xlu0 %v3277
    %v3279 = vpop.xlane.xlu0 %3278
    %v3280 = vlog2.pop %v3279
    %v3281 = vmul.f32 %v3280, 0.6931472
    %v3282 = vsub.f32 %v3274, %v3281
    %3283 = vst.msk [vmem:[#allocation2] sm:$0xff] %vm3270, %v3282
    // Predicated region
    $region38: #{cnn_forward.1} parent=1 // pred_check
      _
    $region39: #{cnn_forward.1} parent=1 // pred_check_branch
      %3285 = sbr.rel (0) target = $region41
    $region40: #{cnn_forward.1} parent=1 // pred_region
      %s3287 = ssub.s32 128, 128
      %3288 = vsyncadd [#allocation3], %s3287
      %s3290 = sshll.u32 [#allocation2], 4
      %s3291 = int_to_ptr.vmem [resolvable:$true] %s3290
      %3293 = dma.vmem_to_hbm [thread:$0]  %s3291, 128, %s9, [#allocation3]
    $region41: #{cnn_forward.1} parent=1 // pred_fallthru
      _
    // Predicated region
    $region42: #{cnn_forward.1} parent=1 // pred_check
      _
    $region43: #{cnn_forward.1} parent=1 // pred_check_branch
      %3295 = sbr.rel (0) target = $region45
    $region44: #{cnn_forward.1} parent=1 // pred_region
      %3296 = dma.done [#allocation3], 128
    $region45: #{cnn_forward.1} parent=1 // pred_fallthru
      _
    %3297 = vsyncpa [#allocation3], 1

</llo_original>
